<compile_context>
chip_gen: v6e
topology: v6e:2x2x1
jax: 0.10.0
libtpu: 0.0.40
codegen_flags: <defaults>
</compile_context>

<pallas_src>
import jax
import jax.numpy as jnp
from jax import lax
from jax.experimental import pallas as pl
from jax.experimental.pallas import tpu as pltpu

# ---------------- configuration (small, consistent with the module) ----------
B, S = 2, 8                    # batch, seq_len
V_WORD, E_WORD = 20, 32        # word vocab, word emb dim
V_CHAR, E_CHAR = 15, 8         # char vocab, char emb dim
LC = 6                         # max chars per word
C_HID = 16                     # char CNN hidden dim
D_IN = E_WORD + C_HID          # BiLSTM input dim
H = 16                         # LSTM hidden per direction (hidden_dim=32, bidir)
LABEL_SIZE = 10
L = LABEL_SIZE + 2             # data.label_alphabet_size += 2 in __init__
OUT_PAD = 128                  # lane-dense int32 output; wrapper slices [:, :S]

N = B * S                      # number of words
NLC = N * LC                   # number of char positions
G = 8 * H                      # fused gate width per direction-pair (=128)


# ---------------- the single fused kernel ------------------------------------
def seqlabel_kernel(word_ids_ref, char_ids_ref, recover_ref, mask_ref,
                    cemb_ref, wc0_ref, wc1_ref, wc2_ref, bconv_ref,
                    wword_ref, wchar_ref, whh_ref,
                    wtagf_ref, wtagb_ref, btag_ref, out_ref):
    f32, bf16 = jnp.float32, jnp.bfloat16
    hh2 = 2 * H

    # ---- char path: 2-D one-hot embed -> 3-tap conv via shifted rows -> max --
    onehot_c = (char_ids_ref[...] ==
                lax.broadcasted_iota(jnp.int32, (NLC, V_CHAR), 1)).astype(bf16)
    cemb = jnp.dot(onehot_c, cemb_ref[...],
                   preferred_element_type=f32)                 # (NLC, E_CHAR)

    pos = lax.broadcasted_iota(jnp.int32, (NLC, 1), 0) % LC    # char pos in word
    zrow = jnp.zeros((1, E_CHAR), f32)
    left = jnp.where(pos == 0, 0.0,
                     jnp.concatenate([zrow, cemb[:NLC - 1, :]], axis=0))   # x[l-1]
    right = jnp.where(pos == LC - 1, 0.0,
                      jnp.concatenate([cemb[1:, :], zrow], axis=0))        # x[l+1]
    conv = (jnp.dot(left.astype(bf16), wc0_ref[...], preferred_element_type=f32) +
            jnp.dot(cemb.astype(bf16), wc1_ref[...], preferred_element_type=f32) +
            jnp.dot(right.astype(bf16), wc2_ref[...], preferred_element_type=f32) +
            bconv_ref[...])                                    # (NLC, C_HID)
    # TODO(synk): char_seq_lengths unused; padded char positions join the max.
    char_feat = jnp.max(conv.reshape(N, LC, C_HID), axis=1)    # (N, C_HID)

    # recover original word order AND reorder to time-major: one-hot perm matmul
    perm = (recover_ref[...] ==
            lax.broadcasted_iota(jnp.int32, (N, N), 1)).astype(bf16)
    char_feat_t = jnp.dot(perm, char_feat.astype(bf16),
                          preferred_element_type=f32)          # (N, C_HID) t-major

    # ---- input -> gate projections (word emb table folded host-side) --------
    onehot_w = (word_ids_ref[...] ==
                lax.broadcasted_iota(jnp.int32, (N, V_WORD), 1)).astype(bf16)
    xp = (jnp.dot(onehot_w, wword_ref[...], preferred_element_type=f32) +
          jnp.dot(char_feat_t.astype(bf16), wchar_ref[...],
                  preferred_element_type=f32))                 # (N, 2G) t-major
    xp_f = xp[:, :G]          # fwd-direction gate inputs (+ both biases)
    xp_b = xp[:, G:]          # bwd-direction gate inputs
    # per-step fused gate input: fwd lanes use x[t=k], bwd lanes use x[t=S-1-k]
    xk = [xp_f[k * B:(k + 1) * B, :] + xp_b[(S - 1 - k) * B:(S - k) * B, :]
          for k in range(S)]                                   # S x (B, 128)

    # ---- fused BiLSTM: one (B,2H)x(2H,8H) matmul per step, state in vregs ---
    # gate layout along 8H: [i | f | o | g], each gate block = [fwd H | bwd H]
    # TODO(synk): word_seq_lengths unused; the backward direction starts from
    #             padded timesteps (no pack_padded_sequence semantics).
    whh = whh_ref[...]                                         # (2H, 8H) bf16
    h_t = jnp.zeros((B, hh2), f32)                             # [h_fwd | h_bwd]
    c_t = jnp.zeros((B, hh2), f32)
    fwd_h, bwd_h = [], []
    for k in range(S):                                         # static -> unrolled
        gates = xk[k] + jnp.dot(h_t.astype(bf16), whh,
                                preferred_element_type=f32)    # (B, 128)
        sig = jax.nn.sigmoid(gates[:, :3 * hh2])               # i, f, o at once
        i_g = sig[:, 0:hh2]
        f_g = sig[:, hh2:2 * hh2]
        o_g = sig[:, 2 * hh2:3 * hh2]
        g_g = jnp.tanh(gates[:, 3 * hh2:])
        c_t = f_g * c_t + i_g * g_g
        h_t = o_g * jnp.tanh(c_t)
        fwd_h.append(h_t[:, :H])                               # hidden for time k
        bwd_h.append(h_t[:, H:])                               # hidden for time S-1-k

    # ---- hidden2tag (split fwd/bwd weights) + first-max argmax + mask -------
    fwd_all = jnp.concatenate(fwd_h, axis=0)                   # (N, H) t-major
    bwd_all = jnp.concatenate(bwd_h[::-1], axis=0)             # (N, H) t-major
    logits = (jnp.dot(fwd_all.astype(bf16), wtagf_ref[...],
                      preferred_element_type=f32) +
              jnp.dot(bwd_all.astype(bf16), wtagb_ref[...],
                      preferred_element_type=f32) +
              btag_ref[...]).reshape(S, B, L)                  # (S, B, L)
    maxv = jnp.max(logits, axis=-1, keepdims=True)
    idx = lax.broadcasted_iota(jnp.int32, (S, B, L), 2)
    tag = jnp.min(jnp.where(logits >= maxv, idx, L), axis=-1)  # (S, B), first max
    tag = jnp.transpose(tag) * mask_ref[...]                   # (B, S)
    out_ref[...] = jnp.concatenate(                            # one full store
        [tag.astype(jnp.int32), jnp.zeros((B, OUT_PAD - S), jnp.int32)], axis=1)


# ---------------- host-side weight packing (one-time, outside the kernel) ----
def _interleave_gates(wf, wb):
    """(X,4H),(X,4H) -> (X,8H) with layout [i|f|o|g], each gate [fwd H | bwd H]."""
    xdim = wf.shape[0]
    return jnp.concatenate([wf.reshape(xdim, 4, H), wb.reshape(xdim, 4, H)],
                           axis=2).reshape(xdim, 8 * H)


def pack_params(params):
    bf16 = jnp.bfloat16
    z_ih = jnp.zeros_like(params['wih_f'])
    z_hh = jnp.zeros_like(params['whh_f'])
    wih_f8 = _interleave_gates(params['wih_f'], z_ih)        # (D_IN, 8H) fwd lanes
    wih_b8 = _interleave_gates(z_ih, params['wih_b'])        # (D_IN, 8H) bwd lanes
    bih = _interleave_gates(params['b_f'], params['b_b'])    # (1, 8H) both biases
    whh = jnp.concatenate([_interleave_gates(params['whh_f'], z_hh),
                           _interleave_gates(z_hh, params['whh_b'])],
                          axis=0)                            # (2H, 8H)
    # fold word embedding table (and both biases) into the word->gate projection
    we = params['word_emb']                                  # (V_WORD, E_WORD)
    w_word = jnp.concatenate([we @ wih_f8[:E_WORD] + bih,
                              we @ wih_b8[:E_WORD]], axis=1)  # (V_WORD, 16H)
    w_char = jnp.concatenate([wih_f8[E_WORD:], wih_b8[E_WORD:]],
                             axis=1)                          # (C_HID, 16H)
    wc = params['w_conv']                                     # (3, E_CHAR, C_HID)
    return {
        'char_emb': params['char_emb'].astype(bf16),
        'wc0': wc[0].astype(bf16), 'wc1': wc[1].astype(bf16),
        'wc2': wc[2].astype(bf16),
        'b_conv': params['b_conv'],
        'w_word': w_word.astype(bf16), 'w_char': w_char.astype(bf16),
        'whh': whh.astype(bf16),
        'wtag_f': params['wtag'][:H].astype(bf16),
        'wtag_b': params['wtag'][H:].astype(bf16),
        'btag': params['btag'],
    }


# ---------------- SeqLabel.forward (use_crf=False) ---------------------------
def seqlabel_forward(params, word_inputs, word_seq_lengths,
                     char_inputs, char_seq_lengths, char_seq_recover, mask):
    # TODO(synk): word_seq_lengths / char_seq_lengths are unused (no packing);
    # the final mask multiply matches SeqLabel.forward's `mask.long() * tag_seq`.
    p = pack_params(params)
    # time-major layout plumbing (tiny host-side int reshapes/transposes)
    word_tm = word_inputs.astype(jnp.int32).T.reshape(N, 1)          # row = t*B+b
    recover_tm = (char_seq_recover.astype(jnp.int32)
                  .reshape(B, S).T.reshape(N, 1))
    char_flat = char_inputs.astype(jnp.int32).reshape(NLC, 1)
    args = (word_tm, char_flat, recover_tm, mask.astype(jnp.int32),
            p['char_emb'], p['wc0'], p['wc1'], p['wc2'], p['b_conv'],
            p['w_word'], p['w_char'], p['whh'],
            p['wtag_f'], p['wtag_b'], p['btag'])
    out = pl.pallas_call(
        seqlabel_kernel,
        out_shape=jax.ShapeDtypeStruct((B, OUT_PAD), jnp.int32),
        in_specs=[pl.BlockSpec(memory_space=pltpu.MemorySpace.VMEM)] * len(args),
        out_specs=pl.BlockSpec(memory_space=pltpu.MemorySpace.VMEM),
    )(*args)
    return out[:, :S]


# ---------------- deterministic parameter / input construction ---------------
def make_params(key):
    ks = jax.random.split(key, 12)
    sc = 0.1
    return {
        'word_emb': sc * jax.random.normal(ks[0], (V_WORD, E_WORD), jnp.float32),
        'char_emb': sc * jax.random.normal(ks[1], (V_CHAR, E_CHAR), jnp.float32),
        'w_conv':   sc * jax.random.normal(ks[2], (3, E_CHAR, C_HID), jnp.float32),
        'b_conv':   sc * jax.random.normal(ks[3], (1, C_HID), jnp.float32),
        # LSTM weights; gate order along the 4H axis is [i, f, o, g]
        'wih_f':    sc * jax.random.normal(ks[4], (D_IN, 4 * H), jnp.float32),
        'whh_f':    sc * jax.random.normal(ks[5], (H, 4 * H), jnp.float32),
        'b_f':      sc * jax.random.normal(ks[6], (1, 4 * H), jnp.float32),
        'wih_b':    sc * jax.random.normal(ks[7], (D_IN, 4 * H), jnp.float32),
        'whh_b':    sc * jax.random.normal(ks[8], (H, 4 * H), jnp.float32),
        'b_b':      sc * jax.random.normal(ks[9], (1, 4 * H), jnp.float32),
        'wtag':     sc * jax.random.normal(ks[10], (2 * H, L), jnp.float32),
        'btag':     sc * jax.random.normal(ks[11], (1, L), jnp.float32),
    }


if __name__ == "__main__":
    key = jax.random.PRNGKey(0)
    kp, k1, k2 = jax.random.split(key, 3)
    params = make_params(kp)

    word_inputs = jax.random.randint(k1, (B, S), 1, V_WORD, dtype=jnp.int32)
    word_seq_lengths = jnp.array([S, S - 3], dtype=jnp.int32)
    mask = (jnp.arange(S, dtype=jnp.int32)[None, :] <
            word_seq_lengths[:, None]).astype(jnp.int32)              # (B, S)
    char_inputs = jax.random.randint(k2, (B * S, LC), 1, V_CHAR, dtype=jnp.int32)
    char_seq_lengths = jnp.full((B * S,), LC, dtype=jnp.int32)
    char_seq_recover = jnp.arange(B * S, dtype=jnp.int32)

    tag_seq = seqlabel_forward(params, word_inputs, word_seq_lengths,
                               char_inputs, char_seq_lengths,
                               char_seq_recover, mask)
    jax.block_until_ready(tag_seq)
    assert tag_seq.shape == (B, S) and tag_seq.dtype == jnp.int32
    # masked positions must be zero, unmasked labels in [0, L)
    assert bool(jnp.all(jnp.where(mask == 0, tag_seq == 0, tag_seq < L)))
    print("KERNEL_OK")
</pallas_src>

<mosaic_0001>
module attributes {stable_mosaic.version = 11 : i64} {
  func.func @seqlabel_kernel(%arg0: memref<16x1xi32, #tpu.memory_space<vmem>>, %arg1: memref<96x1xi32, #tpu.memory_space<vmem>>, %arg2: memref<16x1xi32, #tpu.memory_space<vmem>>, %arg3: memref<2x8xi32, #tpu.memory_space<vmem>>, %arg4: memref<15x8xbf16, #tpu.memory_space<vmem>>, %arg5: memref<8x16xbf16, #tpu.memory_space<vmem>>, %arg6: memref<8x16xbf16, #tpu.memory_space<vmem>>, %arg7: memref<8x16xbf16, #tpu.memory_space<vmem>>, %arg8: memref<1x16xf32, #tpu.memory_space<vmem>>, %arg9: memref<20x256xbf16, #tpu.memory_space<vmem>>, %arg10: memref<16x256xbf16, #tpu.memory_space<vmem>>, %arg11: memref<32x128xbf16, #tpu.memory_space<vmem>>, %arg12: memref<16x12xbf16, #tpu.memory_space<vmem>>, %arg13: memref<16x12xbf16, #tpu.memory_space<vmem>>, %arg14: memref<1x12xf32, #tpu.memory_space<vmem>>, %arg15: memref<2x128xi32, #tpu.memory_space<vmem>>) attributes {dimension_semantics = [], scalar_prefetch = 0 : i64, scratch_operands = 0 : i64, tpu.core_type = #tpu.core_type<tc>} {
    %c0 = arith.constant 0 : index
    %c0_0 = arith.constant 0 : index
    %0 = vector.load %arg1[%c0, %c0_0] : memref<96x1xi32, #tpu.memory_space<vmem>>, vector<96x1xi32>
    %1 = tpu.iota {dimensions = array<i32: 1>} : vector<96x15xi32>
    %2 = vector.broadcast %0 : vector<96x1xi32> to vector<96x15xi32>
    %3 = arith.cmpi eq, %2, %1 : vector<96x15xi32>
    %4 = arith.extui %3 : vector<96x15xi1> to vector<96x15xi32>
    %5 = arith.sitofp %4 : vector<96x15xi32> to vector<96x15xf32>
    %6 = arith.truncf %5 : vector<96x15xf32> to vector<96x15xbf16>
    %c0_1 = arith.constant 0 : index
    %c0_2 = arith.constant 0 : index
    %7 = vector.load %arg4[%c0_1, %c0_2] : memref<15x8xbf16, #tpu.memory_space<vmem>>, vector<15x8xbf16>
    %cst = arith.constant dense<0.000000e+00> : vector<96x8xf32>
    %8 = tpu.matmul %6, %7, %cst {dimension_numbers = #tpu.dot_dimension_numbers<[1], [0], [0], [1], [0, 0, 1, 1], [], []>} : vector<96x15xbf16>, vector<15x8xbf16>, vector<96x8xf32> -> vector<96x8xf32>
    %9 = tpu.iota {dimensions = array<i32: 0>} : vector<96x1xi32>
    %c6_i32 = arith.constant 6 : i32
    %c0_i32 = arith.constant 0 : i32
    %10 = arith.cmpi eq, %c6_i32, %c0_i32 : i32
    %c1_i32 = arith.constant 1 : i32
    %11 = arith.select %10, %c1_i32, %c6_i32 : i32
    %12 = vector.broadcast %11 : i32 to vector<96x1xi32>
    %13 = arith.remsi %9, %12 : vector<96x1xi32>
    %c0_i32_3 = arith.constant 0 : i32
    %14 = vector.broadcast %c0_i32_3 : i32 to vector<96x1xi32>
    %15 = arith.cmpi ne, %13, %14 : vector<96x1xi32>
    %c0_i32_4 = arith.constant 0 : i32
    %16 = vector.broadcast %c0_i32_4 : i32 to vector<96x1xi32>
    %17 = arith.cmpi slt, %13, %16 : vector<96x1xi32>
    %c0_i32_5 = arith.constant 0 : i32
    %18 = arith.cmpi slt, %11, %c0_i32_5 : i32
    %19 = vector.broadcast %18 : i1 to vector<96x1xi1>
    %20 = vector.broadcast %19 : vector<96x1xi1> to vector<96x1xi1>
    %21 = arith.xori %17, %20 : vector<96x1xi1>
    %22 = arith.andi %21, %15 : vector<96x1xi1>
    %23 = vector.broadcast %11 : i32 to vector<96x1xi32>
    %24 = arith.addi %13, %23 : vector<96x1xi32>
    %25 = arith.select %22, %24, %13 : vector<96x1xi1>, vector<96x1xi32>
    %cst_6 = arith.constant 0.000000e+00 : f32
    %26 = vector.broadcast %cst_6 : f32 to vector<1x8xf32>
    %c0_i32_7 = arith.constant 0 : i32
    %27 = vector.broadcast %c0_i32_7 : i32 to vector<96x1xi32>
    %28 = arith.cmpi eq, %25, %27 : vector<96x1xi32>
    %29 = vector.extract_strided_slice %8 {offsets = [0, 0], sizes = [95, 8], strides = [1, 1]} : vector<96x8xf32> to vector<95x8xf32>
    %30 = tpu.concatenate %26, %29 in 0 : vector<1x8xf32>, vector<95x8xf32> -> vector<96x8xf32>
    %cst_8 = arith.constant 0.000000e+00 : f32
    %31 = vector.shape_cast %28 : vector<96x1xi1> to vector<96x1xi1>
    %32 = vector.broadcast %31 : vector<96x1xi1> to vector<96x8xi1>
    %33 = vector.broadcast %cst_8 : f32 to vector<96x8xf32>
    %34 = arith.select %32, %33, %30 : vector<96x8xi1>, vector<96x8xf32>
    %c5_i32 = arith.constant 5 : i32
    %35 = vector.broadcast %c5_i32 : i32 to vector<96x1xi32>
    %36 = arith.cmpi eq, %25, %35 : vector<96x1xi32>
    %37 = vector.extract_strided_slice %8 {offsets = [1, 0], sizes = [95, 8], strides = [1, 1]} : vector<96x8xf32> to vector<95x8xf32>
    %38 = tpu.concatenate %37, %26 in 0 : vector<95x8xf32>, vector<1x8xf32> -> vector<96x8xf32>
    %cst_9 = arith.constant 0.000000e+00 : f32
    %39 = vector.shape_cast %36 : vector<96x1xi1> to vector<96x1xi1>
    %40 = vector.broadcast %39 : vector<96x1xi1> to vector<96x8xi1>
    %41 = vector.broadcast %cst_9 : f32 to vector<96x8xf32>
    %42 = arith.select %40, %41, %38 : vector<96x8xi1>, vector<96x8xf32>
    %43 = arith.truncf %34 : vector<96x8xf32> to vector<96x8xbf16>
    %c0_10 = arith.constant 0 : index
    %c0_11 = arith.constant 0 : index
    %44 = vector.load %arg5[%c0_10, %c0_11] : memref<8x16xbf16, #tpu.memory_space<vmem>>, vector<8x16xbf16>
    %cst_12 = arith.constant dense<0.000000e+00> : vector<96x16xf32>
    %45 = tpu.matmul %43, %44, %cst_12 {dimension_numbers = #tpu.dot_dimension_numbers<[1], [0], [0], [1], [0, 0, 1, 1], [], []>} : vector<96x8xbf16>, vector<8x16xbf16>, vector<96x16xf32> -> vector<96x16xf32>
    %46 = arith.truncf %8 : vector<96x8xf32> to vector<96x8xbf16>
    %c0_13 = arith.constant 0 : index
    %c0_14 = arith.constant 0 : index
    %47 = vector.load %arg6[%c0_13, %c0_14] : memref<8x16xbf16, #tpu.memory_space<vmem>>, vector<8x16xbf16>
    %cst_15 = arith.constant dense<0.000000e+00> : vector<96x16xf32>
    %48 = tpu.matmul %46, %47, %cst_15 {dimension_numbers = #tpu.dot_dimension_numbers<[1], [0], [0], [1], [0, 0, 1, 1], [], []>} : vector<96x8xbf16>, vector<8x16xbf16>, vector<96x16xf32> -> vector<96x16xf32>
    %49 = arith.addf %45, %48 : vector<96x16xf32>
    %50 = arith.truncf %42 : vector<96x8xf32> to vector<96x8xbf16>
    %c0_16 = arith.constant 0 : index
    %c0_17 = arith.constant 0 : index
    %51 = vector.load %arg7[%c0_16, %c0_17] : memref<8x16xbf16, #tpu.memory_space<vmem>>, vector<8x16xbf16>
    %cst_18 = arith.constant dense<0.000000e+00> : vector<96x16xf32>
    %52 = tpu.matmul %50, %51, %cst_18 {dimension_numbers = #tpu.dot_dimension_numbers<[1], [0], [0], [1], [0, 0, 1, 1], [], []>} : vector<96x8xbf16>, vector<8x16xbf16>, vector<96x16xf32> -> vector<96x16xf32>
    %53 = arith.addf %49, %52 : vector<96x16xf32>
    %c0_19 = arith.constant 0 : index
    %c0_20 = arith.constant 0 : index
    %54 = vector.load %arg8[%c0_19, %c0_20] : memref<1x16xf32, #tpu.memory_space<vmem>>, vector<1x16xf32>
    %55 = vector.broadcast %54 : vector<1x16xf32> to vector<96x16xf32>
    %56 = arith.addf %53, %55 : vector<96x16xf32>
    %57 = vector.shape_cast %56 : vector<96x16xf32> to vector<16x6x16xf32>
    %cst_21 = arith.constant dense<0xFF800000> : vector<16x16xf32>
    %58 = vector.multi_reduction <maximumf>, %57, %cst_21 [1] : vector<16x6x16xf32> to vector<16x16xf32>
    %c0_22 = arith.constant 0 : index
    %c0_23 = arith.constant 0 : index
    %59 = vector.load %arg2[%c0_22, %c0_23] : memref<16x1xi32, #tpu.memory_space<vmem>>, vector<16x1xi32>
    %60 = tpu.iota {dimensions = array<i32: 1>} : vector<16x16xi32>
    %61 = vector.broadcast %59 : vector<16x1xi32> to vector<16x16xi32>
    %62 = arith.cmpi eq, %61, %60 : vector<16x16xi32>
    %63 = arith.extui %62 : vector<16x16xi1> to vector<16x16xi32>
    %64 = arith.sitofp %63 : vector<16x16xi32> to vector<16x16xf32>
    %65 = arith.truncf %64 : vector<16x16xf32> to vector<16x16xbf16>
    %66 = arith.truncf %58 : vector<16x16xf32> to vector<16x16xbf16>
    %cst_24 = arith.constant dense<0.000000e+00> : vector<16x16xf32>
    %67 = tpu.matmul %65, %66, %cst_24 {dimension_numbers = #tpu.dot_dimension_numbers<[1], [0], [0], [1], [0, 0, 1, 1], [], []>} : vector<16x16xbf16>, vector<16x16xbf16>, vector<16x16xf32> -> vector<16x16xf32>
    %c0_25 = arith.constant 0 : index
    %c0_26 = arith.constant 0 : index
    %68 = vector.load %arg0[%c0_25, %c0_26] : memref<16x1xi32, #tpu.memory_space<vmem>>, vector<16x1xi32>
    %69 = tpu.iota {dimensions = array<i32: 1>} : vector<16x20xi32>
    %70 = vector.broadcast %68 : vector<16x1xi32> to vector<16x20xi32>
    %71 = arith.cmpi eq, %70, %69 : vector<16x20xi32>
    %72 = arith.extui %71 : vector<16x20xi1> to vector<16x20xi32>
    %73 = arith.sitofp %72 : vector<16x20xi32> to vector<16x20xf32>
    %74 = arith.truncf %73 : vector<16x20xf32> to vector<16x20xbf16>
    %c0_27 = arith.constant 0 : index
    %c0_28 = arith.constant 0 : index
    %75 = vector.load %arg9[%c0_27, %c0_28] : memref<20x256xbf16, #tpu.memory_space<vmem>>, vector<20x256xbf16>
    %cst_29 = arith.constant dense<0.000000e+00> : vector<16x256xf32>
    %76 = tpu.matmul %74, %75, %cst_29 {dimension_numbers = #tpu.dot_dimension_numbers<[1], [0], [0], [1], [0, 0, 1, 1], [], []>} : vector<16x20xbf16>, vector<20x256xbf16>, vector<16x256xf32> -> vector<16x256xf32>
    %77 = arith.truncf %67 : vector<16x16xf32> to vector<16x16xbf16>
    %c0_30 = arith.constant 0 : index
    %c0_31 = arith.constant 0 : index
    %78 = vector.load %arg10[%c0_30, %c0_31] : memref<16x256xbf16, #tpu.memory_space<vmem>>, vector<16x256xbf16>
    %cst_32 = arith.constant dense<0.000000e+00> : vector<16x256xf32>
    %79 = tpu.matmul %77, %78, %cst_32 {dimension_numbers = #tpu.dot_dimension_numbers<[1], [0], [0], [1], [0, 0, 1, 1], [], []>} : vector<16x16xbf16>, vector<16x256xbf16>, vector<16x256xf32> -> vector<16x256xf32>
    %80 = arith.addf %76, %79 : vector<16x256xf32>
    %81 = vector.extract_strided_slice %80 {offsets = [0, 0], sizes = [16, 128], strides = [1, 1]} : vector<16x256xf32> to vector<16x128xf32>
    %82 = vector.extract_strided_slice %80 {offsets = [0, 128], sizes = [16, 128], strides = [1, 1]} : vector<16x256xf32> to vector<16x128xf32>
    %83 = vector.extract_strided_slice %81 {offsets = [0, 0], sizes = [2, 128], strides = [1, 1]} : vector<16x128xf32> to vector<2x128xf32>
    %84 = vector.extract_strided_slice %82 {offsets = [14, 0], sizes = [2, 128], strides = [1, 1]} : vector<16x128xf32> to vector<2x128xf32>
    %85 = arith.addf %83, %84 : vector<2x128xf32>
    %86 = vector.extract_strided_slice %81 {offsets = [2, 0], sizes = [2, 128], strides = [1, 1]} : vector<16x128xf32> to vector<2x128xf32>
    %87 = vector.extract_strided_slice %82 {offsets = [12, 0], sizes = [2, 128], strides = [1, 1]} : vector<16x128xf32> to vector<2x128xf32>
    %88 = arith.addf %86, %87 : vector<2x128xf32>
    %89 = vector.extract_strided_slice %81 {offsets = [4, 0], sizes = [2, 128], strides = [1, 1]} : vector<16x128xf32> to vector<2x128xf32>
    %90 = vector.extract_strided_slice %82 {offsets = [10, 0], sizes = [2, 128], strides = [1, 1]} : vector<16x128xf32> to vector<2x128xf32>
    %91 = arith.addf %89, %90 : vector<2x128xf32>
    %92 = vector.extract_strided_slice %81 {offsets = [6, 0], sizes = [2, 128], strides = [1, 1]} : vector<16x128xf32> to vector<2x128xf32>
    %93 = vector.extract_strided_slice %82 {offsets = [8, 0], sizes = [2, 128], strides = [1, 1]} : vector<16x128xf32> to vector<2x128xf32>
    %94 = arith.addf %92, %93 : vector<2x128xf32>
    %95 = vector.extract_strided_slice %81 {offsets = [8, 0], sizes = [2, 128], strides = [1, 1]} : vector<16x128xf32> to vector<2x128xf32>
    %96 = vector.extract_strided_slice %82 {offsets = [6, 0], sizes = [2, 128], strides = [1, 1]} : vector<16x128xf32> to vector<2x128xf32>
    %97 = arith.addf %95, %96 : vector<2x128xf32>
    %98 = vector.extract_strided_slice %81 {offsets = [10, 0], sizes = [2, 128], strides = [1, 1]} : vector<16x128xf32> to vector<2x128xf32>
    %99 = vector.extract_strided_slice %82 {offsets = [4, 0], sizes = [2, 128], strides = [1, 1]} : vector<16x128xf32> to vector<2x128xf32>
    %100 = arith.addf %98, %99 : vector<2x128xf32>
    %101 = vector.extract_strided_slice %81 {offsets = [12, 0], sizes = [2, 128], strides = [1, 1]} : vector<16x128xf32> to vector<2x128xf32>
    %102 = vector.extract_strided_slice %82 {offsets = [2, 0], sizes = [2, 128], strides = [1, 1]} : vector<16x128xf32> to vector<2x128xf32>
    %103 = arith.addf %101, %102 : vector<2x128xf32>
    %104 = vector.extract_strided_slice %81 {offsets = [14, 0], sizes = [2, 128], strides = [1, 1]} : vector<16x128xf32> to vector<2x128xf32>
    %105 = vector.extract_strided_slice %82 {offsets = [0, 0], sizes = [2, 128], strides = [1, 1]} : vector<16x128xf32> to vector<2x128xf32>
    %106 = arith.addf %104, %105 : vector<2x128xf32>
    %c0_33 = arith.constant 0 : index
    %c0_34 = arith.constant 0 : index
    %107 = vector.load %arg11[%c0_33, %c0_34] : memref<32x128xbf16, #tpu.memory_space<vmem>>, vector<32x128xbf16>
    %cst_35 = arith.constant 0.000000e+00 : f32
    %108 = vector.broadcast %cst_35 : f32 to vector<2x32xf32>
    %cst_36 = arith.constant 0.000000e+00 : f32
    %109 = vector.broadcast %cst_36 : f32 to vector<2x32xf32>
    %110 = arith.truncf %108 : vector<2x32xf32> to vector<2x32xbf16>
    %cst_37 = arith.constant dense<0.000000e+00> : vector<2x128xf32>
    %111 = tpu.matmul %110, %107, %cst_37 {dimension_numbers = #tpu.dot_dimension_numbers<[1], [0], [0], [1], [0, 0, 1, 1], [], []>} : vector<2x32xbf16>, vector<32x128xbf16>, vector<2x128xf32> -> vector<2x128xf32>
    %112 = arith.addf %85, %111 : vector<2x128xf32>
    %113 = vector.extract_strided_slice %112 {offsets = [0, 0], sizes = [2, 96], strides = [1, 1]} : vector<2x128xf32> to vector<2x96xf32>
    %114 = arith.negf %113 : vector<2x96xf32>
    %115 = math.exp %114 : vector<2x96xf32>
    %cst_38 = arith.constant 1.000000e+00 : f32
    %116 = vector.broadcast %cst_38 : f32 to vector<2x96xf32>
    %117 = arith.addf %116, %115 : vector<2x96xf32>
    %118 = arith.divf %116, %117 : vector<2x96xf32>
    %119 = vector.extract_strided_slice %118 {offsets = [0, 0], sizes = [2, 32], strides = [1, 1]} : vector<2x96xf32> to vector<2x32xf32>
    %120 = vector.extract_strided_slice %118 {offsets = [0, 32], sizes = [2, 32], strides = [1, 1]} : vector<2x96xf32> to vector<2x32xf32>
    %121 = vector.extract_strided_slice %118 {offsets = [0, 64], sizes = [2, 32], strides = [1, 1]} : vector<2x96xf32> to vector<2x32xf32>
    %122 = vector.extract_strided_slice %112 {offsets = [0, 96], sizes = [2, 32], strides = [1, 1]} : vector<2x128xf32> to vector<2x32xf32>
    %123 = math.tanh %122 : vector<2x32xf32>
    %124 = arith.mulf %120, %109 : vector<2x32xf32>
    %125 = arith.mulf %119, %123 : vector<2x32xf32>
    %126 = arith.addf %124, %125 : vector<2x32xf32>
    %127 = math.tanh %126 : vector<2x32xf32>
    %128 = arith.mulf %121, %127 : vector<2x32xf32>
    %129 = vector.extract_strided_slice %128 {offsets = [0, 0], sizes = [2, 16], strides = [1, 1]} : vector<2x32xf32> to vector<2x16xf32>
    %130 = vector.extract_strided_slice %128 {offsets = [0, 16], sizes = [2, 16], strides = [1, 1]} : vector<2x32xf32> to vector<2x16xf32>
    %131 = arith.truncf %128 : vector<2x32xf32> to vector<2x32xbf16>
    %cst_39 = arith.constant dense<0.000000e+00> : vector<2x128xf32>
    %132 = tpu.matmul %131, %107, %cst_39 {dimension_numbers = #tpu.dot_dimension_numbers<[1], [0], [0], [1], [0, 0, 1, 1], [], []>} : vector<2x32xbf16>, vector<32x128xbf16>, vector<2x128xf32> -> vector<2x128xf32>
    %133 = arith.addf %88, %132 : vector<2x128xf32>
    %134 = vector.extract_strided_slice %133 {offsets = [0, 0], sizes = [2, 96], strides = [1, 1]} : vector<2x128xf32> to vector<2x96xf32>
    %135 = arith.negf %134 : vector<2x96xf32>
    %136 = math.exp %135 : vector<2x96xf32>
    %cst_40 = arith.constant 1.000000e+00 : f32
    %137 = vector.broadcast %cst_40 : f32 to vector<2x96xf32>
    %138 = arith.addf %137, %136 : vector<2x96xf32>
    %139 = arith.divf %137, %138 : vector<2x96xf32>
    %140 = vector.extract_strided_slice %139 {offsets = [0, 0], sizes = [2, 32], strides = [1, 1]} : vector<2x96xf32> to vector<2x32xf32>
    %141 = vector.extract_strided_slice %139 {offsets = [0, 32], sizes = [2, 32], strides = [1, 1]} : vector<2x96xf32> to vector<2x32xf32>
    %142 = vector.extract_strided_slice %139 {offsets = [0, 64], sizes = [2, 32], strides = [1, 1]} : vector<2x96xf32> to vector<2x32xf32>
    %143 = vector.extract_strided_slice %133 {offsets = [0, 96], sizes = [2, 32], strides = [1, 1]} : vector<2x128xf32> to vector<2x32xf32>
    %144 = math.tanh %143 : vector<2x32xf32>
    %145 = arith.mulf %141, %126 : vector<2x32xf32>
    %146 = arith.mulf %140, %144 : vector<2x32xf32>
    %147 = arith.addf %145, %146 : vector<2x32xf32>
    %148 = math.tanh %147 : vector<2x32xf32>
    %149 = arith.mulf %142, %148 : vector<2x32xf32>
    %150 = vector.extract_strided_slice %149 {offsets = [0, 0], sizes = [2, 16], strides = [1, 1]} : vector<2x32xf32> to vector<2x16xf32>
    %151 = vector.extract_strided_slice %149 {offsets = [0, 16], sizes = [2, 16], strides = [1, 1]} : vector<2x32xf32> to vector<2x16xf32>
    %152 = arith.truncf %149 : vector<2x32xf32> to vector<2x32xbf16>
    %cst_41 = arith.constant dense<0.000000e+00> : vector<2x128xf32>
    %153 = tpu.matmul %152, %107, %cst_41 {dimension_numbers = #tpu.dot_dimension_numbers<[1], [0], [0], [1], [0, 0, 1, 1], [], []>} : vector<2x32xbf16>, vector<32x128xbf16>, vector<2x128xf32> -> vector<2x128xf32>
    %154 = arith.addf %91, %153 : vector<2x128xf32>
    %155 = vector.extract_strided_slice %154 {offsets = [0, 0], sizes = [2, 96], strides = [1, 1]} : vector<2x128xf32> to vector<2x96xf32>
    %156 = arith.negf %155 : vector<2x96xf32>
    %157 = math.exp %156 : vector<2x96xf32>
    %cst_42 = arith.constant 1.000000e+00 : f32
    %158 = vector.broadcast %cst_42 : f32 to vector<2x96xf32>
    %159 = arith.addf %158, %157 : vector<2x96xf32>
    %160 = arith.divf %158, %159 : vector<2x96xf32>
    %161 = vector.extract_strided_slice %160 {offsets = [0, 0], sizes = [2, 32], strides = [1, 1]} : vector<2x96xf32> to vector<2x32xf32>
    %162 = vector.extract_strided_slice %160 {offsets = [0, 32], sizes = [2, 32], strides = [1, 1]} : vector<2x96xf32> to vector<2x32xf32>
    %163 = vector.extract_strided_slice %160 {offsets = [0, 64], sizes = [2, 32], strides = [1, 1]} : vector<2x96xf32> to vector<2x32xf32>
    %164 = vector.extract_strided_slice %154 {offsets = [0, 96], sizes = [2, 32], strides = [1, 1]} : vector<2x128xf32> to vector<2x32xf32>
    %165 = math.tanh %164 : vector<2x32xf32>
    %166 = arith.mulf %162, %147 : vector<2x32xf32>
    %167 = arith.mulf %161, %165 : vector<2x32xf32>
    %168 = arith.addf %166, %167 : vector<2x32xf32>
    %169 = math.tanh %168 : vector<2x32xf32>
    %170 = arith.mulf %163, %169 : vector<2x32xf32>
    %171 = vector.extract_strided_slice %170 {offsets = [0, 0], sizes = [2, 16], strides = [1, 1]} : vector<2x32xf32> to vector<2x16xf32>
    %172 = vector.extract_strided_slice %170 {offsets = [0, 16], sizes = [2, 16], strides = [1, 1]} : vector<2x32xf32> to vector<2x16xf32>
    %173 = arith.truncf %170 : vector<2x32xf32> to vector<2x32xbf16>
    %cst_43 = arith.constant dense<0.000000e+00> : vector<2x128xf32>
    %174 = tpu.matmul %173, %107, %cst_43 {dimension_numbers = #tpu.dot_dimension_numbers<[1], [0], [0], [1], [0, 0, 1, 1], [], []>} : vector<2x32xbf16>, vector<32x128xbf16>, vector<2x128xf32> -> vector<2x128xf32>
    %175 = arith.addf %94, %174 : vector<2x128xf32>
    %176 = vector.extract_strided_slice %175 {offsets = [0, 0], sizes = [2, 96], strides = [1, 1]} : vector<2x128xf32> to vector<2x96xf32>
    %177 = arith.negf %176 : vector<2x96xf32>
    %178 = math.exp %177 : vector<2x96xf32>
    %cst_44 = arith.constant 1.000000e+00 : f32
    %179 = vector.broadcast %cst_44 : f32 to vector<2x96xf32>
    %180 = arith.addf %179, %178 : vector<2x96xf32>
    %181 = arith.divf %179, %180 : vector<2x96xf32>
    %182 = vector.extract_strided_slice %181 {offsets = [0, 0], sizes = [2, 32], strides = [1, 1]} : vector<2x96xf32> to vector<2x32xf32>
    %183 = vector.extract_strided_slice %181 {offsets = [0, 32], sizes = [2, 32], strides = [1, 1]} : vector<2x96xf32> to vector<2x32xf32>
    %184 = vector.extract_strided_slice %181 {offsets = [0, 64], sizes = [2, 32], strides = [1, 1]} : vector<2x96xf32> to vector<2x32xf32>
    %185 = vector.extract_strided_slice %175 {offsets = [0, 96], sizes = [2, 32], strides = [1, 1]} : vector<2x128xf32> to vector<2x32xf32>
    %186 = math.tanh %185 : vector<2x32xf32>
    %187 = arith.mulf %183, %168 : vector<2x32xf32>
    %188 = arith.mulf %182, %186 : vector<2x32xf32>
    %189 = arith.addf %187, %188 : vector<2x32xf32>
    %190 = math.tanh %189 : vector<2x32xf32>
    %191 = arith.mulf %184, %190 : vector<2x32xf32>
    %192 = vector.extract_strided_slice %191 {offsets = [0, 0], sizes = [2, 16], strides = [1, 1]} : vector<2x32xf32> to vector<2x16xf32>
    %193 = vector.extract_strided_slice %191 {offsets = [0, 16], sizes = [2, 16], strides = [1, 1]} : vector<2x32xf32> to vector<2x16xf32>
    %194 = arith.truncf %191 : vector<2x32xf32> to vector<2x32xbf16>
    %cst_45 = arith.constant dense<0.000000e+00> : vector<2x128xf32>
    %195 = tpu.matmul %194, %107, %cst_45 {dimension_numbers = #tpu.dot_dimension_numbers<[1], [0], [0], [1], [0, 0, 1, 1], [], []>} : vector<2x32xbf16>, vector<32x128xbf16>, vector<2x128xf32> -> vector<2x128xf32>
    %196 = arith.addf %97, %195 : vector<2x128xf32>
    %197 = vector.extract_strided_slice %196 {offsets = [0, 0], sizes = [2, 96], strides = [1, 1]} : vector<2x128xf32> to vector<2x96xf32>
    %198 = arith.negf %197 : vector<2x96xf32>
    %199 = math.exp %198 : vector<2x96xf32>
    %cst_46 = arith.constant 1.000000e+00 : f32
    %200 = vector.broadcast %cst_46 : f32 to vector<2x96xf32>
    %201 = arith.addf %200, %199 : vector<2x96xf32>
    %202 = arith.divf %200, %201 : vector<2x96xf32>
    %203 = vector.extract_strided_slice %202 {offsets = [0, 0], sizes = [2, 32], strides = [1, 1]} : vector<2x96xf32> to vector<2x32xf32>
    %204 = vector.extract_strided_slice %202 {offsets = [0, 32], sizes = [2, 32], strides = [1, 1]} : vector<2x96xf32> to vector<2x32xf32>
    %205 = vector.extract_strided_slice %202 {offsets = [0, 64], sizes = [2, 32], strides = [1, 1]} : vector<2x96xf32> to vector<2x32xf32>
    %206 = vector.extract_strided_slice %196 {offsets = [0, 96], sizes = [2, 32], strides = [1, 1]} : vector<2x128xf32> to vector<2x32xf32>
    %207 = math.tanh %206 : vector<2x32xf32>
    %208 = arith.mulf %204, %189 : vector<2x32xf32>
    %209 = arith.mulf %203, %207 : vector<2x32xf32>
    %210 = arith.addf %208, %209 : vector<2x32xf32>
    %211 = math.tanh %210 : vector<2x32xf32>
    %212 = arith.mulf %205, %211 : vector<2x32xf32>
    %213 = vector.extract_strided_slice %212 {offsets = [0, 0], sizes = [2, 16], strides = [1, 1]} : vector<2x32xf32> to vector<2x16xf32>
    %214 = vector.extract_strided_slice %212 {offsets = [0, 16], sizes = [2, 16], strides = [1, 1]} : vector<2x32xf32> to vector<2x16xf32>
    %215 = arith.truncf %212 : vector<2x32xf32> to vector<2x32xbf16>
    %cst_47 = arith.constant dense<0.000000e+00> : vector<2x128xf32>
    %216 = tpu.matmul %215, %107, %cst_47 {dimension_numbers = #tpu.dot_dimension_numbers<[1], [0], [0], [1], [0, 0, 1, 1], [], []>} : vector<2x32xbf16>, vector<32x128xbf16>, vector<2x128xf32> -> vector<2x128xf32>
    %217 = arith.addf %100, %216 : vector<2x128xf32>
    %218 = vector.extract_strided_slice %217 {offsets = [0, 0], sizes = [2, 96], strides = [1, 1]} : vector<2x128xf32> to vector<2x96xf32>
    %219 = arith.negf %218 : vector<2x96xf32>
    %220 = math.exp %219 : vector<2x96xf32>
    %cst_48 = arith.constant 1.000000e+00 : f32
    %221 = vector.broadcast %cst_48 : f32 to vector<2x96xf32>
    %222 = arith.addf %221, %220 : vector<2x96xf32>
    %223 = arith.divf %221, %222 : vector<2x96xf32>
    %224 = vector.extract_strided_slice %223 {offsets = [0, 0], sizes = [2, 32], strides = [1, 1]} : vector<2x96xf32> to vector<2x32xf32>
    %225 = vector.extract_strided_slice %223 {offsets = [0, 32], sizes = [2, 32], strides = [1, 1]} : vector<2x96xf32> to vector<2x32xf32>
    %226 = vector.extract_strided_slice %223 {offsets = [0, 64], sizes = [2, 32], strides = [1, 1]} : vector<2x96xf32> to vector<2x32xf32>
    %227 = vector.extract_strided_slice %217 {offsets = [0, 96], sizes = [2, 32], strides = [1, 1]} : vector<2x128xf32> to vector<2x32xf32>
    %228 = math.tanh %227 : vector<2x32xf32>
    %229 = arith.mulf %225, %210 : vector<2x32xf32>
    %230 = arith.mulf %224, %228 : vector<2x32xf32>
    %231 = arith.addf %229, %230 : vector<2x32xf32>
    %232 = math.tanh %231 : vector<2x32xf32>
    %233 = arith.mulf %226, %232 : vector<2x32xf32>
    %234 = vector.extract_strided_slice %233 {offsets = [0, 0], sizes = [2, 16], strides = [1, 1]} : vector<2x32xf32> to vector<2x16xf32>
    %235 = vector.extract_strided_slice %233 {offsets = [0, 16], sizes = [2, 16], strides = [1, 1]} : vector<2x32xf32> to vector<2x16xf32>
    %236 = arith.truncf %233 : vector<2x32xf32> to vector<2x32xbf16>
    %cst_49 = arith.constant dense<0.000000e+00> : vector<2x128xf32>
    %237 = tpu.matmul %236, %107, %cst_49 {dimension_numbers = #tpu.dot_dimension_numbers<[1], [0], [0], [1], [0, 0, 1, 1], [], []>} : vector<2x32xbf16>, vector<32x128xbf16>, vector<2x128xf32> -> vector<2x128xf32>
    %238 = arith.addf %103, %237 : vector<2x128xf32>
    %239 = vector.extract_strided_slice %238 {offsets = [0, 0], sizes = [2, 96], strides = [1, 1]} : vector<2x128xf32> to vector<2x96xf32>
    %240 = arith.negf %239 : vector<2x96xf32>
    %241 = math.exp %240 : vector<2x96xf32>
    %cst_50 = arith.constant 1.000000e+00 : f32
    %242 = vector.broadcast %cst_50 : f32 to vector<2x96xf32>
    %243 = arith.addf %242, %241 : vector<2x96xf32>
    %244 = arith.divf %242, %243 : vector<2x96xf32>
    %245 = vector.extract_strided_slice %244 {offsets = [0, 0], sizes = [2, 32], strides = [1, 1]} : vector<2x96xf32> to vector<2x32xf32>
    %246 = vector.extract_strided_slice %244 {offsets = [0, 32], sizes = [2, 32], strides = [1, 1]} : vector<2x96xf32> to vector<2x32xf32>
    %247 = vector.extract_strided_slice %244 {offsets = [0, 64], sizes = [2, 32], strides = [1, 1]} : vector<2x96xf32> to vector<2x32xf32>
    %248 = vector.extract_strided_slice %238 {offsets = [0, 96], sizes = [2, 32], strides = [1, 1]} : vector<2x128xf32> to vector<2x32xf32>
    %249 = math.tanh %248 : vector<2x32xf32>
    %250 = arith.mulf %246, %231 : vector<2x32xf32>
    %251 = arith.mulf %245, %249 : vector<2x32xf32>
    %252 = arith.addf %250, %251 : vector<2x32xf32>
    %253 = math.tanh %252 : vector<2x32xf32>
    %254 = arith.mulf %247, %253 : vector<2x32xf32>
    %255 = vector.extract_strided_slice %254 {offsets = [0, 0], sizes = [2, 16], strides = [1, 1]} : vector<2x32xf32> to vector<2x16xf32>
    %256 = vector.extract_strided_slice %254 {offsets = [0, 16], sizes = [2, 16], strides = [1, 1]} : vector<2x32xf32> to vector<2x16xf32>
    %257 = arith.truncf %254 : vector<2x32xf32> to vector<2x32xbf16>
    %cst_51 = arith.constant dense<0.000000e+00> : vector<2x128xf32>
    %258 = tpu.matmul %257, %107, %cst_51 {dimension_numbers = #tpu.dot_dimension_numbers<[1], [0], [0], [1], [0, 0, 1, 1], [], []>} : vector<2x32xbf16>, vector<32x128xbf16>, vector<2x128xf32> -> vector<2x128xf32>
    %259 = arith.addf %106, %258 : vector<2x128xf32>
    %260 = vector.extract_strided_slice %259 {offsets = [0, 0], sizes = [2, 96], strides = [1, 1]} : vector<2x128xf32> to vector<2x96xf32>
    %261 = arith.negf %260 : vector<2x96xf32>
    %262 = math.exp %261 : vector<2x96xf32>
    %cst_52 = arith.constant 1.000000e+00 : f32
    %263 = vector.broadcast %cst_52 : f32 to vector<2x96xf32>
    %264 = arith.addf %263, %262 : vector<2x96xf32>
    %265 = arith.divf %263, %264 : vector<2x96xf32>
    %266 = vector.extract_strided_slice %265 {offsets = [0, 0], sizes = [2, 32], strides = [1, 1]} : vector<2x96xf32> to vector<2x32xf32>
    %267 = vector.extract_strided_slice %265 {offsets = [0, 32], sizes = [2, 32], strides = [1, 1]} : vector<2x96xf32> to vector<2x32xf32>
    %268 = vector.extract_strided_slice %265 {offsets = [0, 64], sizes = [2, 32], strides = [1, 1]} : vector<2x96xf32> to vector<2x32xf32>
    %269 = vector.extract_strided_slice %259 {offsets = [0, 96], sizes = [2, 32], strides = [1, 1]} : vector<2x128xf32> to vector<2x32xf32>
    %270 = math.tanh %269 : vector<2x32xf32>
    %271 = arith.mulf %267, %252 : vector<2x32xf32>
    %272 = arith.mulf %266, %270 : vector<2x32xf32>
    %273 = arith.addf %271, %272 : vector<2x32xf32>
    %274 = math.tanh %273 : vector<2x32xf32>
    %275 = arith.mulf %268, %274 : vector<2x32xf32>
    %276 = vector.extract_strided_slice %275 {offsets = [0, 0], sizes = [2, 16], strides = [1, 1]} : vector<2x32xf32> to vector<2x16xf32>
    %277 = vector.extract_strided_slice %275 {offsets = [0, 16], sizes = [2, 16], strides = [1, 1]} : vector<2x32xf32> to vector<2x16xf32>
    %278 = tpu.concatenate %129, %150, %171, %192, %213, %234, %255, %276 in 0 : vector<2x16xf32>, vector<2x16xf32>, vector<2x16xf32>, vector<2x16xf32>, vector<2x16xf32>, vector<2x16xf32>, vector<2x16xf32>, vector<2x16xf32> -> vector<16x16xf32>
    %279 = tpu.concatenate %277, %256, %235, %214, %193, %172, %151, %130 in 0 : vector<2x16xf32>, vector<2x16xf32>, vector<2x16xf32>, vector<2x16xf32>, vector<2x16xf32>, vector<2x16xf32>, vector<2x16xf32>, vector<2x16xf32> -> vector<16x16xf32>
    %280 = arith.truncf %278 : vector<16x16xf32> to vector<16x16xbf16>
    %c0_53 = arith.constant 0 : index
    %c0_54 = arith.constant 0 : index
    %281 = vector.load %arg12[%c0_53, %c0_54] : memref<16x12xbf16, #tpu.memory_space<vmem>>, vector<16x12xbf16>
    %cst_55 = arith.constant dense<0.000000e+00> : vector<16x12xf32>
    %282 = tpu.matmul %280, %281, %cst_55 {dimension_numbers = #tpu.dot_dimension_numbers<[1], [0], [0], [1], [0, 0, 1, 1], [], []>} : vector<16x16xbf16>, vector<16x12xbf16>, vector<16x12xf32> -> vector<16x12xf32>
    %283 = arith.truncf %279 : vector<16x16xf32> to vector<16x16xbf16>
    %c0_56 = arith.constant 0 : index
    %c0_57 = arith.constant 0 : index
    %284 = vector.load %arg13[%c0_56, %c0_57] : memref<16x12xbf16, #tpu.memory_space<vmem>>, vector<16x12xbf16>
    %cst_58 = arith.constant dense<0.000000e+00> : vector<16x12xf32>
    %285 = tpu.matmul %283, %284, %cst_58 {dimension_numbers = #tpu.dot_dimension_numbers<[1], [0], [0], [1], [0, 0, 1, 1], [], []>} : vector<16x16xbf16>, vector<16x12xbf16>, vector<16x12xf32> -> vector<16x12xf32>
    %286 = arith.addf %282, %285 : vector<16x12xf32>
    %c0_59 = arith.constant 0 : index
    %c0_60 = arith.constant 0 : index
    %287 = vector.load %arg14[%c0_59, %c0_60] : memref<1x12xf32, #tpu.memory_space<vmem>>, vector<1x12xf32>
    %288 = vector.broadcast %287 : vector<1x12xf32> to vector<16x12xf32>
    %289 = arith.addf %286, %288 : vector<16x12xf32>
    %290 = vector.shape_cast %289 : vector<16x12xf32> to vector<8x2x12xf32>
    %cst_61 = arith.constant dense<0xFF800000> : vector<8x2xf32>
    %291 = vector.multi_reduction <maximumf>, %290, %cst_61 [2] : vector<8x2x12xf32> to vector<8x2xf32>
    %292 = vector.shape_cast %291 : vector<8x2xf32> to vector<8x2x1xf32>
    %293 = tpu.iota {dimensions = array<i32: 2>} : vector<8x2x12xi32>
    %294 = vector.broadcast %292 : vector<8x2x1xf32> to vector<8x2x12xf32>
    %295 = arith.cmpf oge, %290, %294 : vector<8x2x12xf32>
    %c12_i32 = arith.constant 12 : i32
    %296 = vector.broadcast %c12_i32 : i32 to vector<8x2x12xi32>
    %297 = arith.select %295, %293, %296 : vector<8x2x12xi1>, vector<8x2x12xi32>
    %cst_62 = arith.constant dense<2147483647> : vector<8x2xi32>
    %298 = vector.multi_reduction <minsi>, %297, %cst_62 [2] : vector<8x2x12xi32> to vector<8x2xi32>
    %299 = tpu.transpose %298, [1, 0] : vector<8x2xi32> -> vector<2x8xi32>
    %c0_63 = arith.constant 0 : index
    %c0_64 = arith.constant 0 : index
    %300 = vector.load %arg3[%c0_63, %c0_64] : memref<2x8xi32, #tpu.memory_space<vmem>>, vector<2x8xi32>
    %301 = arith.muli %299, %300 : vector<2x8xi32>
    %c0_i32_65 = arith.constant 0 : i32
    %302 = vector.broadcast %c0_i32_65 : i32 to vector<2x120xi32>
    %303 = tpu.concatenate %301, %302 in 1 : vector<2x8xi32>, vector<2x120xi32> -> vector<2x128xi32>
    %c0_66 = arith.constant 0 : index
    %c0_67 = arith.constant 0 : index
    %304 = vector.load %arg15[%c0_66, %c0_67] : memref<2x128xi32, #tpu.memory_space<vmem>>, vector<2x128xi32>
    tpu.vector_store %arg15[%c0_66, %c0_67], %303 {strides = array<i32>} : memref<2x128xi32, #tpu.memory_space<vmem>>, vector<2x128xi32>,
    return
  }
}

</mosaic_0001>

<llo_original>
// kernel: tpu_custom_call.1
$region0: #{tpu_custom_call.1}
  #allocation0 [shape = 'u32[]', space=smem, size = 0x4, offset = 0x4, fixed_abs, tag = 'smem constant byte address 0x4 - core index']
  #allocation1 [shape = 'u32[144,128]{1,0:T(1,128)}', space=vmem, size = 0x12000, scoped, tag = 'internal scratch']
  %s0 = inlined_call_operand.vmem [shape: s32[16,1], index: 0, kind: input, shape index: {}]
  %s1 = inlined_call_operand.vmem [shape: s32[96,1], index: 1, kind: input, shape index: {}]
  %s2 = inlined_call_operand.vmem [shape: s32[16,1], index: 2, kind: input, shape index: {}]
  %s3 = inlined_call_operand.vmem [shape: s32[2,8], index: 3, kind: input, shape index: {}]
  %s4 = inlined_call_operand.vmem [shape: bf16[15,8], index: 4, kind: input, shape index: {}]
  %s5 = inlined_call_operand.vmem [shape: bf16[8,16], index: 5, kind: input, shape index: {}]
  %s6 = inlined_call_operand.vmem [shape: bf16[8,16], index: 6, kind: input, shape index: {}]
  %s7 = inlined_call_operand.vmem [shape: bf16[8,16], index: 7, kind: input, shape index: {}]
  %s8 = inlined_call_operand.vmem [shape: f32[1,16], index: 8, kind: input, shape index: {}]
  %s9 = inlined_call_operand.vmem [shape: bf16[20,256], index: 9, kind: input, shape index: {}]
  %s10 = inlined_call_operand.vmem [shape: bf16[16,256], index: 10, kind: input, shape index: {}]
  %s11 = inlined_call_operand.vmem [shape: bf16[32,128], index: 11, kind: input, shape index: {}]
  %s12 = inlined_call_operand.vmem [shape: bf16[16,12], index: 12, kind: input, shape index: {}]
  %s13 = inlined_call_operand.vmem [shape: bf16[16,12], index: 13, kind: input, shape index: {}]
  %s14 = inlined_call_operand.vmem [shape: f32[1,12], index: 14, kind: input, shape index: {}]
  %s15 = inlined_call_operand.hbm [shape: s32[2,128], index: 15, kind: output, shape index: {}]
  %s16 = sld [smem:[#allocation0]]
  $region70: #{tpu_custom_call.1} parent=0
    _
  %s18 = ssub.s32 1, %s16
  %s19 = scalar_select 0, %s18, %s16
  $region1: #{tpu_custom_call.1} parent=0
    #allocation2 [shape = 'u8[1024]{0}', space=vmem, size = 0x400, scoped, tag = 'output window, operand 0, single buffered']
    #allocation3 [shape = 's32[1]{0}', space=sflag, size = 0x4, scoped, tag = 'scoped memory for tpu_custom_call.1']
    %20 = vsyncpa [#allocation3], 0
    // Predicated region
    $region2: #{tpu_custom_call.1} parent=1 // pred_check
      _
    $region3: #{tpu_custom_call.1} parent=1 // pred_check_branch
      %22 = sbr.rel (0) target = $region5
    $region4: #{tpu_custom_call.1} parent=1 // pred_region
      _
    $region5: #{tpu_custom_call.1} parent=1 // pred_fallthru
      _
    // Predicated region
    $region6: #{tpu_custom_call.1} parent=1 // pred_check
      _
    $region7: #{tpu_custom_call.1} parent=1 // pred_check_branch
      %24 = sbr.rel (0) target = $region9
    $region8: #{tpu_custom_call.1} parent=1 // pred_region
      _
    $region9: #{tpu_custom_call.1} parent=1 // pred_fallthru
      _
    // Predicated region
    $region10: #{tpu_custom_call.1} parent=1 // pred_check
      _
    $region11: #{tpu_custom_call.1} parent=1 // pred_check_branch
      %26 = sbr.rel (0) target = $region13
    $region12: #{tpu_custom_call.1} parent=1 // pred_region
      _
    $region13: #{tpu_custom_call.1} parent=1 // pred_fallthru
      _
    // Predicated region
    $region14: #{tpu_custom_call.1} parent=1 // pred_check
      _
    $region15: #{tpu_custom_call.1} parent=1 // pred_check_branch
      %28 = sbr.rel (0) target = $region17
    $region16: #{tpu_custom_call.1} parent=1 // pred_region
      _
    $region17: #{tpu_custom_call.1} parent=1 // pred_fallthru
      _
    // Predicated region
    $region18: #{tpu_custom_call.1} parent=1 // pred_check
      _
    $region19: #{tpu_custom_call.1} parent=1 // pred_check_branch
      %30 = sbr.rel (0) target = $region21
    $region20: #{tpu_custom_call.1} parent=1 // pred_region
      _
    $region21: #{tpu_custom_call.1} parent=1 // pred_fallthru
      _
    // Predicated region
    $region22: #{tpu_custom_call.1} parent=1 // pred_check
      _
    $region23: #{tpu_custom_call.1} parent=1 // pred_check_branch
      %32 = sbr.rel (0) target = $region25
    $region24: #{tpu_custom_call.1} parent=1 // pred_region
      _
    $region25: #{tpu_custom_call.1} parent=1 // pred_fallthru
      _
    // Predicated region
    $region26: #{tpu_custom_call.1} parent=1 // pred_check
      _
    $region27: #{tpu_custom_call.1} parent=1 // pred_check_branch
      %34 = sbr.rel (0) target = $region29
    $region28: #{tpu_custom_call.1} parent=1 // pred_region
      _
    $region29: #{tpu_custom_call.1} parent=1 // pred_fallthru
      _
    // Predicated region
    $region30: #{tpu_custom_call.1} parent=1 // pred_check
      _
    $region31: #{tpu_custom_call.1} parent=1 // pred_check_branch
      %36 = sbr.rel (0) target = $region33
    $region32: #{tpu_custom_call.1} parent=1 // pred_region
      _
    $region33: #{tpu_custom_call.1} parent=1 // pred_fallthru
      _
    // Predicated region
    $region34: #{tpu_custom_call.1} parent=1 // pred_check
      _
    $region35: #{tpu_custom_call.1} parent=1 // pred_check_branch
      %38 = sbr.rel (0) target = $region37
    $region36: #{tpu_custom_call.1} parent=1 // pred_region
      _
    $region37: #{tpu_custom_call.1} parent=1 // pred_fallthru
      _
    // Predicated region
    $region38: #{tpu_custom_call.1} parent=1 // pred_check
      _
    $region39: #{tpu_custom_call.1} parent=1 // pred_check_branch
      %40 = sbr.rel (0) target = $region41
    $region40: #{tpu_custom_call.1} parent=1 // pred_region
      _
    $region41: #{tpu_custom_call.1} parent=1 // pred_fallthru
      _
    // Predicated region
    $region42: #{tpu_custom_call.1} parent=1 // pred_check
      _
    $region43: #{tpu_custom_call.1} parent=1 // pred_check_branch
      %42 = sbr.rel (0) target = $region45
    $region44: #{tpu_custom_call.1} parent=1 // pred_region
      _
    $region45: #{tpu_custom_call.1} parent=1 // pred_fallthru
      _
    // Predicated region
    $region46: #{tpu_custom_call.1} parent=1 // pred_check
      _
    $region47: #{tpu_custom_call.1} parent=1 // pred_check_branch
      %44 = sbr.rel (0) target = $region49
    $region48: #{tpu_custom_call.1} parent=1 // pred_region
      _
    $region49: #{tpu_custom_call.1} parent=1 // pred_fallthru
      _
    // Predicated region
    $region50: #{tpu_custom_call.1} parent=1 // pred_check
      _
    $region51: #{tpu_custom_call.1} parent=1 // pred_check_branch
      %46 = sbr.rel (0) target = $region53
    $region52: #{tpu_custom_call.1} parent=1 // pred_region
      _
    $region53: #{tpu_custom_call.1} parent=1 // pred_fallthru
      _
    // Predicated region
    $region54: #{tpu_custom_call.1} parent=1 // pred_check
      _
    $region55: #{tpu_custom_call.1} parent=1 // pred_check_branch
      %48 = sbr.rel (0) target = $region57
    $region56: #{tpu_custom_call.1} parent=1 // pred_region
      _
    $region57: #{tpu_custom_call.1} parent=1 // pred_fallthru
      _
    // Predicated region
    $region58: #{tpu_custom_call.1} parent=1 // pred_check
      _
    $region59: #{tpu_custom_call.1} parent=1 // pred_check_branch
      %50 = sbr.rel (0) target = $region61
    $region60: #{tpu_custom_call.1} parent=1 // pred_region
      _
    $region61: #{tpu_custom_call.1} parent=1 // pred_fallthru
      _
    %v52 = vld [vmem:[%s1] sm:$0xff]
    %v53 = vld [vmem:[%s1 + $0x8] sm:$0xff]
    %v54 = vld [vmem:[%s1 + $0x10] sm:$0xff]
    %v55 = vld [vmem:[%s1 + $0x18] sm:$0xff]
    %v56 = vld [vmem:[%s1 + $0x20] sm:$0xff]
    %v57 = vld [vmem:[%s1 + $0x28] sm:$0xff]
    %v58 = vld [vmem:[%s1 + $0x30] sm:$0xff]
    %v59 = vld [vmem:[%s1 + $0x38] sm:$0xff]
    %v60 = vld [vmem:[%s1 + $0x40] sm:$0xff]
    %v61 = vld [vmem:[%s1 + $0x48] sm:$0xff]
    %v62 = vld [vmem:[%s1 + $0x50] sm:$0xff]
    %v63 = vld [vmem:[%s1 + $0x58] sm:$0xff]
    %v64 = vlaneseq
    %v65 = vand.u32 %v64, 127
    %66 = vset.pattern.permute.xlu0 0
    %67 = vperm.xlu0 %66, %v52
    %v68 = vpop.permute.xlu0 %67
    %69 = vset.pattern.permute.xlu0 0
    %70 = vperm.xlu0 %69, %v53
    %v71 = vpop.permute.xlu0 %70
    %72 = vset.pattern.permute.xlu0 0
    %73 = vperm.xlu0 %72, %v54
    %v74 = vpop.permute.xlu0 %73
    %75 = vset.pattern.permute.xlu0 0
    %76 = vperm.xlu0 %75, %v55
    %v77 = vpop.permute.xlu0 %76
    %78 = vset.pattern.permute.xlu0 0
    %79 = vperm.xlu0 %78, %v56
    %v80 = vpop.permute.xlu0 %79
    %81 = vset.pattern.permute.xlu0 0
    %82 = vperm.xlu0 %81, %v57
    %v83 = vpop.permute.xlu0 %82
    %84 = vset.pattern.permute.xlu0 0
    %85 = vperm.xlu0 %84, %v58
    %v86 = vpop.permute.xlu0 %85
    %87 = vset.pattern.permute.xlu0 0
    %88 = vperm.xlu0 %87, %v59
    %v89 = vpop.permute.xlu0 %88
    %90 = vset.pattern.permute.xlu0 0
    %91 = vperm.xlu0 %90, %v60
    %v92 = vpop.permute.xlu0 %91
    %93 = vset.pattern.permute.xlu0 0
    %94 = vperm.xlu0 %93, %v61
    %v95 = vpop.permute.xlu0 %94
    %96 = vset.pattern.permute.xlu0 0
    %97 = vperm.xlu0 %96, %v62
    %v98 = vpop.permute.xlu0 %97
    %99 = vset.pattern.permute.xlu0 0
    %100 = vperm.xlu0 %99, %v63
    %v101 = vpop.permute.xlu0 %100
    %vm102 = vcmp.eq.s32.totalorder %v68, %v65
    %vm103 = vcmp.eq.s32.totalorder %v71, %v65
    %vm104 = vcmp.eq.s32.totalorder %v74, %v65
    %vm105 = vcmp.eq.s32.totalorder %v77, %v65
    %vm106 = vcmp.eq.s32.totalorder %v80, %v65
    %vm107 = vcmp.eq.s32.totalorder %v83, %v65
    %vm108 = vcmp.eq.s32.totalorder %v86, %v65
    %vm109 = vcmp.eq.s32.totalorder %v89, %v65
    %vm110 = vcmp.eq.s32.totalorder %v92, %v65
    %vm111 = vcmp.eq.s32.totalorder %v95, %v65
    %vm112 = vcmp.eq.s32.totalorder %v98, %v65
    %vm113 = vcmp.eq.s32.totalorder %v101, %v65
    %v114 = vsel %vm102, 1, 0
    %v115 = vsel %vm103, 1, 0
    %v116 = vsel %vm104, 1, 0
    %v117 = vsel %vm105, 1, 0
    %v118 = vsel %vm106, 1, 0
    %v119 = vsel %vm107, 1, 0
    %v120 = vsel %vm108, 1, 0
    %v121 = vsel %vm109, 1, 0
    %v122 = vsel %vm110, 1, 0
    %v123 = vsel %vm111, 1, 0
    %v124 = vsel %vm112, 1, 0
    %v125 = vsel %vm113, 1, 0
    %v126 = vcvt.s32.f32 %v114
    %v127 = vcvt.s32.f32 %v115
    %v128 = vcvt.s32.f32 %v116
    %v129 = vcvt.s32.f32 %v117
    %v130 = vcvt.s32.f32 %v118
    %v131 = vcvt.s32.f32 %v119
    %v132 = vcvt.s32.f32 %v120
    %v133 = vcvt.s32.f32 %v121
    %v134 = vcvt.s32.f32 %v122
    %v135 = vcvt.s32.f32 %v123
    %v136 = vcvt.s32.f32 %v124
    %v137 = vcvt.s32.f32 %v125
    %v138 = vpack.c.bf16 %v127, %v126
    %v139 = vpack.c.bf16 %v129, %v128
    %v140 = vpack.c.bf16 %v131, %v130
    %v141 = vpack.c.bf16 %v133, %v132
    %v142 = vpack.c.bf16 %v135, %v134
    %v143 = vpack.c.bf16 %v137, %v136
    %v144 = vld [vmem:[%s4] sm:$0xf]
    %v145 = vld [vmem:[%s4 + $0x4] sm:$0xf]
    %v148 = vunpack.c.l.b16 %v144
    %v149 = vunpack.c.l.b16 %v145
    %v150 = vpack.c.b16 %v149, %v148
    %vm151 = vcmask 121856
    %v153 = vsel %vm151, %v138, 0
    %v156 = vsel %vm151, %v139, 0
    %v159 = vsel %vm151, %v140, 0
    %v162 = vsel %vm151, %v141, 0
    %v165 = vsel %vm151, %v142, 0
    %v168 = vsel %vm151, %v143, 0
    %vm170 = vcmask 1046528
    %vm171 = vcmask 1047552
    %v172 = vsel %vm170, 4294967295, 65535
    %v173 = vsel %vm171, %v172, 0
    %v175 = vand.u32 %v150, %v173
    %177 = vmatprep.subr.bf16.mxu0 0
    %178 = vmatpush1.bf16.msra.mxu0 0
    %179 = vmatprep.subr.bf16.mxu0 0
    %180 = vmatpush1.bf16.msra.mxu0 0
    %181 = vmatprep.subr.bf16.mxu0 0
    %182 = vmatpush1.bf16.msra.mxu0 0
    %183 = vmatprep.subr.bf16.mxu0 0
    %184 = vmatpush1.bf16.msra.mxu0 0
    %185 = vmatprep.subr.bf16.mxu0 0
    %186 = vmatpush1.bf16.msra.mxu0 0
    %187 = vmatprep.subr.bf16.mxu0 0
    %188 = vmatpush1.bf16.msra.mxu0 0
    %189 = vmatprep.subr.bf16.mxu0 0
    %190 = vmatpush1.bf16.msra.mxu0 0
    %191 = vmatprep.subr.bf16.mxu0 0
    %192 = vmatpush1.bf16.msra.mxu0 %v175
    %193 = vmatprep.subr.bf16.mxu0 0
    %194 = vmatpush2.bf16.msra.mxu0 0
    %195 = vmatprep.subr.bf16.mxu0 0
    %196 = vmatpush2.bf16.msra.mxu0 0
    %197 = vmatprep.subr.bf16.mxu0 0
    %198 = vmatpush2.bf16.msra.mxu0 0
    %199 = vmatprep.subr.bf16.mxu0 0
    %200 = vmatpush2.bf16.msra.mxu0 0
    %201 = vmatprep.subr.bf16.mxu0 0
    %202 = vmatpush2.bf16.msra.mxu0 0
    %203 = vmatprep.subr.bf16.mxu0 0
    %204 = vmatpush2.bf16.msra.mxu0 0
    %205 = vmatprep.subr.bf16.mxu0 0
    %206 = vmatpush2.bf16.msra.mxu0 0
    %207 = vmatprep.subr.bf16.mxu0 0
    %208 = vmatpush2.bf16.msra.mxu0 0
    %209 = vmatprep.mubr.bf16.mxu0 0
    %210 = vmatmul.mubr.bf16.gmra.mxu0 %v153
    %v211 = vpop.f32.mrf.mxu0
    %v212 = vadd.f32 0.0, %v211
    %v213 = vpop.f32.mrf.mxu0
    %v214 = vpop.f32.mrf.mxu0
    %v215 = vadd.f32 0.0, %v214
    %v216 = vpop.f32.mrf.mxu0
    %217 = vmatprep.mubr.bf16.mxu0 0
    %218 = vmatmul.mubr.bf16.gmra.mxu0 %v156
    %v219 = vpop.f32.mrf.mxu0
    %v220 = vadd.f32 0.0, %v219
    %v221 = vpop.f32.mrf.mxu0
    %v222 = vpop.f32.mrf.mxu0
    %v223 = vadd.f32 0.0, %v222
    %v224 = vpop.f32.mrf.mxu0
    %225 = vmatprep.mubr.bf16.mxu0 0
    %226 = vmatmul.mubr.bf16.gmra.mxu0 %v159
    %v227 = vpop.f32.mrf.mxu0
    %v228 = vadd.f32 0.0, %v227
    %v229 = vpop.f32.mrf.mxu0
    %v230 = vpop.f32.mrf.mxu0
    %v231 = vadd.f32 0.0, %v230
    %v232 = vpop.f32.mrf.mxu0
    %233 = vmatprep.mubr.bf16.mxu0 0
    %234 = vmatmul.mubr.bf16.gmra.mxu0 %v162
    %v235 = vpop.f32.mrf.mxu0
    %v236 = vadd.f32 0.0, %v235
    %v237 = vpop.f32.mrf.mxu0
    %v238 = vpop.f32.mrf.mxu0
    %v239 = vadd.f32 0.0, %v238
    %v240 = vpop.f32.mrf.mxu0
    %241 = vmatprep.mubr.bf16.mxu0 0
    %242 = vmatmul.mubr.bf16.gmra.mxu0 %v165
    %v243 = vpop.f32.mrf.mxu0
    %v244 = vadd.f32 0.0, %v243
    %v245 = vpop.f32.mrf.mxu0
    %v246 = vpop.f32.mrf.mxu0
    %v247 = vadd.f32 0.0, %v246
    %v248 = vpop.f32.mrf.mxu0
    %249 = vmatprep.mubr.bf16.mxu0 0
    %250 = vmatmul.mubr.bf16.gmra.mxu0 %v168
    %v251 = vpop.f32.mrf.mxu0
    %v252 = vadd.f32 0.0, %v251
    %v253 = vpop.f32.mrf.mxu0
    %v254 = vpop.f32.mrf.mxu0
    %v255 = vadd.f32 0.0, %v254
    %v256 = vpop.f32.mrf.mxu0
    %257 = vdwg.mxu0
    %v258 = vlaneseq
    %v259 = vshrl.u32 %v258, 7
    %v260 = vadd.s32 %v259, 8
    %v261 = vadd.s32 %v259, 16
    %v262 = vadd.s32 %v259, 24
    %v263 = vadd.s32 %v259, 32
    %v264 = vadd.s32 %v259, 40
    %v265 = vadd.s32 %v259, 48
    %v266 = vadd.s32 %v259, 56
    %v267 = vadd.s32 %v259, 64
    %v268 = vadd.s32 %v259, 72
    %v269 = vadd.s32 %v259, 80
    %v270 = vadd.s32 %v259, 88
    %vm271 = vcmp.lt.s32.totalorder %v259, 0
    %v272 = vsub.s32 0, %v259
    %v273 = vsel %vm271, %v272, %v259
    %v274 = vmul.u32.u64.compose %v273, 2863311531
    %v275 = vextract.low.u32 %v274
    %v276 = vextract.high.u32 %v274
    %v277 = vshrl.u32 %v276, 2
    %v278 = vmul.u32 %v277, 6
    %v279 = vsub.s32 %v273, %v278
    %v280 = vsub.s32 0, %v279
    %v281 = vsel %vm271, %v280, %v279
    %vm282 = vcmp.lt.s32.totalorder %v260, 0
    %v283 = vsub.s32 0, %v260
    %v284 = vsel %vm282, %v283, %v260
    %v285 = vmul.u32.u64.compose %v284, 2863311531
    %v286 = vextract.low.u32 %v285
    %v287 = vextract.high.u32 %v285
    %v288 = vshrl.u32 %v287, 2
    %v289 = vmul.u32 %v288, 6
    %v290 = vsub.s32 %v284, %v289
    %v291 = vsub.s32 0, %v290
    %v292 = vsel %vm282, %v291, %v290
    %vm293 = vcmp.lt.s32.totalorder %v261, 0
    %v294 = vsub.s32 0, %v261
    %v295 = vsel %vm293, %v294, %v261
    %v296 = vmul.u32.u64.compose %v295, 2863311531
    %v297 = vextract.low.u32 %v296
    %v298 = vextract.high.u32 %v296
    %v299 = vshrl.u32 %v298, 2
    %v300 = vmul.u32 %v299, 6
    %v301 = vsub.s32 %v295, %v300
    %v302 = vsub.s32 0, %v301
    %v303 = vsel %vm293, %v302, %v301
    %vm304 = vcmp.lt.s32.totalorder %v262, 0
    %v305 = vsub.s32 0, %v262
    %v306 = vsel %vm304, %v305, %v262
    %v307 = vmul.u32.u64.compose %v306, 2863311531
    %v308 = vextract.low.u32 %v307
    %v309 = vextract.high.u32 %v307
    %v310 = vshrl.u32 %v309, 2
    %v311 = vmul.u32 %v310, 6
    %v312 = vsub.s32 %v306, %v311
    %v313 = vsub.s32 0, %v312
    %v314 = vsel %vm304, %v313, %v312
    %vm315 = vcmp.lt.s32.totalorder %v263, 0
    %v316 = vsub.s32 0, %v263
    %v317 = vsel %vm315, %v316, %v263
    %v318 = vmul.u32.u64.compose %v317, 2863311531
    %v319 = vextract.low.u32 %v318
    %v320 = vextract.high.u32 %v318
    %v321 = vshrl.u32 %v320, 2
    %v322 = vmul.u32 %v321, 6
    %v323 = vsub.s32 %v317, %v322
    %v324 = vsub.s32 0, %v323
    %v325 = vsel %vm315, %v324, %v323
    %vm326 = vcmp.lt.s32.totalorder %v264, 0
    %v327 = vsub.s32 0, %v264
    %v328 = vsel %vm326, %v327, %v264
    %v329 = vmul.u32.u64.compose %v328, 2863311531
    %v330 = vextract.low.u32 %v329
    %v331 = vextract.high.u32 %v329
    %v332 = vshrl.u32 %v331, 2
    %v333 = vmul.u32 %v332, 6
    %v334 = vsub.s32 %v328, %v333
    %v335 = vsub.s32 0, %v334
    %v336 = vsel %vm326, %v335, %v334
    %vm337 = vcmp.lt.s32.totalorder %v265, 0
    %v338 = vsub.s32 0, %v265
    %v339 = vsel %vm337, %v338, %v265
    %v340 = vmul.u32.u64.compose %v339, 2863311531
    %v341 = vextract.low.u32 %v340
    %v342 = vextract.high.u32 %v340
    %v343 = vshrl.u32 %v342, 2
    %v344 = vmul.u32 %v343, 6
    %v345 = vsub.s32 %v339, %v344
    %v346 = vsub.s32 0, %v345
    %v347 = vsel %vm337, %v346, %v345
    %vm348 = vcmp.lt.s32.totalorder %v266, 0
    %v349 = vsub.s32 0, %v266
    %v350 = vsel %vm348, %v349, %v266
    %v351 = vmul.u32.u64.compose %v350, 2863311531
    %v352 = vextract.low.u32 %v351
    %v353 = vextract.high.u32 %v351
    %v354 = vshrl.u32 %v353, 2
    %v355 = vmul.u32 %v354, 6
    %v356 = vsub.s32 %v350, %v355
    %v357 = vsub.s32 0, %v356
    %v358 = vsel %vm348, %v357, %v356
    %vm359 = vcmp.lt.s32.totalorder %v267, 0
    %v360 = vsub.s32 0, %v267
    %v361 = vsel %vm359, %v360, %v267
    %v362 = vmul.u32.u64.compose %v361, 2863311531
    %v363 = vextract.low.u32 %v362
    %v364 = vextract.high.u32 %v362
    %v365 = vshrl.u32 %v364, 2
    %v366 = vmul.u32 %v365, 6
    %v367 = vsub.s32 %v361, %v366
    %v368 = vsub.s32 0, %v367
    %v369 = vsel %vm359, %v368, %v367
    %vm370 = vcmp.lt.s32.totalorder %v268, 0
    %v371 = vsub.s32 0, %v268
    %v372 = vsel %vm370, %v371, %v268
    %v373 = vmul.u32.u64.compose %v372, 2863311531
    %v374 = vextract.low.u32 %v373
    %v375 = vextract.high.u32 %v373
    %v376 = vshrl.u32 %v375, 2
    %v377 = vmul.u32 %v376, 6
    %v378 = vsub.s32 %v372, %v377
    %v379 = vsub.s32 0, %v378
    %v380 = vsel %vm370, %v379, %v378
    %vm381 = vcmp.lt.s32.totalorder %v269, 0
    %v382 = vsub.s32 0, %v269
    %v383 = vsel %vm381, %v382, %v269
    %v384 = vmul.u32.u64.compose %v383, 2863311531
    %v385 = vextract.low.u32 %v384
    %v386 = vextract.high.u32 %v384
    %v387 = vshrl.u32 %v386, 2
    %v388 = vmul.u32 %v387, 6
    %v389 = vsub.s32 %v383, %v388
    %v390 = vsub.s32 0, %v389
    %v391 = vsel %vm381, %v390, %v389
    %vm392 = vcmp.lt.s32.totalorder %v270, 0
    %v393 = vsub.s32 0, %v270
    %v394 = vsel %vm392, %v393, %v270
    %v395 = vmul.u32.u64.compose %v394, 2863311531
    %v396 = vextract.low.u32 %v395
    %v397 = vextract.high.u32 %v395
    %v398 = vshrl.u32 %v397, 2
    %v399 = vmul.u32 %v398, 6
    %v400 = vsub.s32 %v394, %v399
    %v401 = vsub.s32 0, %v400
    %v402 = vsel %vm392, %v401, %v400
    %vm403 = vcmp.ne.s32.totalorder %v281, 0
    %vm404 = vcmp.ne.s32.totalorder %v292, 0
    %vm405 = vcmp.ne.s32.totalorder %v303, 0
    %vm406 = vcmp.ne.s32.totalorder %v314, 0
    %vm407 = vcmp.ne.s32.totalorder %v325, 0
    %vm408 = vcmp.ne.s32.totalorder %v336, 0
    %vm409 = vcmp.ne.s32.totalorder %v347, 0
    %vm410 = vcmp.ne.s32.totalorder %v358, 0
    %vm411 = vcmp.ne.s32.totalorder %v369, 0
    %vm412 = vcmp.ne.s32.totalorder %v380, 0
    %vm413 = vcmp.ne.s32.totalorder %v391, 0
    %vm414 = vcmp.ne.s32.totalorder %v402, 0
    %vm415 = vcmp.lt.s32.totalorder %v281, 0
    %vm416 = vcmp.lt.s32.totalorder %v292, 0
    %vm417 = vcmp.lt.s32.totalorder %v303, 0
    %vm418 = vcmp.lt.s32.totalorder %v314, 0
    %vm419 = vcmp.lt.s32.totalorder %v325, 0
    %vm420 = vcmp.lt.s32.totalorder %v336, 0
    %vm421 = vcmp.lt.s32.totalorder %v347, 0
    %vm422 = vcmp.lt.s32.totalorder %v358, 0
    %vm423 = vcmp.lt.s32.totalorder %v369, 0
    %vm424 = vcmp.lt.s32.totalorder %v380, 0
    %vm425 = vcmp.lt.s32.totalorder %v391, 0
    %vm426 = vcmp.lt.s32.totalorder %v402, 0
    %vm427 = vmand %vm415, %vm403
    %vm428 = vmand %vm416, %vm404
    %vm429 = vmand %vm417, %vm405
    %vm430 = vmand %vm418, %vm406
    %vm431 = vmand %vm419, %vm407
    %vm432 = vmand %vm420, %vm408
    %vm433 = vmand %vm421, %vm409
    %vm434 = vmand %vm422, %vm410
    %vm435 = vmand %vm423, %vm411
    %vm436 = vmand %vm424, %vm412
    %vm437 = vmand %vm425, %vm413
    %vm438 = vmand %vm426, %vm414
    %v439 = vadd.s32 %v281, 6
    %v440 = vadd.s32 %v292, 6
    %v441 = vadd.s32 %v303, 6
    %v442 = vadd.s32 %v314, 6
    %v443 = vadd.s32 %v325, 6
    %v444 = vadd.s32 %v336, 6
    %v445 = vadd.s32 %v347, 6
    %v446 = vadd.s32 %v358, 6
    %v447 = vadd.s32 %v369, 6
    %v448 = vadd.s32 %v380, 6
    %v449 = vadd.s32 %v391, 6
    %v450 = vadd.s32 %v402, 6
    %v451 = vsel %vm427, %v439, %v281
    %v452 = vsel %vm428, %v440, %v292
    %v453 = vsel %vm429, %v441, %v303
    %v454 = vsel %vm430, %v442, %v314
    %v455 = vsel %vm431, %v443, %v325
    %v456 = vsel %vm432, %v444, %v336
    %v457 = vsel %vm433, %v445, %v347
    %v458 = vsel %vm434, %v446, %v358
    %v459 = vsel %vm435, %v447, %v369
    %v460 = vsel %vm436, %v448, %v380
    %v461 = vsel %vm437, %v449, %v391
    %v462 = vsel %vm438, %v450, %v402
    %vm463 = vcmp.eq.s32.totalorder %v451, 0
    %vm464 = vcmp.eq.s32.totalorder %v452, 0
    %vm465 = vcmp.eq.s32.totalorder %v453, 0
    %vm466 = vcmp.eq.s32.totalorder %v454, 0
    %vm467 = vcmp.eq.s32.totalorder %v455, 0
    %vm468 = vcmp.eq.s32.totalorder %v456, 0
    %vm469 = vcmp.eq.s32.totalorder %v457, 0
    %vm470 = vcmp.eq.s32.totalorder %v458, 0
    %vm471 = vcmp.eq.s32.totalorder %v459, 0
    %vm472 = vcmp.eq.s32.totalorder %v460, 0
    %vm473 = vcmp.eq.s32.totalorder %v461, 0
    %vm474 = vcmp.eq.s32.totalorder %v462, 0
    %vm487 = vcmask 1040384
    %v488 = vrot.slane %v212, 7
    %v489 = vrot.slane %v215, 7
    %v490 = vsel %vm487, %v488, %v489
    %v491 = vrot.slane %v220, 7
    %v492 = vsel %vm487, %v489, %v491
    %v493 = vrot.slane %v223, 7
    %v494 = vsel %vm487, %v491, %v493
    %v495 = vrot.slane %v228, 7
    %v496 = vsel %vm487, %v493, %v495
    %v497 = vrot.slane %v231, 7
    %v498 = vsel %vm487, %v495, %v497
    %v499 = vrot.slane %v236, 7
    %v500 = vsel %vm487, %v497, %v499
    %v501 = vrot.slane %v239, 7
    %v502 = vsel %vm487, %v499, %v501
    %v503 = vrot.slane %v244, 7
    %v504 = vsel %vm487, %v501, %v503
    %v505 = vrot.slane %v247, 7
    %v506 = vsel %vm487, %v503, %v505
    %v507 = vrot.slane %v252, 7
    %v508 = vsel %vm487, %v505, %v507
    %v509 = vrot.slane %v255, 7
    %v510 = vsel %vm487, %v507, %v509
    %v523 = vsel %vm487, 0.0, %v488
    %v524 = vsel %vm463, 1, 0
    %v525 = vsel %vm464, 1, 0
    %v526 = vsel %vm465, 1, 0
    %v527 = vsel %vm466, 1, 0
    %v528 = vsel %vm467, 1, 0
    %v529 = vsel %vm468, 1, 0
    %v530 = vsel %vm469, 1, 0
    %v531 = vsel %vm470, 1, 0
    %v532 = vsel %vm471, 1, 0
    %v533 = vsel %vm472, 1, 0
    %v534 = vsel %vm473, 1, 0
    %v535 = vsel %vm474, 1, 0
    %vm536 = vcmp.eq.s32.totalorder %v524, 1
    %vm537 = vcmp.eq.s32.totalorder %v525, 1
    %vm538 = vcmp.eq.s32.totalorder %v526, 1
    %vm539 = vcmp.eq.s32.totalorder %v527, 1
    %vm540 = vcmp.eq.s32.totalorder %v528, 1
    %vm541 = vcmp.eq.s32.totalorder %v529, 1
    %vm542 = vcmp.eq.s32.totalorder %v530, 1
    %vm543 = vcmp.eq.s32.totalorder %v531, 1
    %vm544 = vcmp.eq.s32.totalorder %v532, 1
    %vm545 = vcmp.eq.s32.totalorder %v533, 1
    %vm546 = vcmp.eq.s32.totalorder %v534, 1
    %vm547 = vcmp.eq.s32.totalorder %v535, 1
    %v548 = vsel %vm536, 0.0, %v523
    %v549 = vsel %vm537, 0.0, %v490
    %v550 = vsel %vm538, 0.0, %v492
    %v551 = vsel %vm539, 0.0, %v494
    %v552 = vsel %vm540, 0.0, %v496
    %v553 = vsel %vm541, 0.0, %v498
    %v554 = vsel %vm542, 0.0, %v500
    %v555 = vsel %vm543, 0.0, %v502
    %v556 = vsel %vm544, 0.0, %v504
    %v557 = vsel %vm545, 0.0, %v506
    %v558 = vsel %vm546, 0.0, %v508
    %v559 = vsel %vm547, 0.0, %v510
    %vm560 = vcmp.eq.s32.totalorder %v451, 5
    %vm561 = vcmp.eq.s32.totalorder %v452, 5
    %vm562 = vcmp.eq.s32.totalorder %v453, 5
    %vm563 = vcmp.eq.s32.totalorder %v454, 5
    %vm564 = vcmp.eq.s32.totalorder %v455, 5
    %vm565 = vcmp.eq.s32.totalorder %v456, 5
    %vm566 = vcmp.eq.s32.totalorder %v457, 5
    %vm567 = vcmp.eq.s32.totalorder %v458, 5
    %vm568 = vcmp.eq.s32.totalorder %v459, 5
    %vm569 = vcmp.eq.s32.totalorder %v460, 5
    %vm570 = vcmp.eq.s32.totalorder %v461, 5
    %vm571 = vcmp.eq.s32.totalorder %v462, 5
    %v572 = vrot.slane %v212, 1
    %v573 = vrot.slane %v215, 1
    %v574 = vsel %vm170, %v572, %v573
    %v575 = vrot.slane %v220, 1
    %v576 = vsel %vm170, %v573, %v575
    %v577 = vrot.slane %v223, 1
    %v578 = vsel %vm170, %v575, %v577
    %v579 = vrot.slane %v228, 1
    %v580 = vsel %vm170, %v577, %v579
    %v581 = vrot.slane %v231, 1
    %v582 = vsel %vm170, %v579, %v581
    %v583 = vrot.slane %v236, 1
    %v584 = vsel %vm170, %v581, %v583
    %v585 = vrot.slane %v239, 1
    %v586 = vsel %vm170, %v583, %v585
    %v587 = vrot.slane %v244, 1
    %v588 = vsel %vm170, %v585, %v587
    %v589 = vrot.slane %v247, 1
    %v590 = vsel %vm170, %v587, %v589
    %v591 = vrot.slane %v252, 1
    %v592 = vsel %vm170, %v589, %v591
    %v593 = vrot.slane %v255, 1
    %v594 = vsel %vm170, %v591, %v593
    %v607 = vsel %vm170, %v593, 0.0
    %v608 = vsel %vm560, 1, 0
    %v609 = vsel %vm561, 1, 0
    %v610 = vsel %vm562, 1, 0
    %v611 = vsel %vm563, 1, 0
    %v612 = vsel %vm564, 1, 0
    %v613 = vsel %vm565, 1, 0
    %v614 = vsel %vm566, 1, 0
    %v615 = vsel %vm567, 1, 0
    %v616 = vsel %vm568, 1, 0
    %v617 = vsel %vm569, 1, 0
    %v618 = vsel %vm570, 1, 0
    %v619 = vsel %vm571, 1, 0
    %vm620 = vcmp.eq.s32.totalorder %v608, 1
    %vm621 = vcmp.eq.s32.totalorder %v609, 1
    %vm622 = vcmp.eq.s32.totalorder %v610, 1
    %vm623 = vcmp.eq.s32.totalorder %v611, 1
    %vm624 = vcmp.eq.s32.totalorder %v612, 1
    %vm625 = vcmp.eq.s32.totalorder %v613, 1
    %vm626 = vcmp.eq.s32.totalorder %v614, 1
    %vm627 = vcmp.eq.s32.totalorder %v615, 1
    %vm628 = vcmp.eq.s32.totalorder %v616, 1
    %vm629 = vcmp.eq.s32.totalorder %v617, 1
    %vm630 = vcmp.eq.s32.totalorder %v618, 1
    %vm631 = vcmp.eq.s32.totalorder %v619, 1
    %v632 = vsel %vm620, 0.0, %v574
    %v633 = vsel %vm621, 0.0, %v576
    %v634 = vsel %vm622, 0.0, %v578
    %v635 = vsel %vm623, 0.0, %v580
    %v636 = vsel %vm624, 0.0, %v582
    %v637 = vsel %vm625, 0.0, %v584
    %v638 = vsel %vm626, 0.0, %v586
    %v639 = vsel %vm627, 0.0, %v588
    %v640 = vsel %vm628, 0.0, %v590
    %v641 = vsel %vm629, 0.0, %v592
    %v642 = vsel %vm630, 0.0, %v594
    %v643 = vsel %vm631, 0.0, %v607
    %v644 = vpack.c.bf16 %v549, %v548
    %v645 = vpack.c.bf16 %v551, %v550
    %v646 = vpack.c.bf16 %v553, %v552
    %v647 = vpack.c.bf16 %v555, %v554
    %v648 = vpack.c.bf16 %v557, %v556
    %v649 = vpack.c.bf16 %v559, %v558
    %v650 = vld [vmem:[%s5] sm:$0xf]
    %v651 = vpack.c.bf16 %v215, %v212
    %v652 = vpack.c.bf16 %v223, %v220
    %v653 = vpack.c.bf16 %v231, %v228
    %v654 = vpack.c.bf16 %v239, %v236
    %v655 = vpack.c.bf16 %v247, %v244
    %v656 = vpack.c.bf16 %v255, %v252
    %v657 = vld [vmem:[%s6] sm:$0xf]
    %vm658 = vcmask 64512
    %v660 = vsel %vm658, %v651, 0
    %v663 = vsel %vm658, %v652, 0
    %v666 = vsel %vm658, %v653, 0
    %v669 = vsel %vm658, %v654, 0
    %v672 = vsel %vm658, %v655, 0
    %v675 = vsel %vm658, %v656, 0
    %vm677 = vcmask 1043456
    %v679 = vsel %vm677, %v657, 0
    %681 = vmatprep.subr.bf16.mxu0 0
    %682 = vmatpush1.bf16.msra.mxu0 0
    %683 = vmatprep.subr.bf16.mxu0 0
    %684 = vmatpush1.bf16.msra.mxu0 0
    %685 = vmatprep.subr.bf16.mxu0 0
    %686 = vmatpush1.bf16.msra.mxu0 0
    %687 = vmatprep.subr.bf16.mxu0 0
    %688 = vmatpush1.bf16.msra.mxu0 0
    %689 = vmatprep.subr.bf16.mxu0 0
    %690 = vmatpush1.bf16.msra.mxu0 0
    %691 = vmatprep.subr.bf16.mxu0 0
    %692 = vmatpush1.bf16.msra.mxu0 0
    %693 = vmatprep.subr.bf16.mxu0 0
    %694 = vmatpush1.bf16.msra.mxu0 0
    %695 = vmatprep.subr.bf16.mxu0 0
    %696 = vmatpush1.bf16.msra.mxu0 %v679
    %697 = vmatprep.subr.bf16.mxu0 0
    %698 = vmatpush2.bf16.msra.mxu0 0
    %699 = vmatprep.subr.bf16.mxu0 0
    %700 = vmatpush2.bf16.msra.mxu0 0
    %701 = vmatprep.subr.bf16.mxu0 0
    %702 = vmatpush2.bf16.msra.mxu0 0
    %703 = vmatprep.subr.bf16.mxu0 0
    %704 = vmatpush2.bf16.msra.mxu0 0
    %705 = vmatprep.subr.bf16.mxu0 0
    %706 = vmatpush2.bf16.msra.mxu0 0
    %707 = vmatprep.subr.bf16.mxu0 0
    %708 = vmatpush2.bf16.msra.mxu0 0
    %709 = vmatprep.subr.bf16.mxu0 0
    %710 = vmatpush2.bf16.msra.mxu0 0
    %711 = vmatprep.subr.bf16.mxu0 0
    %712 = vmatpush2.bf16.msra.mxu0 0
    %713 = vmatprep.mubr.bf16.mxu0 0
    %714 = vmatmul.mubr.bf16.gmra.mxu0 %v660
    %v715 = vpop.f32.mrf.mxu0
    %v716 = vadd.f32 0.0, %v715
    %v717 = vpop.f32.mrf.mxu0
    %v718 = vpop.f32.mrf.mxu0
    %v719 = vadd.f32 0.0, %v718
    %v720 = vpop.f32.mrf.mxu0
    %721 = vmatprep.mubr.bf16.mxu0 0
    %722 = vmatmul.mubr.bf16.gmra.mxu0 %v663
    %v723 = vpop.f32.mrf.mxu0
    %v724 = vadd.f32 0.0, %v723
    %v725 = vpop.f32.mrf.mxu0
    %v726 = vpop.f32.mrf.mxu0
    %v727 = vadd.f32 0.0, %v726
    %v728 = vpop.f32.mrf.mxu0
    %729 = vmatprep.mubr.bf16.mxu0 0
    %730 = vmatmul.mubr.bf16.gmra.mxu0 %v666
    %v731 = vpop.f32.mrf.mxu0
    %v732 = vadd.f32 0.0, %v731
    %v733 = vpop.f32.mrf.mxu0
    %v734 = vpop.f32.mrf.mxu0
    %v735 = vadd.f32 0.0, %v734
    %v736 = vpop.f32.mrf.mxu0
    %737 = vmatprep.mubr.bf16.mxu0 0
    %738 = vmatmul.mubr.bf16.gmra.mxu0 %v669
    %v739 = vpop.f32.mrf.mxu0
    %v740 = vadd.f32 0.0, %v739
    %v741 = vpop.f32.mrf.mxu0
    %v742 = vpop.f32.mrf.mxu0
    %v743 = vadd.f32 0.0, %v742
    %v744 = vpop.f32.mrf.mxu0
    %745 = vmatprep.mubr.bf16.mxu0 0
    %746 = vmatmul.mubr.bf16.gmra.mxu0 %v672
    %v747 = vpop.f32.mrf.mxu0
    %v748 = vadd.f32 0.0, %v747
    %v749 = vpop.f32.mrf.mxu0
    %v750 = vpop.f32.mrf.mxu0
    %v751 = vadd.f32 0.0, %v750
    %v752 = vpop.f32.mrf.mxu0
    %753 = vmatprep.mubr.bf16.mxu0 0
    %754 = vmatmul.mubr.bf16.gmra.mxu0 %v675
    %v755 = vpop.f32.mrf.mxu0
    %v756 = vadd.f32 0.0, %v755
    %v757 = vpop.f32.mrf.mxu0
    %v758 = vpop.f32.mrf.mxu0
    %v759 = vadd.f32 0.0, %v758
    %v760 = vpop.f32.mrf.mxu0
    %761 = vdwg.mxu0
    %v763 = vsel %vm658, %v644, 0
    %v766 = vsel %vm658, %v645, 0
    %v769 = vsel %vm658, %v646, 0
    %v772 = vsel %vm658, %v647, 0
    %v775 = vsel %vm658, %v648, 0
    %v778 = vsel %vm658, %v649, 0
    %v781 = vsel %vm677, %v650, 0
    %783 = vmatprep.subr.bf16.mxu0 0
    %784 = vmatpush1.bf16.msra.mxu0 0
    %785 = vmatprep.subr.bf16.mxu0 0
    %786 = vmatpush1.bf16.msra.mxu0 0
    %787 = vmatprep.subr.bf16.mxu0 0
    %788 = vmatpush1.bf16.msra.mxu0 0
    %789 = vmatprep.subr.bf16.mxu0 0
    %790 = vmatpush1.bf16.msra.mxu0 0
    %791 = vmatprep.subr.bf16.mxu0 0
    %792 = vmatpush1.bf16.msra.mxu0 0
    %793 = vmatprep.subr.bf16.mxu0 0
    %794 = vmatpush1.bf16.msra.mxu0 0
    %795 = vmatprep.subr.bf16.mxu0 0
    %796 = vmatpush1.bf16.msra.mxu0 0
    %797 = vmatprep.subr.bf16.mxu0 0
    %798 = vmatpush1.bf16.msra.mxu0 %v781
    %799 = vmatprep.subr.bf16.mxu0 0
    %800 = vmatpush2.bf16.msra.mxu0 0
    %801 = vmatprep.subr.bf16.mxu0 0
    %802 = vmatpush2.bf16.msra.mxu0 0
    %803 = vmatprep.subr.bf16.mxu0 0
    %804 = vmatpush2.bf16.msra.mxu0 0
    %805 = vmatprep.subr.bf16.mxu0 0
    %806 = vmatpush2.bf16.msra.mxu0 0
    %807 = vmatprep.subr.bf16.mxu0 0
    %808 = vmatpush2.bf16.msra.mxu0 0
    %809 = vmatprep.subr.bf16.mxu0 0
    %810 = vmatpush2.bf16.msra.mxu0 0
    %811 = vmatprep.subr.bf16.mxu0 0
    %812 = vmatpush2.bf16.msra.mxu0 0
    %813 = vmatprep.subr.bf16.mxu0 0
    %814 = vmatpush2.bf16.msra.mxu0 0
    %815 = vmatprep.mubr.bf16.mxu0 0
    %816 = vmatmul.mubr.bf16.gmra.mxu0 %v763
    %v817 = vpop.f32.mrf.mxu0
    %v818 = vadd.f32 %v716, %v817
    %v819 = vpop.f32.mrf.mxu0
    %v820 = vpop.f32.mrf.mxu0
    %v821 = vadd.f32 %v719, %v820
    %v822 = vpop.f32.mrf.mxu0
    %823 = vmatprep.mubr.bf16.mxu0 0
    %824 = vmatmul.mubr.bf16.gmra.mxu0 %v766
    %v825 = vpop.f32.mrf.mxu0
    %v826 = vadd.f32 %v724, %v825
    %v827 = vpop.f32.mrf.mxu0
    %v828 = vpop.f32.mrf.mxu0
    %v829 = vadd.f32 %v727, %v828
    %v830 = vpop.f32.mrf.mxu0
    %831 = vmatprep.mubr.bf16.mxu0 0
    %832 = vmatmul.mubr.bf16.gmra.mxu0 %v769
    %v833 = vpop.f32.mrf.mxu0
    %v834 = vadd.f32 %v732, %v833
    %v835 = vpop.f32.mrf.mxu0
    %v836 = vpop.f32.mrf.mxu0
    %v837 = vadd.f32 %v735, %v836
    %v838 = vpop.f32.mrf.mxu0
    %839 = vmatprep.mubr.bf16.mxu0 0
    %840 = vmatmul.mubr.bf16.gmra.mxu0 %v772
    %v841 = vpop.f32.mrf.mxu0
    %v842 = vadd.f32 %v740, %v841
    %v843 = vpop.f32.mrf.mxu0
    %v844 = vpop.f32.mrf.mxu0
    %v845 = vadd.f32 %v743, %v844
    %v846 = vpop.f32.mrf.mxu0
    %847 = vmatprep.mubr.bf16.mxu0 0
    %848 = vmatmul.mubr.bf16.gmra.mxu0 %v775
    %v849 = vpop.f32.mrf.mxu0
    %v850 = vadd.f32 %v748, %v849
    %v851 = vpop.f32.mrf.mxu0
    %v852 = vpop.f32.mrf.mxu0
    %v853 = vadd.f32 %v751, %v852
    %v854 = vpop.f32.mrf.mxu0
    %855 = vmatprep.mubr.bf16.mxu0 0
    %856 = vmatmul.mubr.bf16.gmra.mxu0 %v778
    %v857 = vpop.f32.mrf.mxu0
    %v858 = vadd.f32 %v756, %v857
    %v859 = vpop.f32.mrf.mxu0
    %v860 = vpop.f32.mrf.mxu0
    %v861 = vadd.f32 %v759, %v860
    %v862 = vpop.f32.mrf.mxu0
    %863 = vdwg.mxu0
    %v864 = vpack.c.bf16 %v633, %v632
    %v865 = vpack.c.bf16 %v635, %v634
    %v866 = vpack.c.bf16 %v637, %v636
    %v867 = vpack.c.bf16 %v639, %v638
    %v868 = vpack.c.bf16 %v641, %v640
    %v869 = vpack.c.bf16 %v643, %v642
    %v870 = vld [vmem:[%s7] sm:$0xf]
    %v872 = vsel %vm658, %v864, 0
    %v875 = vsel %vm658, %v865, 0
    %v878 = vsel %vm658, %v866, 0
    %v881 = vsel %vm658, %v867, 0
    %v884 = vsel %vm658, %v868, 0
    %v887 = vsel %vm658, %v869, 0
    %v890 = vsel %vm677, %v870, 0
    %892 = vmatprep.subr.bf16.mxu0 0
    %893 = vmatpush1.bf16.msra.mxu0 0
    %894 = vmatprep.subr.bf16.mxu0 0
    %895 = vmatpush1.bf16.msra.mxu0 0
    %896 = vmatprep.subr.bf16.mxu0 0
    %897 = vmatpush1.bf16.msra.mxu0 0
    %898 = vmatprep.subr.bf16.mxu0 0
    %899 = vmatpush1.bf16.msra.mxu0 0
    %900 = vmatprep.subr.bf16.mxu0 0
    %901 = vmatpush1.bf16.msra.mxu0 0
    %902 = vmatprep.subr.bf16.mxu0 0
    %903 = vmatpush1.bf16.msra.mxu0 0
    %904 = vmatprep.subr.bf16.mxu0 0
    %905 = vmatpush1.bf16.msra.mxu0 0
    %906 = vmatprep.subr.bf16.mxu0 0
    %907 = vmatpush1.bf16.msra.mxu0 %v890
    %908 = vmatprep.subr.bf16.mxu0 0
    %909 = vmatpush2.bf16.msra.mxu0 0
    %910 = vmatprep.subr.bf16.mxu0 0
    %911 = vmatpush2.bf16.msra.mxu0 0
    %912 = vmatprep.subr.bf16.mxu0 0
    %913 = vmatpush2.bf16.msra.mxu0 0
    %914 = vmatprep.subr.bf16.mxu0 0
    %915 = vmatpush2.bf16.msra.mxu0 0
    %916 = vmatprep.subr.bf16.mxu0 0
    %917 = vmatpush2.bf16.msra.mxu0 0
    %918 = vmatprep.subr.bf16.mxu0 0
    %919 = vmatpush2.bf16.msra.mxu0 0
    %920 = vmatprep.subr.bf16.mxu0 0
    %921 = vmatpush2.bf16.msra.mxu0 0
    %922 = vmatprep.subr.bf16.mxu0 0
    %923 = vmatpush2.bf16.msra.mxu0 0
    %924 = vmatprep.mubr.bf16.mxu0 0
    %925 = vmatmul.mubr.bf16.gmra.mxu0 %v872
    %v926 = vpop.f32.mrf.mxu0
    %v927 = vadd.f32 0.0, %v926
    %v928 = vpop.f32.mrf.mxu0
    %v929 = vpop.f32.mrf.mxu0
    %v930 = vadd.f32 0.0, %v929
    %v931 = vpop.f32.mrf.mxu0
    %932 = vmatprep.mubr.bf16.mxu0 0
    %933 = vmatmul.mubr.bf16.gmra.mxu0 %v875
    %v934 = vpop.f32.mrf.mxu0
    %v935 = vadd.f32 0.0, %v934
    %v936 = vpop.f32.mrf.mxu0
    %v937 = vpop.f32.mrf.mxu0
    %v938 = vadd.f32 0.0, %v937
    %v939 = vpop.f32.mrf.mxu0
    %940 = vmatprep.mubr.bf16.mxu0 0
    %941 = vmatmul.mubr.bf16.gmra.mxu0 %v878
    %v942 = vpop.f32.mrf.mxu0
    %v943 = vadd.f32 0.0, %v942
    %v944 = vpop.f32.mrf.mxu0
    %v945 = vpop.f32.mrf.mxu0
    %v946 = vadd.f32 0.0, %v945
    %v947 = vpop.f32.mrf.mxu0
    %948 = vmatprep.mubr.bf16.mxu0 0
    %949 = vmatmul.mubr.bf16.gmra.mxu0 %v881
    %v950 = vpop.f32.mrf.mxu0
    %v951 = vadd.f32 0.0, %v950
    %v952 = vpop.f32.mrf.mxu0
    %v953 = vpop.f32.mrf.mxu0
    %v954 = vadd.f32 0.0, %v953
    %v955 = vpop.f32.mrf.mxu0
    %956 = vmatprep.mubr.bf16.mxu0 0
    %957 = vmatmul.mubr.bf16.gmra.mxu0 %v884
    %v958 = vpop.f32.mrf.mxu0
    %v959 = vadd.f32 0.0, %v958
    %v960 = vpop.f32.mrf.mxu0
    %v961 = vpop.f32.mrf.mxu0
    %v962 = vadd.f32 0.0, %v961
    %v963 = vpop.f32.mrf.mxu0
    %964 = vmatprep.mubr.bf16.mxu0 0
    %965 = vmatmul.mubr.bf16.gmra.mxu0 %v887
    %v966 = vpop.f32.mrf.mxu0
    %v967 = vadd.f32 0.0, %v966
    %v968 = vpop.f32.mrf.mxu0
    %v969 = vpop.f32.mrf.mxu0
    %v970 = vadd.f32 0.0, %v969
    %v971 = vpop.f32.mrf.mxu0
    %972 = vdwg.mxu0
    %v973 = vadd.f32 %v818, %v927
    %v974 = vadd.f32 %v821, %v930
    %v975 = vadd.f32 %v826, %v935
    %v976 = vadd.f32 %v829, %v938
    %v977 = vadd.f32 %v834, %v943
    %v978 = vadd.f32 %v837, %v946
    %v979 = vadd.f32 %v842, %v951
    %v980 = vadd.f32 %v845, %v954
    %v981 = vadd.f32 %v850, %v959
    %v982 = vadd.f32 %v853, %v962
    %v983 = vadd.f32 %v858, %v967
    %v984 = vadd.f32 %v861, %v970
    %v985 = vld [vmem:[%s8] sm:$0x1]
    %v987 = vlaneseq
    %v988 = vshrl.u32 %v987, 7
    %v989 = vsub.s32 0, %v988
    %v990 = vrot.slane %v985, %v989
    %v992 = vadd.f32 %v973, %v990
    %v993 = vadd.f32 %v974, %v990
    %v994 = vadd.f32 %v975, %v990
    %v995 = vadd.f32 %v976, %v990
    %v996 = vadd.f32 %v977, %v990
    %v997 = vadd.f32 %v978, %v990
    %v998 = vadd.f32 %v979, %v990
    %v999 = vadd.f32 %v980, %v990
    %v1000 = vadd.f32 %v981, %v990
    %v1001 = vadd.f32 %v982, %v990
    %v1002 = vadd.f32 %v983, %v990
    %v1003 = vadd.f32 %v984, %v990
    %v1016 = vcombine.high %v992, %v992
    %v1018 = vunpack.c.l.s4 1983009808
    %v1019 = vunpack.c.0.s8 %v1018
    %v1020 = vlaneseq
    %v1021 = vshrl.u32 %v1020, 7
    %v1022 = vsub.s32 %v1019, %v1021
    %v1023 = vrot.slane %v992, %v1022
    %v1025 = vunpack.c.l.s4 1983009808
    %v1026 = vunpack.c.0.s8 %v1025
    %v1027 = vlaneseq
    %v1028 = vshrl.u32 %v1027, 7
    %v1029 = vsub.s32 %v1026, %v1028
    %v1030 = vrot.slane %v1016, %v1029
    %v1031 = vcombine.high %v1023, %v1023
    %v1032 = vcombine.high %v1030, %v1030
    %v1033 = vcombine.high %v993, %v993
    %v1035 = vunpack.c.l.s4 1983009808
    %v1036 = vunpack.c.0.s8 %v1035
    %v1037 = vlaneseq
    %v1038 = vshrl.u32 %v1037, 7
    %v1039 = vsub.s32 %v1036, %v1038
    %v1040 = vrot.slane %v993, %v1039
    %v1042 = vunpack.c.l.s4 1983009808
    %v1043 = vunpack.c.0.s8 %v1042
    %v1044 = vlaneseq
    %v1045 = vshrl.u32 %v1044, 7
    %v1046 = vsub.s32 %v1043, %v1045
    %v1047 = vrot.slane %v1033, %v1046
    %v1048 = vcombine.high %v1040, %v1040
    %v1049 = vcombine.high %v1047, %v1047
    %v1050 = vcombine.high %v994, %v994
    %v1052 = vunpack.c.l.s4 1983009808
    %v1053 = vunpack.c.0.s8 %v1052
    %v1054 = vlaneseq
    %v1055 = vshrl.u32 %v1054, 7
    %v1056 = vsub.s32 %v1053, %v1055
    %v1057 = vrot.slane %v994, %v1056
    %v1059 = vunpack.c.l.s4 1983009808
    %v1060 = vunpack.c.0.s8 %v1059
    %v1061 = vlaneseq
    %v1062 = vshrl.u32 %v1061, 7
    %v1063 = vsub.s32 %v1060, %v1062
    %v1064 = vrot.slane %v1050, %v1063
    %v1065 = vcombine.high %v1057, %v1057
    %v1066 = vcombine.high %v1064, %v1064
    %v1067 = vcombine.high %v995, %v995
    %v1069 = vunpack.c.l.s4 1983009808
    %v1070 = vunpack.c.0.s8 %v1069
    %v1071 = vlaneseq
    %v1072 = vshrl.u32 %v1071, 7
    %v1073 = vsub.s32 %v1070, %v1072
    %v1074 = vrot.slane %v995, %v1073
    %v1076 = vunpack.c.l.s4 1983009808
    %v1077 = vunpack.c.0.s8 %v1076
    %v1078 = vlaneseq
    %v1079 = vshrl.u32 %v1078, 7
    %v1080 = vsub.s32 %v1077, %v1079
    %v1081 = vrot.slane %v1067, %v1080
    %v1082 = vcombine.high %v1074, %v1074
    %v1083 = vcombine.high %v1081, %v1081
    %v1084 = vcombine.high %v996, %v996
    %v1086 = vunpack.c.l.s4 1983009808
    %v1087 = vunpack.c.0.s8 %v1086
    %v1088 = vlaneseq
    %v1089 = vshrl.u32 %v1088, 7
    %v1090 = vsub.s32 %v1087, %v1089
    %v1091 = vrot.slane %v996, %v1090
    %v1093 = vunpack.c.l.s4 1983009808
    %v1094 = vunpack.c.0.s8 %v1093
    %v1095 = vlaneseq
    %v1096 = vshrl.u32 %v1095, 7
    %v1097 = vsub.s32 %v1094, %v1096
    %v1098 = vrot.slane %v1084, %v1097
    %v1099 = vcombine.high %v1091, %v1091
    %v1100 = vcombine.high %v1098, %v1098
    %v1101 = vcombine.high %v997, %v997
    %v1103 = vunpack.c.l.s4 1983009808
    %v1104 = vunpack.c.0.s8 %v1103
    %v1105 = vlaneseq
    %v1106 = vshrl.u32 %v1105, 7
    %v1107 = vsub.s32 %v1104, %v1106
    %v1108 = vrot.slane %v997, %v1107
    %v1110 = vunpack.c.l.s4 1983009808
    %v1111 = vunpack.c.0.s8 %v1110
    %v1112 = vlaneseq
    %v1113 = vshrl.u32 %v1112, 7
    %v1114 = vsub.s32 %v1111, %v1113
    %v1115 = vrot.slane %v1101, %v1114
    %v1116 = vcombine.high %v1108, %v1108
    %v1117 = vcombine.high %v1115, %v1115
    %v1118 = vcombine.high %v998, %v998
    %v1120 = vunpack.c.l.s4 1983009808
    %v1121 = vunpack.c.0.s8 %v1120
    %v1122 = vlaneseq
    %v1123 = vshrl.u32 %v1122, 7
    %v1124 = vsub.s32 %v1121, %v1123
    %v1125 = vrot.slane %v998, %v1124
    %v1127 = vunpack.c.l.s4 1983009808
    %v1128 = vunpack.c.0.s8 %v1127
    %v1129 = vlaneseq
    %v1130 = vshrl.u32 %v1129, 7
    %v1131 = vsub.s32 %v1128, %v1130
    %v1132 = vrot.slane %v1118, %v1131
    %v1133 = vcombine.high %v1125, %v1125
    %v1134 = vcombine.high %v1132, %v1132
    %v1135 = vcombine.high %v999, %v999
    %v1137 = vunpack.c.l.s4 1983009808
    %v1138 = vunpack.c.0.s8 %v1137
    %v1139 = vlaneseq
    %v1140 = vshrl.u32 %v1139, 7
    %v1141 = vsub.s32 %v1138, %v1140
    %v1142 = vrot.slane %v999, %v1141
    %v1144 = vunpack.c.l.s4 1983009808
    %v1145 = vunpack.c.0.s8 %v1144
    %v1146 = vlaneseq
    %v1147 = vshrl.u32 %v1146, 7
    %v1148 = vsub.s32 %v1145, %v1147
    %v1149 = vrot.slane %v1135, %v1148
    %v1150 = vcombine.high %v1142, %v1142
    %v1151 = vcombine.high %v1149, %v1149
    %v1152 = vcombine.high %v1000, %v1000
    %v1154 = vunpack.c.l.s4 1983009808
    %v1155 = vunpack.c.0.s8 %v1154
    %v1156 = vlaneseq
    %v1157 = vshrl.u32 %v1156, 7
    %v1158 = vsub.s32 %v1155, %v1157
    %v1159 = vrot.slane %v1000, %v1158
    %v1161 = vunpack.c.l.s4 1983009808
    %v1162 = vunpack.c.0.s8 %v1161
    %v1163 = vlaneseq
    %v1164 = vshrl.u32 %v1163, 7
    %v1165 = vsub.s32 %v1162, %v1164
    %v1166 = vrot.slane %v1152, %v1165
    %v1167 = vcombine.high %v1159, %v1159
    %v1168 = vcombine.high %v1166, %v1166
    %v1169 = vcombine.high %v1001, %v1001
    %v1171 = vunpack.c.l.s4 1983009808
    %v1172 = vunpack.c.0.s8 %v1171
    %v1173 = vlaneseq
    %v1174 = vshrl.u32 %v1173, 7
    %v1175 = vsub.s32 %v1172, %v1174
    %v1176 = vrot.slane %v1001, %v1175
    %v1178 = vunpack.c.l.s4 1983009808
    %v1179 = vunpack.c.0.s8 %v1178
    %v1180 = vlaneseq
    %v1181 = vshrl.u32 %v1180, 7
    %v1182 = vsub.s32 %v1179, %v1181
    %v1183 = vrot.slane %v1169, %v1182
    %v1184 = vcombine.high %v1176, %v1176
    %v1185 = vcombine.high %v1183, %v1183
    %v1186 = vcombine.high %v1002, %v1002
    %v1188 = vunpack.c.l.s4 1983009808
    %v1189 = vunpack.c.0.s8 %v1188
    %v1190 = vlaneseq
    %v1191 = vshrl.u32 %v1190, 7
    %v1192 = vsub.s32 %v1189, %v1191
    %v1193 = vrot.slane %v1002, %v1192
    %v1195 = vunpack.c.l.s4 1983009808
    %v1196 = vunpack.c.0.s8 %v1195
    %v1197 = vlaneseq
    %v1198 = vshrl.u32 %v1197, 7
    %v1199 = vsub.s32 %v1196, %v1198
    %v1200 = vrot.slane %v1186, %v1199
    %v1201 = vcombine.high %v1193, %v1193
    %v1202 = vcombine.high %v1200, %v1200
    %v1203 = vcombine.high %v1003, %v1003
    %v1205 = vunpack.c.l.s4 1983009808
    %v1206 = vunpack.c.0.s8 %v1205
    %v1207 = vlaneseq
    %v1208 = vshrl.u32 %v1207, 7
    %v1209 = vsub.s32 %v1206, %v1208
    %v1210 = vrot.slane %v1003, %v1209
    %v1212 = vunpack.c.l.s4 1983009808
    %v1213 = vunpack.c.0.s8 %v1212
    %v1214 = vlaneseq
    %v1215 = vshrl.u32 %v1214, 7
    %v1216 = vsub.s32 %v1213, %v1215
    %v1217 = vrot.slane %v1203, %v1216
    %v1218 = vcombine.high %v1210, %v1210
    %v1219 = vcombine.high %v1217, %v1217
    %v1220 = vcombine.low %v1023, %v1031
    %v1222 = vunpack.c.l.s4 1983009808
    %v1223 = vunpack.c.0.s8 %v1222
    %v1224 = vlaneseq
    %v1225 = vshrl.u32 %v1224, 7
    %v1226 = vsub.s32 %v1223, %v1225
    %v1227 = vrot.slane %v1220, %v1226
    %v1229 = vunpack.c.l.s4 1983009808
    %v1230 = vunpack.c.0.s8 %v1229
    %v1231 = vlaneseq
    %v1232 = vshrl.u32 %v1231, 7
    %v1233 = vsub.s32 %v1230, %v1232
    %v1234 = vrot.slane %v1030, %v1233
    %v1235 = vcombine.low %v1227, %v1234
    %v1236 = vcombine.low %v1032, %v1040
    %v1238 = vunpack.c.l.s4 1983009808
    %v1239 = vunpack.c.0.s8 %v1238
    %v1240 = vlaneseq
    %v1241 = vshrl.u32 %v1240, 7
    %v1242 = vsub.s32 %v1239, %v1241
    %v1243 = vrot.slane %v1236, %v1242
    %v1245 = vunpack.c.l.s4 1983009808
    %v1246 = vunpack.c.0.s8 %v1245
    %v1247 = vlaneseq
    %v1248 = vshrl.u32 %v1247, 7
    %v1249 = vsub.s32 %v1246, %v1248
    %v1250 = vrot.slane %v1048, %v1249
    %v1251 = vcombine.low %v1243, %v1250
    %v1252 = vcombine.low %v1047, %v1049
    %v1254 = vunpack.c.l.s4 1983009808
    %v1255 = vunpack.c.0.s8 %v1254
    %v1256 = vlaneseq
    %v1257 = vshrl.u32 %v1256, 7
    %v1258 = vsub.s32 %v1255, %v1257
    %v1259 = vrot.slane %v1252, %v1258
    %v1261 = vunpack.c.l.s4 1983009808
    %v1262 = vunpack.c.0.s8 %v1261
    %v1263 = vlaneseq
    %v1264 = vshrl.u32 %v1263, 7
    %v1265 = vsub.s32 %v1262, %v1264
    %v1266 = vrot.slane %v1057, %v1265
    %v1267 = vcombine.low %v1259, %v1266
    %v1268 = vcombine.low %v1065, %v1064
    %v1270 = vunpack.c.l.s4 1983009808
    %v1271 = vunpack.c.0.s8 %v1270
    %v1272 = vlaneseq
    %v1273 = vshrl.u32 %v1272, 7
    %v1274 = vsub.s32 %v1271, %v1273
    %v1275 = vrot.slane %v1268, %v1274
    %v1277 = vunpack.c.l.s4 1983009808
    %v1278 = vunpack.c.0.s8 %v1277
    %v1279 = vlaneseq
    %v1280 = vshrl.u32 %v1279, 7
    %v1281 = vsub.s32 %v1278, %v1280
    %v1282 = vrot.slane %v1066, %v1281
    %v1283 = vcombine.low %v1275, %v1282
    %v1284 = vcombine.low %v1074, %v1082
    %v1286 = vunpack.c.l.s4 1983009808
    %v1287 = vunpack.c.0.s8 %v1286
    %v1288 = vlaneseq
    %v1289 = vshrl.u32 %v1288, 7
    %v1290 = vsub.s32 %v1287, %v1289
    %v1291 = vrot.slane %v1284, %v1290
    %v1293 = vunpack.c.l.s4 1983009808
    %v1294 = vunpack.c.0.s8 %v1293
    %v1295 = vlaneseq
    %v1296 = vshrl.u32 %v1295, 7
    %v1297 = vsub.s32 %v1294, %v1296
    %v1298 = vrot.slane %v1081, %v1297
    %v1299 = vcombine.low %v1291, %v1298
    %v1300 = vcombine.low %v1083, %v1091
    %v1302 = vunpack.c.l.s4 1983009808
    %v1303 = vunpack.c.0.s8 %v1302
    %v1304 = vlaneseq
    %v1305 = vshrl.u32 %v1304, 7
    %v1306 = vsub.s32 %v1303, %v1305
    %v1307 = vrot.slane %v1300, %v1306
    %v1309 = vunpack.c.l.s4 1983009808
    %v1310 = vunpack.c.0.s8 %v1309
    %v1311 = vlaneseq
    %v1312 = vshrl.u32 %v1311, 7
    %v1313 = vsub.s32 %v1310, %v1312
    %v1314 = vrot.slane %v1099, %v1313
    %v1315 = vcombine.low %v1307, %v1314
    %v1316 = vcombine.low %v1098, %v1100
    %v1318 = vunpack.c.l.s4 1983009808
    %v1319 = vunpack.c.0.s8 %v1318
    %v1320 = vlaneseq
    %v1321 = vshrl.u32 %v1320, 7
    %v1322 = vsub.s32 %v1319, %v1321
    %v1323 = vrot.slane %v1316, %v1322
    %v1325 = vunpack.c.l.s4 1983009808
    %v1326 = vunpack.c.0.s8 %v1325
    %v1327 = vlaneseq
    %v1328 = vshrl.u32 %v1327, 7
    %v1329 = vsub.s32 %v1326, %v1328
    %v1330 = vrot.slane %v1108, %v1329
    %v1331 = vcombine.low %v1323, %v1330
    %v1332 = vcombine.low %v1116, %v1115
    %v1334 = vunpack.c.l.s4 1983009808
    %v1335 = vunpack.c.0.s8 %v1334
    %v1336 = vlaneseq
    %v1337 = vshrl.u32 %v1336, 7
    %v1338 = vsub.s32 %v1335, %v1337
    %v1339 = vrot.slane %v1332, %v1338
    %v1341 = vunpack.c.l.s4 1983009808
    %v1342 = vunpack.c.0.s8 %v1341
    %v1343 = vlaneseq
    %v1344 = vshrl.u32 %v1343, 7
    %v1345 = vsub.s32 %v1342, %v1344
    %v1346 = vrot.slane %v1117, %v1345
    %v1347 = vcombine.low %v1339, %v1346
    %v1348 = vcombine.low %v1125, %v1133
    %v1350 = vunpack.c.l.s4 1983009808
    %v1351 = vunpack.c.0.s8 %v1350
    %v1352 = vlaneseq
    %v1353 = vshrl.u32 %v1352, 7
    %v1354 = vsub.s32 %v1351, %v1353
    %v1355 = vrot.slane %v1348, %v1354
    %v1357 = vunpack.c.l.s4 1983009808
    %v1358 = vunpack.c.0.s8 %v1357
    %v1359 = vlaneseq
    %v1360 = vshrl.u32 %v1359, 7
    %v1361 = vsub.s32 %v1358, %v1360
    %v1362 = vrot.slane %v1132, %v1361
    %v1363 = vcombine.low %v1355, %v1362
    %v1364 = vcombine.low %v1134, %v1142
    %v1366 = vunpack.c.l.s4 1983009808
    %v1367 = vunpack.c.0.s8 %v1366
    %v1368 = vlaneseq
    %v1369 = vshrl.u32 %v1368, 7
    %v1370 = vsub.s32 %v1367, %v1369
    %v1371 = vrot.slane %v1364, %v1370
    %v1373 = vunpack.c.l.s4 1983009808
    %v1374 = vunpack.c.0.s8 %v1373
    %v1375 = vlaneseq
    %v1376 = vshrl.u32 %v1375, 7
    %v1377 = vsub.s32 %v1374, %v1376
    %v1378 = vrot.slane %v1150, %v1377
    %v1379 = vcombine.low %v1371, %v1378
    %v1380 = vcombine.low %v1149, %v1151
    %v1382 = vunpack.c.l.s4 1983009808
    %v1383 = vunpack.c.0.s8 %v1382
    %v1384 = vlaneseq
    %v1385 = vshrl.u32 %v1384, 7
    %v1386 = vsub.s32 %v1383, %v1385
    %v1387 = vrot.slane %v1380, %v1386
    %v1389 = vunpack.c.l.s4 1983009808
    %v1390 = vunpack.c.0.s8 %v1389
    %v1391 = vlaneseq
    %v1392 = vshrl.u32 %v1391, 7
    %v1393 = vsub.s32 %v1390, %v1392
    %v1394 = vrot.slane %v1159, %v1393
    %v1395 = vcombine.low %v1387, %v1394
    %v1396 = vcombine.low %v1167, %v1166
    %v1398 = vunpack.c.l.s4 1983009808
    %v1399 = vunpack.c.0.s8 %v1398
    %v1400 = vlaneseq
    %v1401 = vshrl.u32 %v1400, 7
    %v1402 = vsub.s32 %v1399, %v1401
    %v1403 = vrot.slane %v1396, %v1402
    %v1405 = vunpack.c.l.s4 1983009808
    %v1406 = vunpack.c.0.s8 %v1405
    %v1407 = vlaneseq
    %v1408 = vshrl.u32 %v1407, 7
    %v1409 = vsub.s32 %v1406, %v1408
    %v1410 = vrot.slane %v1168, %v1409
    %v1411 = vcombine.low %v1403, %v1410
    %v1412 = vcombine.low %v1176, %v1184
    %v1414 = vunpack.c.l.s4 1983009808
    %v1415 = vunpack.c.0.s8 %v1414
    %v1416 = vlaneseq
    %v1417 = vshrl.u32 %v1416, 7
    %v1418 = vsub.s32 %v1415, %v1417
    %v1419 = vrot.slane %v1412, %v1418
    %v1421 = vunpack.c.l.s4 1983009808
    %v1422 = vunpack.c.0.s8 %v1421
    %v1423 = vlaneseq
    %v1424 = vshrl.u32 %v1423, 7
    %v1425 = vsub.s32 %v1422, %v1424
    %v1426 = vrot.slane %v1183, %v1425
    %v1427 = vcombine.low %v1419, %v1426
    %v1428 = vcombine.low %v1185, %v1193
    %v1430 = vunpack.c.l.s4 1983009808
    %v1431 = vunpack.c.0.s8 %v1430
    %v1432 = vlaneseq
    %v1433 = vshrl.u32 %v1432, 7
    %v1434 = vsub.s32 %v1431, %v1433
    %v1435 = vrot.slane %v1428, %v1434
    %v1437 = vunpack.c.l.s4 1983009808
    %v1438 = vunpack.c.0.s8 %v1437
    %v1439 = vlaneseq
    %v1440 = vshrl.u32 %v1439, 7
    %v1441 = vsub.s32 %v1438, %v1440
    %v1442 = vrot.slane %v1201, %v1441
    %v1443 = vcombine.low %v1435, %v1442
    %v1444 = vcombine.low %v1200, %v1202
    %v1446 = vunpack.c.l.s4 1983009808
    %v1447 = vunpack.c.0.s8 %v1446
    %v1448 = vlaneseq
    %v1449 = vshrl.u32 %v1448, 7
    %v1450 = vsub.s32 %v1447, %v1449
    %v1451 = vrot.slane %v1444, %v1450
    %v1453 = vunpack.c.l.s4 1983009808
    %v1454 = vunpack.c.0.s8 %v1453
    %v1455 = vlaneseq
    %v1456 = vshrl.u32 %v1455, 7
    %v1457 = vsub.s32 %v1454, %v1456
    %v1458 = vrot.slane %v1210, %v1457
    %v1459 = vcombine.low %v1451, %v1458
    %v1460 = vcombine.low %v1218, %v1217
    %v1462 = vunpack.c.l.s4 1983009808
    %v1463 = vunpack.c.0.s8 %v1462
    %v1464 = vlaneseq
    %v1465 = vshrl.u32 %v1464, 7
    %v1466 = vsub.s32 %v1463, %v1465
    %v1467 = vrot.slane %v1460, %v1466
    %v1469 = vunpack.c.l.s4 1983009808
    %v1470 = vunpack.c.0.s8 %v1469
    %v1471 = vlaneseq
    %v1472 = vshrl.u32 %v1471, 7
    %v1473 = vsub.s32 %v1470, %v1472
    %v1474 = vrot.slane %v1219, %v1473
    %v1475 = vcombine.low %v1467, %v1474
    %vm1492 = vcmask 128000
    %v1493 = vsel %vm1492, %v1235, -inf
    %v1494 = vrot.slane %v1493, 4
    %v1495 = vmax.f32 %v1493, %v1494
    %v1496 = vrot.slane %v1495, 2
    %v1497 = vmax.f32 %v1495, %v1496
    %v1498 = vrot.slane %v1497, 1
    %v1499 = vmax.f32 %v1497, %v1498
    %v1500 = vsel %vm1492, %v1251, -inf
    %v1501 = vrot.slane %v1500, 4
    %v1502 = vmax.f32 %v1500, %v1501
    %v1503 = vrot.slane %v1502, 2
    %v1504 = vmax.f32 %v1502, %v1503
    %v1505 = vrot.slane %v1504, 1
    %v1506 = vmax.f32 %v1504, %v1505
    %v1507 = vsel %vm1492, %v1267, -inf
    %v1508 = vrot.slane %v1507, 4
    %v1509 = vmax.f32 %v1507, %v1508
    %v1510 = vrot.slane %v1509, 2
    %v1511 = vmax.f32 %v1509, %v1510
    %v1512 = vrot.slane %v1511, 1
    %v1513 = vmax.f32 %v1511, %v1512
    %v1514 = vsel %vm1492, %v1283, -inf
    %v1515 = vrot.slane %v1514, 4
    %v1516 = vmax.f32 %v1514, %v1515
    %v1517 = vrot.slane %v1516, 2
    %v1518 = vmax.f32 %v1516, %v1517
    %v1519 = vrot.slane %v1518, 1
    %v1520 = vmax.f32 %v1518, %v1519
    %v1521 = vsel %vm1492, %v1299, -inf
    %v1522 = vrot.slane %v1521, 4
    %v1523 = vmax.f32 %v1521, %v1522
    %v1524 = vrot.slane %v1523, 2
    %v1525 = vmax.f32 %v1523, %v1524
    %v1526 = vrot.slane %v1525, 1
    %v1527 = vmax.f32 %v1525, %v1526
    %v1528 = vsel %vm1492, %v1315, -inf
    %v1529 = vrot.slane %v1528, 4
    %v1530 = vmax.f32 %v1528, %v1529
    %v1531 = vrot.slane %v1530, 2
    %v1532 = vmax.f32 %v1530, %v1531
    %v1533 = vrot.slane %v1532, 1
    %v1534 = vmax.f32 %v1532, %v1533
    %v1535 = vsel %vm1492, %v1331, -inf
    %v1536 = vrot.slane %v1535, 4
    %v1537 = vmax.f32 %v1535, %v1536
    %v1538 = vrot.slane %v1537, 2
    %v1539 = vmax.f32 %v1537, %v1538
    %v1540 = vrot.slane %v1539, 1
    %v1541 = vmax.f32 %v1539, %v1540
    %v1542 = vsel %vm1492, %v1347, -inf
    %v1543 = vrot.slane %v1542, 4
    %v1544 = vmax.f32 %v1542, %v1543
    %v1545 = vrot.slane %v1544, 2
    %v1546 = vmax.f32 %v1544, %v1545
    %v1547 = vrot.slane %v1546, 1
    %v1548 = vmax.f32 %v1546, %v1547
    %v1549 = vsel %vm1492, %v1363, -inf
    %v1550 = vrot.slane %v1549, 4
    %v1551 = vmax.f32 %v1549, %v1550
    %v1552 = vrot.slane %v1551, 2
    %v1553 = vmax.f32 %v1551, %v1552
    %v1554 = vrot.slane %v1553, 1
    %v1555 = vmax.f32 %v1553, %v1554
    %v1556 = vsel %vm1492, %v1379, -inf
    %v1557 = vrot.slane %v1556, 4
    %v1558 = vmax.f32 %v1556, %v1557
    %v1559 = vrot.slane %v1558, 2
    %v1560 = vmax.f32 %v1558, %v1559
    %v1561 = vrot.slane %v1560, 1
    %v1562 = vmax.f32 %v1560, %v1561
    %v1563 = vsel %vm1492, %v1395, -inf
    %v1564 = vrot.slane %v1563, 4
    %v1565 = vmax.f32 %v1563, %v1564
    %v1566 = vrot.slane %v1565, 2
    %v1567 = vmax.f32 %v1565, %v1566
    %v1568 = vrot.slane %v1567, 1
    %v1569 = vmax.f32 %v1567, %v1568
    %v1570 = vsel %vm1492, %v1411, -inf
    %v1571 = vrot.slane %v1570, 4
    %v1572 = vmax.f32 %v1570, %v1571
    %v1573 = vrot.slane %v1572, 2
    %v1574 = vmax.f32 %v1572, %v1573
    %v1575 = vrot.slane %v1574, 1
    %v1576 = vmax.f32 %v1574, %v1575
    %v1577 = vsel %vm1492, %v1427, -inf
    %v1578 = vrot.slane %v1577, 4
    %v1579 = vmax.f32 %v1577, %v1578
    %v1580 = vrot.slane %v1579, 2
    %v1581 = vmax.f32 %v1579, %v1580
    %v1582 = vrot.slane %v1581, 1
    %v1583 = vmax.f32 %v1581, %v1582
    %v1584 = vsel %vm1492, %v1443, -inf
    %v1585 = vrot.slane %v1584, 4
    %v1586 = vmax.f32 %v1584, %v1585
    %v1587 = vrot.slane %v1586, 2
    %v1588 = vmax.f32 %v1586, %v1587
    %v1589 = vrot.slane %v1588, 1
    %v1590 = vmax.f32 %v1588, %v1589
    %v1591 = vsel %vm1492, %v1459, -inf
    %v1592 = vrot.slane %v1591, 4
    %v1593 = vmax.f32 %v1591, %v1592
    %v1594 = vrot.slane %v1593, 2
    %v1595 = vmax.f32 %v1593, %v1594
    %v1596 = vrot.slane %v1595, 1
    %v1597 = vmax.f32 %v1595, %v1596
    %v1598 = vsel %vm1492, %v1475, -inf
    %v1599 = vrot.slane %v1598, 4
    %v1600 = vmax.f32 %v1598, %v1599
    %v1601 = vrot.slane %v1600, 2
    %v1602 = vmax.f32 %v1600, %v1601
    %v1603 = vrot.slane %v1602, 1
    %v1604 = vmax.f32 %v1602, %v1603
    %v1605 = vld [vmem:[%s2] sm:$0xff]
    %v1606 = vld [vmem:[%s2 + $0x8] sm:$0xff]
    %1607 = vset.pattern.permute.xlu0 0
    %1608 = vperm.xlu0 %1607, %v1605
    %v1609 = vpop.permute.xlu0 %1608
    %1610 = vset.pattern.permute.xlu0 0
    %1611 = vperm.xlu0 %1610, %v1606
    %v1612 = vpop.permute.xlu0 %1611
    %vm1613 = vcmp.eq.s32.totalorder %v1609, %v65
    %vm1614 = vcmp.eq.s32.totalorder %v1612, %v65
    %v1615 = vsel %vm1613, 1, 0
    %v1616 = vsel %vm1614, 1, 0
    %v1617 = vcvt.s32.f32 %v1615
    %v1618 = vcvt.s32.f32 %v1616
    %v1619 = vpack.c.bf16 %v1618, %v1617
    %v1620 = vpack.c.bf16 %v1499, %v1499
    %v1621 = vpack.c.bf16 %v1506, %v1506
    %v1622 = vpack.c.bf16 %v1513, %v1513
    %v1623 = vpack.c.bf16 %v1520, %v1520
    %v1624 = vpack.c.bf16 %v1527, %v1527
    %v1625 = vpack.c.bf16 %v1534, %v1534
    %v1626 = vpack.c.bf16 %v1541, %v1541
    %v1627 = vpack.c.bf16 %v1548, %v1548
    %v1628 = vpack.c.bf16 %v1555, %v1555
    %v1629 = vpack.c.bf16 %v1562, %v1562
    %v1630 = vpack.c.bf16 %v1569, %v1569
    %v1631 = vpack.c.bf16 %v1576, %v1576
    %v1632 = vpack.c.bf16 %v1583, %v1583
    %v1633 = vpack.c.bf16 %v1590, %v1590
    %v1634 = vpack.c.bf16 %v1597, %v1597
    %v1635 = vpack.c.bf16 %v1604, %v1604
    %v1652 = vunpack.c.l.b16 %v1620
    %v1653 = vunpack.c.l.b16 %v1621
    %v1654 = vunpack.c.l.b16 %v1622
    %v1655 = vunpack.c.l.b16 %v1623
    %v1656 = vunpack.c.l.b16 %v1624
    %v1657 = vunpack.c.l.b16 %v1625
    %v1658 = vunpack.c.l.b16 %v1626
    %v1659 = vunpack.c.l.b16 %v1627
    %v1660 = vunpack.c.l.b16 %v1628
    %v1661 = vunpack.c.l.b16 %v1629
    %v1662 = vunpack.c.l.b16 %v1630
    %v1663 = vunpack.c.l.b16 %v1631
    %v1664 = vunpack.c.l.b16 %v1632
    %v1665 = vunpack.c.l.b16 %v1633
    %v1666 = vunpack.c.l.b16 %v1634
    %v1667 = vunpack.c.l.b16 %v1635
    %vm1668 = vcmask 1041409
    %v1669 = vsel %vm1668, %v1653, %v1652
    %vm1670 = vcmask 1042434
    %v1671 = vsel %vm1670, %v1654, %v1669
    %vm1672 = vcmask 1043459
    %v1673 = vsel %vm1672, %v1655, %v1671
    %vm1674 = vcmask 1044484
    %v1675 = vsel %vm1674, %v1656, %v1673
    %vm1676 = vcmask 1045509
    %v1677 = vsel %vm1676, %v1657, %v1675
    %vm1678 = vcmask 1046534
    %v1679 = vsel %vm1678, %v1658, %v1677
    %vm1680 = vcmask 1047559
    %v1681 = vsel %vm1680, %v1659, %v1679
    %v1682 = vsel %vm1668, %v1661, %v1660
    %v1683 = vsel %vm1670, %v1662, %v1682
    %v1684 = vsel %vm1672, %v1663, %v1683
    %v1685 = vsel %vm1674, %v1664, %v1684
    %v1686 = vsel %vm1676, %v1665, %v1685
    %v1687 = vsel %vm1678, %v1666, %v1686
    %v1688 = vsel %vm1680, %v1667, %v1687
    %v1689 = vpack.c.b16 %v1688, %v1681
    %vm1691 = vcmask 130048
    %v1693 = vsel %vm1691, %v1619, 0
    %1695 = vmatprep.subr.bf16.mxu0 0
    %1696 = vmatpush1.bf16.msra.mxu0 0
    %1697 = vmatprep.subr.bf16.mxu0 0
    %1698 = vmatpush1.bf16.msra.mxu0 0
    %1699 = vmatprep.subr.bf16.mxu0 0
    %1700 = vmatpush1.bf16.msra.mxu0 0
    %1701 = vmatprep.subr.bf16.mxu0 0
    %1702 = vmatpush1.bf16.msra.mxu0 0
    %1703 = vmatprep.subr.bf16.mxu0 0
    %1704 = vmatpush1.bf16.msra.mxu0 0
    %1705 = vmatprep.subr.bf16.mxu0 0
    %1706 = vmatpush1.bf16.msra.mxu0 0
    %1707 = vmatprep.subr.bf16.mxu0 0
    %1708 = vmatpush1.bf16.msra.mxu0 0
    %1709 = vmatprep.subr.bf16.mxu0 0
    %1710 = vmatpush1.bf16.msra.mxu0 %v1689
    %1711 = vmatprep.subr.bf16.mxu0 0
    %1712 = vmatpush2.bf16.msra.mxu0 0
    %1713 = vmatprep.subr.bf16.mxu0 0
    %1714 = vmatpush2.bf16.msra.mxu0 0
    %1715 = vmatprep.subr.bf16.mxu0 0
    %1716 = vmatpush2.bf16.msra.mxu0 0
    %1717 = vmatprep.subr.bf16.mxu0 0
    %1718 = vmatpush2.bf16.msra.mxu0 0
    %1719 = vmatprep.subr.bf16.mxu0 0
    %1720 = vmatpush2.bf16.msra.mxu0 0
    %1721 = vmatprep.subr.bf16.mxu0 0
    %1722 = vmatpush2.bf16.msra.mxu0 0
    %1723 = vmatprep.subr.bf16.mxu0 0
    %1724 = vmatpush2.bf16.msra.mxu0 0
    %1725 = vmatprep.subr.bf16.mxu0 0
    %1726 = vmatpush2.bf16.msra.mxu0 0
    %1727 = vmatprep.mubr.bf16.mxu0 0
    %1728 = vmatmul.mubr.bf16.gmra.mxu0 %v1693
    %v1729 = vpop.f32.mrf.mxu0
    %v1730 = vadd.f32 0.0, %v1729
    %v1731 = vpop.f32.mrf.mxu0
    %v1732 = vpop.f32.mrf.mxu0
    %v1733 = vadd.f32 0.0, %v1732
    %v1734 = vpop.f32.mrf.mxu0
    %1735 = vdwg.mxu0
    %v1736 = vld [vmem:[%s0] sm:$0xff]
    %v1737 = vld [vmem:[%s0 + $0x8] sm:$0xff]
    %1738 = vset.pattern.permute.xlu0 0
    %1739 = vperm.xlu0 %1738, %v1736
    %v1740 = vpop.permute.xlu0 %1739
    %1741 = vset.pattern.permute.xlu0 0
    %1742 = vperm.xlu0 %1741, %v1737
    %v1743 = vpop.permute.xlu0 %1742
    %vm1744 = vcmp.eq.s32.totalorder %v1740, %v65
    %vm1745 = vcmp.eq.s32.totalorder %v1743, %v65
    %v1746 = vsel %vm1744, 1, 0
    %v1747 = vsel %vm1745, 1, 0
    %v1748 = vcvt.s32.f32 %v1746
    %v1749 = vcvt.s32.f32 %v1747
    %v1750 = vpack.c.bf16 %v1749, %v1748
    %v1751 = vld [vmem:[%s9] sm:$0xff]
    %v1752 = vld [vmem:[%s9 + $0x8] sm:$0xff]
    %v1753 = vld [vmem:[%s9 + $0x10] sm:$0x33]
    %v1754 = vpack.c.bf16 %v1733, %v1730
    %v1755 = vld [vmem:[%s10] sm:$0xff]
    %v1756 = vld [vmem:[%s10 + $0x8] sm:$0xff]
    %v1759 = vunpack.c.l.b16 %v1755
    %v1760 = vunpack.c.h.b16 %v1755
    %v1761 = vunpack.c.l.b16 %v1756
    %v1762 = vunpack.c.h.b16 %v1756
    %v1763 = vpack.c.b16 %v1761, %v1759
    %v1764 = vpack.c.b16 %v1762, %v1760
    %v1768 = vsel %vm1691, %v1754, 0
    %1770 = vmatprep.subr.bf16.mxu0 0
    %1771 = vmatpush1.bf16.msra.mxu0 0
    %1772 = vmatprep.subr.bf16.mxu0 0
    %1773 = vmatpush1.bf16.msra.mxu0 0
    %1774 = vmatprep.subr.bf16.mxu0 0
    %1775 = vmatpush1.bf16.msra.mxu0 0
    %1776 = vmatprep.subr.bf16.mxu0 0
    %1777 = vmatpush1.bf16.msra.mxu0 0
    %1778 = vmatprep.subr.bf16.mxu0 0
    %1779 = vmatpush1.bf16.msra.mxu0 0
    %1780 = vmatprep.subr.bf16.mxu0 0
    %1781 = vmatpush1.bf16.msra.mxu0 0
    %1782 = vmatprep.subr.bf16.mxu0 0
    %1783 = vmatpush1.bf16.msra.mxu0 0
    %1784 = vmatprep.subr.bf16.mxu0 %v1764
    %1785 = vmatpush1.bf16.msra.mxu0 %v1763
    %1786 = vmatprep.subr.bf16.mxu0 0
    %1787 = vmatpush2.bf16.msra.mxu0 0
    %1788 = vmatprep.subr.bf16.mxu0 0
    %1789 = vmatpush2.bf16.msra.mxu0 0
    %1790 = vmatprep.subr.bf16.mxu0 0
    %1791 = vmatpush2.bf16.msra.mxu0 0
    %1792 = vmatprep.subr.bf16.mxu0 0
    %1793 = vmatpush2.bf16.msra.mxu0 0
    %1794 = vmatprep.subr.bf16.mxu0 0
    %1795 = vmatpush2.bf16.msra.mxu0 0
    %1796 = vmatprep.subr.bf16.mxu0 0
    %1797 = vmatpush2.bf16.msra.mxu0 0
    %1798 = vmatprep.subr.bf16.mxu0 0
    %1799 = vmatpush2.bf16.msra.mxu0 0
    %1800 = vmatprep.subr.bf16.mxu0 0
    %1801 = vmatpush2.bf16.msra.mxu0 0
    %1802 = vmatprep.mubr.bf16.mxu0 0
    %1803 = vmatmul.mubr.bf16.gmra.mxu0 %v1768
    %v1804 = vpop.f32.mrf.mxu0
    %v1805 = vadd.f32 0.0, %v1804
    %v1806 = vpop.f32.mrf.mxu0
    %v1807 = vadd.f32 0.0, %v1806
    %v1808 = vpop.f32.mrf.mxu0
    %v1809 = vadd.f32 0.0, %v1808
    %v1810 = vpop.f32.mrf.mxu0
    %v1811 = vadd.f32 0.0, %v1810
    %1812 = vdwg.mxu0
    %v1816 = vunpack.c.l.b16 %v1751
    %v1817 = vunpack.c.h.b16 %v1751
    %v1818 = vunpack.c.l.b16 %v1752
    %v1819 = vunpack.c.h.b16 %v1752
    %v1820 = vunpack.c.l.b16 %v1753
    %v1821 = vunpack.c.h.b16 %v1753
    %v1822 = vpack.c.b16 %v1818, %v1816
    %v1823 = vpack.c.b16 %v1819, %v1817
    %v1824 = vpack.c.b16 %v1820, %v1820
    %v1825 = vpack.c.b16 %v1821, %v1821
    %vm1828 = vcmask 162816
    %v1830 = vsel %vm1828, %v1750, 0
    %vm1832 = vcmask 1041408
    %v1834 = vsel %vm1832, %v1824, 0
    %v1837 = vsel %vm1832, %v1825, 0
    %1839 = vmatprep.subr.bf16.mxu0 0
    %1840 = vmatpush1.bf16.msra.mxu0 0
    %1841 = vmatprep.subr.bf16.mxu0 0
    %1842 = vmatpush1.bf16.msra.mxu0 0
    %1843 = vmatprep.subr.bf16.mxu0 0
    %1844 = vmatpush1.bf16.msra.mxu0 0
    %1845 = vmatprep.subr.bf16.mxu0 0
    %1846 = vmatpush1.bf16.msra.mxu0 0
    %1847 = vmatprep.subr.bf16.mxu0 0
    %1848 = vmatpush1.bf16.msra.mxu0 0
    %1849 = vmatprep.subr.bf16.mxu0 0
    %1850 = vmatpush1.bf16.msra.mxu0 0
    %1851 = vmatprep.subr.bf16.mxu0 %v1837
    %1852 = vmatpush1.bf16.msra.mxu0 %v1834
    %1853 = vmatprep.subr.bf16.mxu0 %v1823
    %1854 = vmatpush1.bf16.msra.mxu0 %v1822
    %1855 = vmatprep.subr.bf16.mxu0 0
    %1856 = vmatpush2.bf16.msra.mxu0 0
    %1857 = vmatprep.subr.bf16.mxu0 0
    %1858 = vmatpush2.bf16.msra.mxu0 0
    %1859 = vmatprep.subr.bf16.mxu0 0
    %1860 = vmatpush2.bf16.msra.mxu0 0
    %1861 = vmatprep.subr.bf16.mxu0 0
    %1862 = vmatpush2.bf16.msra.mxu0 0
    %1863 = vmatprep.subr.bf16.mxu0 0
    %1864 = vmatpush2.bf16.msra.mxu0 0
    %1865 = vmatprep.subr.bf16.mxu0 0
    %1866 = vmatpush2.bf16.msra.mxu0 0
    %1867 = vmatprep.subr.bf16.mxu0 0
    %1868 = vmatpush2.bf16.msra.mxu0 0
    %1869 = vmatprep.subr.bf16.mxu0 0
    %1870 = vmatpush2.bf16.msra.mxu0 0
    %1871 = vmatprep.mubr.bf16.mxu0 0
    %1872 = vmatmul.mubr.bf16.gmra.mxu0 %v1830
    %v1873 = vpop.f32.mrf.mxu0
    %v1874 = vadd.f32 %v1805, %v1873
    %v1875 = vpop.f32.mrf.mxu0
    %v1876 = vadd.f32 %v1807, %v1875
    %v1877 = vpop.f32.mrf.mxu0
    %v1878 = vadd.f32 %v1809, %v1877
    %v1879 = vpop.f32.mrf.mxu0
    %v1880 = vadd.f32 %v1811, %v1879
    %1881 = vdwg.mxu0
    %v1883 = vrot.slane %v1880, 6
    %v1885 = vadd.f32 %v1874, %v1883
    %v1886 = vrot.slane %v1880, 2
    %v1888 = vadd.f32 %v1874, %v1886
    %v1890 = vrot.slane %v1876, 6
    %v1892 = vadd.f32 %v1878, %v1890
    %v1893 = vrot.slane %v1876, 2
    %v1895 = vadd.f32 %v1878, %v1893
    %v1896 = vld [vmem:[%s11] sm:$0xf]
    %v1897 = vld [vmem:[%s11 + $0x4] sm:$0xf]
    %v1898 = vld [vmem:[%s11 + $0x8] sm:$0xf]
    %v1899 = vld [vmem:[%s11 + $0xc] sm:$0xf]
    %v1904 = vunpack.c.l.b16 %v1896
    %v1905 = vunpack.c.l.b16 %v1897
    %v1906 = vunpack.c.l.b16 %v1898
    %v1907 = vunpack.c.l.b16 %v1899
    %v1908 = vpack.c.b16 %v1905, %v1904
    %v1909 = vpack.c.b16 %v1907, %v1906
    %vm1912 = vcmask 261120
    %v1914 = vsel %vm1912, 0, 0
    %1916 = vmatprep.subr.bf16.mxu0 0
    %1917 = vmatpush1.bf16.msra.mxu0 0
    %1918 = vmatprep.subr.bf16.mxu0 0
    %1919 = vmatpush1.bf16.msra.mxu0 0
    %1920 = vmatprep.subr.bf16.mxu0 0
    %1921 = vmatpush1.bf16.msra.mxu0 0
    %1922 = vmatprep.subr.bf16.mxu0 0
    %1923 = vmatpush1.bf16.msra.mxu0 0
    %1924 = vmatprep.subr.bf16.mxu0 0
    %1925 = vmatpush1.bf16.msra.mxu0 0
    %1926 = vmatprep.subr.bf16.mxu0 0
    %1927 = vmatpush1.bf16.msra.mxu0 0
    %1928 = vmatprep.subr.bf16.mxu0 0
    %1929 = vmatpush1.bf16.msra.mxu0 %v1909
    %1930 = vmatprep.subr.bf16.mxu0 0
    %1931 = vmatpush1.bf16.msra.mxu0 %v1908
    %1932 = vmatprep.subr.bf16.mxu0 0
    %1933 = vmatpush2.bf16.msra.mxu0 0
    %1934 = vmatprep.subr.bf16.mxu0 0
    %1935 = vmatpush2.bf16.msra.mxu0 0
    %1936 = vmatprep.subr.bf16.mxu0 0
    %1937 = vmatpush2.bf16.msra.mxu0 0
    %1938 = vmatprep.subr.bf16.mxu0 0
    %1939 = vmatpush2.bf16.msra.mxu0 0
    %1940 = vmatprep.subr.bf16.mxu0 0
    %1941 = vmatpush2.bf16.msra.mxu0 0
    %1942 = vmatprep.subr.bf16.mxu0 0
    %1943 = vmatpush2.bf16.msra.mxu0 0
    %1944 = vmatprep.subr.bf16.mxu0 0
    %1945 = vmatpush2.bf16.msra.mxu0 0
    %1946 = vmatprep.subr.bf16.mxu0 0
    %1947 = vmatpush2.bf16.msra.mxu0 0
    %1948 = vmatprep.mubr.bf16.mxu0 0
    %1949 = vmatmul.mubr.bf16.gmra.mxu0 %v1914
    %v1950 = vpop.f32.mrf.mxu0
    %v1951 = vadd.f32 0.0, %v1950
    %v1952 = vpop.f32.mrf.mxu0
    %v1953 = vpop.f32.mrf.mxu0
    %v1954 = vpop.f32.mrf.mxu0
    %1955 = vdwg.mxu0
    %v1956 = vadd.f32 %v1885, %v1951
    %v1957 = vxor.u32 %v1956, 2147483648
    %v1958 = vmul.f32 %v1957, 1.442695
    %v1959 = vpow.pop %v1958
    %v1960 = vadd.f32 %v1959, 1.0
    %v1961 = vrcp.pop %v1960
    %v1962 = vmul.f32 1.0, %v1961
    %v1963 = vtanh.pop %v1956
    %v1964 = vmul.f32 %v1962, 0.0
    %1966 = vrot.lane.b32.xlu0 %v1963, 32
    %v1967 = vpop.permute.xlu0 %1966
    %v1969 = vmul.f32 %v1962, %v1967
    %1971 = vrot.lane.b32.xlu0 %v1969, 32
    %v1972 = vpop.permute.xlu0 %1971
    %v1974 = vadd.f32 %v1964, %v1972
    %v1975 = vtanh.pop %v1974
    %1977 = vrot.lane.b32.xlu0 %v1975, 32
    %v1978 = vpop.permute.xlu0 %1977
    %v1980 = vmul.f32 %v1962, %v1978
    %v1981 = vpack.c.bf16 %v1980, %v1980
    %1983 = vrot.lane.b32.xlu0 %v1981, 64
    %v1984 = vpop.permute.xlu0 %1983
    %v1986 = vsel %vm1912, %v1984, 0
    %1988 = vmatprep.subr.bf16.mxu0 0
    %1989 = vmatpush1.bf16.msra.mxu0 0
    %1990 = vmatprep.subr.bf16.mxu0 0
    %1991 = vmatpush1.bf16.msra.mxu0 0
    %1992 = vmatprep.subr.bf16.mxu0 0
    %1993 = vmatpush1.bf16.msra.mxu0 0
    %1994 = vmatprep.subr.bf16.mxu0 0
    %1995 = vmatpush1.bf16.msra.mxu0 0
    %1996 = vmatprep.subr.bf16.mxu0 0
    %1997 = vmatpush1.bf16.msra.mxu0 0
    %1998 = vmatprep.subr.bf16.mxu0 0
    %1999 = vmatpush1.bf16.msra.mxu0 0
    %2000 = vmatprep.subr.bf16.mxu0 0
    %2001 = vmatpush1.bf16.msra.mxu0 %v1909
    %2002 = vmatprep.subr.bf16.mxu0 0
    %2003 = vmatpush1.bf16.msra.mxu0 %v1908
    %2004 = vmatprep.subr.bf16.mxu0 0
    %2005 = vmatpush2.bf16.msra.mxu0 0
    %2006 = vmatprep.subr.bf16.mxu0 0
    %2007 = vmatpush2.bf16.msra.mxu0 0
    %2008 = vmatprep.subr.bf16.mxu0 0
    %2009 = vmatpush2.bf16.msra.mxu0 0
    %2010 = vmatprep.subr.bf16.mxu0 0
    %2011 = vmatpush2.bf16.msra.mxu0 0
    %2012 = vmatprep.subr.bf16.mxu0 0
    %2013 = vmatpush2.bf16.msra.mxu0 0
    %2014 = vmatprep.subr.bf16.mxu0 0
    %2015 = vmatpush2.bf16.msra.mxu0 0
    %2016 = vmatprep.subr.bf16.mxu0 0
    %2017 = vmatpush2.bf16.msra.mxu0 0
    %2018 = vmatprep.subr.bf16.mxu0 0
    %2019 = vmatpush2.bf16.msra.mxu0 0
    %2020 = vmatprep.mubr.bf16.mxu0 0
    %2021 = vmatmul.mubr.bf16.gmra.mxu0 %v1986
    %v2022 = vpop.f32.mrf.mxu0
    %v2023 = vadd.f32 0.0, %v2022
    %v2024 = vpop.f32.mrf.mxu0
    %v2025 = vpop.f32.mrf.mxu0
    %v2026 = vpop.f32.mrf.mxu0
    %2027 = vdwg.mxu0
    %v2029 = vrot.slane %v2023, 6
    %v2031 = vadd.f32 %v1888, %v2029
    %v2032 = vxor.u32 %v2031, 2147483648
    %v2033 = vmul.f32 %v2032, 1.442695
    %v2034 = vpow.pop %v2033
    %v2035 = vadd.f32 %v2034, 1.0
    %v2036 = vrcp.pop %v2035
    %v2037 = vmul.f32 1.0, %v2036
    %v2038 = vtanh.pop %v2031
    %v2040 = vrot.slane %v1974, 6
    %v2042 = vmul.f32 %v2037, %v2040
    %2044 = vrot.lane.b32.xlu0 %v2038, 32
    %v2045 = vpop.permute.xlu0 %2044
    %v2047 = vmul.f32 %v2037, %v2045
    %2049 = vrot.lane.b32.xlu0 %v2047, 32
    %v2050 = vpop.permute.xlu0 %2049
    %v2052 = vadd.f32 %v2042, %v2050
    %v2053 = vtanh.pop %v2052
    %2055 = vrot.lane.b32.xlu0 %v2053, 32
    %v2056 = vpop.permute.xlu0 %2055
    %v2058 = vmul.f32 %v2037, %v2056
    %v2059 = vpack.c.bf16 %v2058, %v2058
    %v2061 = vrot.slane %v2059, 1
    %2062 = vrot.lane.b32.xlu0 %v2061, 64
    %v2063 = vpop.permute.xlu0 %2062
    %v2065 = vsel %vm1912, %v2063, 0
    %2067 = vmatprep.subr.bf16.mxu0 0
    %2068 = vmatpush1.bf16.msra.mxu0 0
    %2069 = vmatprep.subr.bf16.mxu0 0
    %2070 = vmatpush1.bf16.msra.mxu0 0
    %2071 = vmatprep.subr.bf16.mxu0 0
    %2072 = vmatpush1.bf16.msra.mxu0 0
    %2073 = vmatprep.subr.bf16.mxu0 0
    %2074 = vmatpush1.bf16.msra.mxu0 0
    %2075 = vmatprep.subr.bf16.mxu0 0
    %2076 = vmatpush1.bf16.msra.mxu0 0
    %2077 = vmatprep.subr.bf16.mxu0 0
    %2078 = vmatpush1.bf16.msra.mxu0 0
    %2079 = vmatprep.subr.bf16.mxu0 0
    %2080 = vmatpush1.bf16.msra.mxu0 %v1909
    %2081 = vmatprep.subr.bf16.mxu0 0
    %2082 = vmatpush1.bf16.msra.mxu0 %v1908
    %2083 = vmatprep.subr.bf16.mxu0 0
    %2084 = vmatpush2.bf16.msra.mxu0 0
    %2085 = vmatprep.subr.bf16.mxu0 0
    %2086 = vmatpush2.bf16.msra.mxu0 0
    %2087 = vmatprep.subr.bf16.mxu0 0
    %2088 = vmatpush2.bf16.msra.mxu0 0
    %2089 = vmatprep.subr.bf16.mxu0 0
    %2090 = vmatpush2.bf16.msra.mxu0 0
    %2091 = vmatprep.subr.bf16.mxu0 0
    %2092 = vmatpush2.bf16.msra.mxu0 0
    %2093 = vmatprep.subr.bf16.mxu0 0
    %2094 = vmatpush2.bf16.msra.mxu0 0
    %2095 = vmatprep.subr.bf16.mxu0 0
    %2096 = vmatpush2.bf16.msra.mxu0 0
    %2097 = vmatprep.subr.bf16.mxu0 0
    %2098 = vmatpush2.bf16.msra.mxu0 0
    %2099 = vmatprep.mubr.bf16.mxu0 0
    %2100 = vmatmul.mubr.bf16.gmra.mxu0 %v2065
    %v2101 = vpop.f32.mrf.mxu0
    %v2102 = vadd.f32 0.0, %v2101
    %v2103 = vpop.f32.mrf.mxu0
    %v2104 = vpop.f32.mrf.mxu0
    %v2105 = vpop.f32.mrf.mxu0
    %2106 = vdwg.mxu0
    %v2108 = vrot.slane %v2102, 4
    %v2110 = vadd.f32 %v1885, %v2108
    %v2111 = vxor.u32 %v2110, 2147483648
    %v2112 = vmul.f32 %v2111, 1.442695
    %v2113 = vpow.pop %v2112
    %v2114 = vadd.f32 %v2113, 1.0
    %v2115 = vrcp.pop %v2114
    %v2116 = vmul.f32 1.0, %v2115
    %v2117 = vtanh.pop %v2110
    %v2119 = vrot.slane %v2052, 6
    %v2121 = vmul.f32 %v2116, %v2119
    %2123 = vrot.lane.b32.xlu0 %v2117, 32
    %v2124 = vpop.permute.xlu0 %2123
    %v2126 = vmul.f32 %v2116, %v2124
    %2128 = vrot.lane.b32.xlu0 %v2126, 32
    %v2129 = vpop.permute.xlu0 %2128
    %v2131 = vadd.f32 %v2121, %v2129
    %v2132 = vtanh.pop %v2131
    %2134 = vrot.lane.b32.xlu0 %v2132, 32
    %v2135 = vpop.permute.xlu0 %2134
    %v2137 = vmul.f32 %v2116, %v2135
    %v2138 = vpack.c.bf16 %v2137, %v2137
    %v2140 = vrot.slane %v2138, 2
    %2141 = vrot.lane.b32.xlu0 %v2140, 64
    %v2142 = vpop.permute.xlu0 %2141
    %v2144 = vsel %vm1912, %v2142, 0
    %2146 = vmatprep.subr.bf16.mxu0 0
    %2147 = vmatpush1.bf16.msra.mxu0 0
    %2148 = vmatprep.subr.bf16.mxu0 0
    %2149 = vmatpush1.bf16.msra.mxu0 0
    %2150 = vmatprep.subr.bf16.mxu0 0
    %2151 = vmatpush1.bf16.msra.mxu0 0
    %2152 = vmatprep.subr.bf16.mxu0 0
    %2153 = vmatpush1.bf16.msra.mxu0 0
    %2154 = vmatprep.subr.bf16.mxu0 0
    %2155 = vmatpush1.bf16.msra.mxu0 0
    %2156 = vmatprep.subr.bf16.mxu0 0
    %2157 = vmatpush1.bf16.msra.mxu0 0
    %2158 = vmatprep.subr.bf16.mxu0 0
    %2159 = vmatpush1.bf16.msra.mxu0 %v1909
    %2160 = vmatprep.subr.bf16.mxu0 0
    %2161 = vmatpush1.bf16.msra.mxu0 %v1908
    %2162 = vmatprep.subr.bf16.mxu0 0
    %2163 = vmatpush2.bf16.msra.mxu0 0
    %2164 = vmatprep.subr.bf16.mxu0 0
    %2165 = vmatpush2.bf16.msra.mxu0 0
    %2166 = vmatprep.subr.bf16.mxu0 0
    %2167 = vmatpush2.bf16.msra.mxu0 0
    %2168 = vmatprep.subr.bf16.mxu0 0
    %2169 = vmatpush2.bf16.msra.mxu0 0
    %2170 = vmatprep.subr.bf16.mxu0 0
    %2171 = vmatpush2.bf16.msra.mxu0 0
    %2172 = vmatprep.subr.bf16.mxu0 0
    %2173 = vmatpush2.bf16.msra.mxu0 0
    %2174 = vmatprep.subr.bf16.mxu0 0
    %2175 = vmatpush2.bf16.msra.mxu0 0
    %2176 = vmatprep.subr.bf16.mxu0 0
    %2177 = vmatpush2.bf16.msra.mxu0 0
    %2178 = vmatprep.mubr.bf16.mxu0 0
    %2179 = vmatmul.mubr.bf16.gmra.mxu0 %v2144
    %v2180 = vpop.f32.mrf.mxu0
    %v2181 = vadd.f32 0.0, %v2180
    %v2182 = vpop.f32.mrf.mxu0
    %v2183 = vpop.f32.mrf.mxu0
    %v2184 = vpop.f32.mrf.mxu0
    %2185 = vdwg.mxu0
    %v2187 = vrot.slane %v2181, 2
    %v2189 = vadd.f32 %v1888, %v2187
    %v2190 = vxor.u32 %v2189, 2147483648
    %v2191 = vmul.f32 %v2190, 1.442695
    %v2192 = vpow.pop %v2191
    %v2193 = vadd.f32 %v2192, 1.0
    %v2194 = vrcp.pop %v2193
    %v2195 = vmul.f32 1.0, %v2194
    %v2196 = vtanh.pop %v2189
    %v2198 = vrot.slane %v2131, 6
    %v2200 = vmul.f32 %v2195, %v2198
    %2202 = vrot.lane.b32.xlu0 %v2196, 32
    %v2203 = vpop.permute.xlu0 %2202
    %v2205 = vmul.f32 %v2195, %v2203
    %2207 = vrot.lane.b32.xlu0 %v2205, 32
    %v2208 = vpop.permute.xlu0 %2207
    %v2210 = vadd.f32 %v2200, %v2208
    %v2211 = vtanh.pop %v2210
    %2213 = vrot.lane.b32.xlu0 %v2211, 32
    %v2214 = vpop.permute.xlu0 %2213
    %v2216 = vmul.f32 %v2195, %v2214
    %v2217 = vpack.c.bf16 %v2216, %v2216
    %v2219 = vrot.slane %v2217, 3
    %2220 = vrot.lane.b32.xlu0 %v2219, 64
    %v2221 = vpop.permute.xlu0 %2220
    %v2223 = vsel %vm1912, %v2221, 0
    %2225 = vmatprep.subr.bf16.mxu0 0
    %2226 = vmatpush1.bf16.msra.mxu0 0
    %2227 = vmatprep.subr.bf16.mxu0 0
    %2228 = vmatpush1.bf16.msra.mxu0 0
    %2229 = vmatprep.subr.bf16.mxu0 0
    %2230 = vmatpush1.bf16.msra.mxu0 0
    %2231 = vmatprep.subr.bf16.mxu0 0
    %2232 = vmatpush1.bf16.msra.mxu0 0
    %2233 = vmatprep.subr.bf16.mxu0 0
    %2234 = vmatpush1.bf16.msra.mxu0 0
    %2235 = vmatprep.subr.bf16.mxu0 0
    %2236 = vmatpush1.bf16.msra.mxu0 0
    %2237 = vmatprep.subr.bf16.mxu0 0
    %2238 = vmatpush1.bf16.msra.mxu0 %v1909
    %2239 = vmatprep.subr.bf16.mxu0 0
    %2240 = vmatpush1.bf16.msra.mxu0 %v1908
    %2241 = vmatprep.subr.bf16.mxu0 0
    %2242 = vmatpush2.bf16.msra.mxu0 0
    %2243 = vmatprep.subr.bf16.mxu0 0
    %2244 = vmatpush2.bf16.msra.mxu0 0
    %2245 = vmatprep.subr.bf16.mxu0 0
    %2246 = vmatpush2.bf16.msra.mxu0 0
    %2247 = vmatprep.subr.bf16.mxu0 0
    %2248 = vmatpush2.bf16.msra.mxu0 0
    %2249 = vmatprep.subr.bf16.mxu0 0
    %2250 = vmatpush2.bf16.msra.mxu0 0
    %2251 = vmatprep.subr.bf16.mxu0 0
    %2252 = vmatpush2.bf16.msra.mxu0 0
    %2253 = vmatprep.subr.bf16.mxu0 0
    %2254 = vmatpush2.bf16.msra.mxu0 0
    %2255 = vmatprep.subr.bf16.mxu0 0
    %2256 = vmatpush2.bf16.msra.mxu0 0
    %2257 = vmatprep.mubr.bf16.mxu0 0
    %2258 = vmatmul.mubr.bf16.gmra.mxu0 %v2223
    %v2259 = vpop.f32.mrf.mxu0
    %v2260 = vadd.f32 0.0, %v2259
    %v2261 = vpop.f32.mrf.mxu0
    %v2262 = vpop.f32.mrf.mxu0
    %v2263 = vpop.f32.mrf.mxu0
    %2264 = vdwg.mxu0
    %v2265 = vadd.f32 %v1892, %v2260
    %v2266 = vxor.u32 %v2265, 2147483648
    %v2267 = vmul.f32 %v2266, 1.442695
    %v2268 = vpow.pop %v2267
    %v2269 = vadd.f32 %v2268, 1.0
    %v2270 = vrcp.pop %v2269
    %v2271 = vmul.f32 1.0, %v2270
    %v2272 = vtanh.pop %v2265
    %v2274 = vrot.slane %v2210, 6
    %v2276 = vmul.f32 %v2271, %v2274
    %2278 = vrot.lane.b32.xlu0 %v2272, 32
    %v2279 = vpop.permute.xlu0 %2278
    %v2281 = vmul.f32 %v2271, %v2279
    %2283 = vrot.lane.b32.xlu0 %v2281, 32
    %v2284 = vpop.permute.xlu0 %2283
    %v2286 = vadd.f32 %v2276, %v2284
    %v2287 = vtanh.pop %v2286
    %2289 = vrot.lane.b32.xlu0 %v2287, 32
    %v2290 = vpop.permute.xlu0 %2289
    %v2292 = vmul.f32 %v2271, %v2290
    %v2293 = vpack.c.bf16 %v2292, %v2292
    %2295 = vrot.lane.b32.xlu0 %v2293, 64
    %v2296 = vpop.permute.xlu0 %2295
    %v2298 = vsel %vm1912, %v2296, 0
    %2300 = vmatprep.subr.bf16.mxu0 0
    %2301 = vmatpush1.bf16.msra.mxu0 0
    %2302 = vmatprep.subr.bf16.mxu0 0
    %2303 = vmatpush1.bf16.msra.mxu0 0
    %2304 = vmatprep.subr.bf16.mxu0 0
    %2305 = vmatpush1.bf16.msra.mxu0 0
    %2306 = vmatprep.subr.bf16.mxu0 0
    %2307 = vmatpush1.bf16.msra.mxu0 0
    %2308 = vmatprep.subr.bf16.mxu0 0
    %2309 = vmatpush1.bf16.msra.mxu0 0
    %2310 = vmatprep.subr.bf16.mxu0 0
    %2311 = vmatpush1.bf16.msra.mxu0 0
    %2312 = vmatprep.subr.bf16.mxu0 0
    %2313 = vmatpush1.bf16.msra.mxu0 %v1909
    %2314 = vmatprep.subr.bf16.mxu0 0
    %2315 = vmatpush1.bf16.msra.mxu0 %v1908
    %2316 = vmatprep.subr.bf16.mxu0 0
    %2317 = vmatpush2.bf16.msra.mxu0 0
    %2318 = vmatprep.subr.bf16.mxu0 0
    %2319 = vmatpush2.bf16.msra.mxu0 0
    %2320 = vmatprep.subr.bf16.mxu0 0
    %2321 = vmatpush2.bf16.msra.mxu0 0
    %2322 = vmatprep.subr.bf16.mxu0 0
    %2323 = vmatpush2.bf16.msra.mxu0 0
    %2324 = vmatprep.subr.bf16.mxu0 0
    %2325 = vmatpush2.bf16.msra.mxu0 0
    %2326 = vmatprep.subr.bf16.mxu0 0
    %2327 = vmatpush2.bf16.msra.mxu0 0
    %2328 = vmatprep.subr.bf16.mxu0 0
    %2329 = vmatpush2.bf16.msra.mxu0 0
    %2330 = vmatprep.subr.bf16.mxu0 0
    %2331 = vmatpush2.bf16.msra.mxu0 0
    %2332 = vmatprep.mubr.bf16.mxu0 0
    %2333 = vmatmul.mubr.bf16.gmra.mxu0 %v2298
    %v2334 = vpop.f32.mrf.mxu0
    %v2335 = vadd.f32 0.0, %v2334
    %v2336 = vpop.f32.mrf.mxu0
    %v2337 = vpop.f32.mrf.mxu0
    %v2338 = vpop.f32.mrf.mxu0
    %2339 = vdwg.mxu0
    %v2341 = vrot.slane %v2335, 6
    %v2343 = vadd.f32 %v1895, %v2341
    %v2344 = vxor.u32 %v2343, 2147483648
    %v2345 = vmul.f32 %v2344, 1.442695
    %v2346 = vpow.pop %v2345
    %v2347 = vadd.f32 %v2346, 1.0
    %v2348 = vrcp.pop %v2347
    %v2349 = vmul.f32 1.0, %v2348
    %v2350 = vtanh.pop %v2343
    %v2352 = vrot.slane %v2286, 6
    %v2354 = vmul.f32 %v2349, %v2352
    %2356 = vrot.lane.b32.xlu0 %v2350, 32
    %v2357 = vpop.permute.xlu0 %2356
    %v2359 = vmul.f32 %v2349, %v2357
    %2361 = vrot.lane.b32.xlu0 %v2359, 32
    %v2362 = vpop.permute.xlu0 %2361
    %v2364 = vadd.f32 %v2354, %v2362
    %v2365 = vtanh.pop %v2364
    %2367 = vrot.lane.b32.xlu0 %v2365, 32
    %v2368 = vpop.permute.xlu0 %2367
    %v2370 = vmul.f32 %v2349, %v2368
    %v2371 = vpack.c.bf16 %v2370, %v2370
    %v2373 = vrot.slane %v2371, 1
    %2374 = vrot.lane.b32.xlu0 %v2373, 64
    %v2375 = vpop.permute.xlu0 %2374
    %v2377 = vsel %vm1912, %v2375, 0
    %2379 = vmatprep.subr.bf16.mxu0 0
    %2380 = vmatpush1.bf16.msra.mxu0 0
    %2381 = vmatprep.subr.bf16.mxu0 0
    %2382 = vmatpush1.bf16.msra.mxu0 0
    %2383 = vmatprep.subr.bf16.mxu0 0
    %2384 = vmatpush1.bf16.msra.mxu0 0
    %2385 = vmatprep.subr.bf16.mxu0 0
    %2386 = vmatpush1.bf16.msra.mxu0 0
    %2387 = vmatprep.subr.bf16.mxu0 0
    %2388 = vmatpush1.bf16.msra.mxu0 0
    %2389 = vmatprep.subr.bf16.mxu0 0
    %2390 = vmatpush1.bf16.msra.mxu0 0
    %2391 = vmatprep.subr.bf16.mxu0 0
    %2392 = vmatpush1.bf16.msra.mxu0 %v1909
    %2393 = vmatprep.subr.bf16.mxu0 0
    %2394 = vmatpush1.bf16.msra.mxu0 %v1908
    %2395 = vmatprep.subr.bf16.mxu0 0
    %2396 = vmatpush2.bf16.msra.mxu0 0
    %2397 = vmatprep.subr.bf16.mxu0 0
    %2398 = vmatpush2.bf16.msra.mxu0 0
    %2399 = vmatprep.subr.bf16.mxu0 0
    %2400 = vmatpush2.bf16.msra.mxu0 0
    %2401 = vmatprep.subr.bf16.mxu0 0
    %2402 = vmatpush2.bf16.msra.mxu0 0
    %2403 = vmatprep.subr.bf16.mxu0 0
    %2404 = vmatpush2.bf16.msra.mxu0 0
    %2405 = vmatprep.subr.bf16.mxu0 0
    %2406 = vmatpush2.bf16.msra.mxu0 0
    %2407 = vmatprep.subr.bf16.mxu0 0
    %2408 = vmatpush2.bf16.msra.mxu0 0
    %2409 = vmatprep.subr.bf16.mxu0 0
    %2410 = vmatpush2.bf16.msra.mxu0 0
    %2411 = vmatprep.mubr.bf16.mxu0 0
    %2412 = vmatmul.mubr.bf16.gmra.mxu0 %v2377
    %v2413 = vpop.f32.mrf.mxu0
    %v2414 = vadd.f32 0.0, %v2413
    %v2415 = vpop.f32.mrf.mxu0
    %v2416 = vpop.f32.mrf.mxu0
    %v2417 = vpop.f32.mrf.mxu0
    %2418 = vdwg.mxu0
    %v2420 = vrot.slane %v2414, 4
    %v2422 = vadd.f32 %v1892, %v2420
    %v2423 = vxor.u32 %v2422, 2147483648
    %v2424 = vmul.f32 %v2423, 1.442695
    %v2425 = vpow.pop %v2424
    %v2426 = vadd.f32 %v2425, 1.0
    %v2427 = vrcp.pop %v2426
    %v2428 = vmul.f32 1.0, %v2427
    %v2429 = vtanh.pop %v2422
    %v2431 = vrot.slane %v2364, 6
    %v2433 = vmul.f32 %v2428, %v2431
    %2435 = vrot.lane.b32.xlu0 %v2429, 32
    %v2436 = vpop.permute.xlu0 %2435
    %v2438 = vmul.f32 %v2428, %v2436
    %2440 = vrot.lane.b32.xlu0 %v2438, 32
    %v2441 = vpop.permute.xlu0 %2440
    %v2443 = vadd.f32 %v2433, %v2441
    %v2444 = vtanh.pop %v2443
    %2446 = vrot.lane.b32.xlu0 %v2444, 32
    %v2447 = vpop.permute.xlu0 %2446
    %v2449 = vmul.f32 %v2428, %v2447
    %v2450 = vpack.c.bf16 %v2449, %v2449
    %v2452 = vrot.slane %v2450, 2
    %2453 = vrot.lane.b32.xlu0 %v2452, 64
    %v2454 = vpop.permute.xlu0 %2453
    %v2456 = vsel %vm1912, %v2454, 0
    %2458 = vmatprep.subr.bf16.mxu0 0
    %2459 = vmatpush1.bf16.msra.mxu0 0
    %2460 = vmatprep.subr.bf16.mxu0 0
    %2461 = vmatpush1.bf16.msra.mxu0 0
    %2462 = vmatprep.subr.bf16.mxu0 0
    %2463 = vmatpush1.bf16.msra.mxu0 0
    %2464 = vmatprep.subr.bf16.mxu0 0
    %2465 = vmatpush1.bf16.msra.mxu0 0
    %2466 = vmatprep.subr.bf16.mxu0 0
    %2467 = vmatpush1.bf16.msra.mxu0 0
    %2468 = vmatprep.subr.bf16.mxu0 0
    %2469 = vmatpush1.bf16.msra.mxu0 0
    %2470 = vmatprep.subr.bf16.mxu0 0
    %2471 = vmatpush1.bf16.msra.mxu0 %v1909
    %2472 = vmatprep.subr.bf16.mxu0 0
    %2473 = vmatpush1.bf16.msra.mxu0 %v1908
    %2474 = vmatprep.subr.bf16.mxu0 0
    %2475 = vmatpush2.bf16.msra.mxu0 0
    %2476 = vmatprep.subr.bf16.mxu0 0
    %2477 = vmatpush2.bf16.msra.mxu0 0
    %2478 = vmatprep.subr.bf16.mxu0 0
    %2479 = vmatpush2.bf16.msra.mxu0 0
    %2480 = vmatprep.subr.bf16.mxu0 0
    %2481 = vmatpush2.bf16.msra.mxu0 0
    %2482 = vmatprep.subr.bf16.mxu0 0
    %2483 = vmatpush2.bf16.msra.mxu0 0
    %2484 = vmatprep.subr.bf16.mxu0 0
    %2485 = vmatpush2.bf16.msra.mxu0 0
    %2486 = vmatprep.subr.bf16.mxu0 0
    %2487 = vmatpush2.bf16.msra.mxu0 0
    %2488 = vmatprep.subr.bf16.mxu0 0
    %2489 = vmatpush2.bf16.msra.mxu0 0
    %2490 = vmatprep.mubr.bf16.mxu0 0
    %2491 = vmatmul.mubr.bf16.gmra.mxu0 %v2456
    %v2492 = vpop.f32.mrf.mxu0
    %v2493 = vadd.f32 0.0, %v2492
    %v2494 = vpop.f32.mrf.mxu0
    %v2495 = vpop.f32.mrf.mxu0
    %v2496 = vpop.f32.mrf.mxu0
    %2497 = vdwg.mxu0
    %v2499 = vrot.slane %v2493, 2
    %v2501 = vadd.f32 %v1895, %v2499
    %v2502 = vxor.u32 %v2501, 2147483648
    %v2503 = vmul.f32 %v2502, 1.442695
    %v2504 = vpow.pop %v2503
    %v2505 = vadd.f32 %v2504, 1.0
    %v2506 = vrcp.pop %v2505
    %v2507 = vmul.f32 1.0, %v2506
    %v2508 = vtanh.pop %v2501
    %v2510 = vrot.slane %v2443, 6
    %v2512 = vmul.f32 %v2507, %v2510
    %2514 = vrot.lane.b32.xlu0 %v2508, 32
    %v2515 = vpop.permute.xlu0 %2514
    %v2517 = vmul.f32 %v2507, %v2515
    %2519 = vrot.lane.b32.xlu0 %v2517, 32
    %v2520 = vpop.permute.xlu0 %2519
    %v2522 = vadd.f32 %v2512, %v2520
    %v2523 = vtanh.pop %v2522
    %2525 = vrot.lane.b32.xlu0 %v2523, 32
    %v2526 = vpop.permute.xlu0 %2525
    %v2528 = vmul.f32 %v2507, %v2526
    %v2529 = vsel %vm1832, %v1980, %v2058
    %v2530 = vsel %vm677, %v2529, %v2137
    %vm2531 = vcmask 1045504
    %v2532 = vsel %vm2531, %v2530, %v2216
    %v2533 = vsel %vm1832, %v2292, %v2370
    %v2534 = vsel %vm677, %v2533, %v2449
    %v2535 = vsel %vm2531, %v2534, %v2528
    %v2537 = vrot.slane %v2528, 6
    %v2540 = vrot.slane %v2449, 2
    %v2543 = vrot.slane %v2370, 6
    %v2546 = vrot.slane %v2292, 2
    %v2549 = vrot.slane %v2216, 6
    %v2552 = vrot.slane %v2137, 2
    %v2555 = vrot.slane %v2058, 6
    %v2558 = vrot.slane %v1980, 2
    %v2560 = vsel %vm1832, %v2537, %v2540
    %v2561 = vsel %vm677, %v2560, %v2543
    %v2562 = vsel %vm2531, %v2561, %v2546
    %v2563 = vsel %vm1832, %v2549, %v2552
    %v2564 = vsel %vm677, %v2563, %v2555
    %v2565 = vsel %vm2531, %v2564, %v2558
    %v2566 = vpack.c.bf16 %v2535, %v2532
    %v2567 = vld [vmem:[%s12] sm:$0xf]
    %v2568 = vld [vmem:[%s12 + $0x4] sm:$0xf]
    %v2569 = vpack.c.bf16 %v2565, %v2562
    %v2570 = vld [vmem:[%s13] sm:$0xf]
    %v2571 = vld [vmem:[%s13 + $0x4] sm:$0xf]
    %2573 = vrot.lane.b32.xlu0 %v2569, 48
    %v2574 = vpop.permute.xlu0 %2573
    %v2577 = vunpack.c.l.b16 %v2570
    %v2578 = vunpack.c.l.b16 %v2571
    %v2579 = vpack.c.b16 %v2578, %v2577
    %v2582 = vsel %vm1691, %v2574, 0
    %2584 = vmatprep.subr.bf16.mxu0 0
    %2585 = vmatpush1.bf16.msra.mxu0 0
    %2586 = vmatprep.subr.bf16.mxu0 0
    %2587 = vmatpush1.bf16.msra.mxu0 0
    %2588 = vmatprep.subr.bf16.mxu0 0
    %2589 = vmatpush1.bf16.msra.mxu0 0
    %2590 = vmatprep.subr.bf16.mxu0 0
    %2591 = vmatpush1.bf16.msra.mxu0 0
    %2592 = vmatprep.subr.bf16.mxu0 0
    %2593 = vmatpush1.bf16.msra.mxu0 0
    %2594 = vmatprep.subr.bf16.mxu0 0
    %2595 = vmatpush1.bf16.msra.mxu0 0
    %2596 = vmatprep.subr.bf16.mxu0 0
    %2597 = vmatpush1.bf16.msra.mxu0 0
    %2598 = vmatprep.subr.bf16.mxu0 0
    %2599 = vmatpush1.bf16.msra.mxu0 %v2579
    %2600 = vmatprep.subr.bf16.mxu0 0
    %2601 = vmatpush2.bf16.msra.mxu0 0
    %2602 = vmatprep.subr.bf16.mxu0 0
    %2603 = vmatpush2.bf16.msra.mxu0 0
    %2604 = vmatprep.subr.bf16.mxu0 0
    %2605 = vmatpush2.bf16.msra.mxu0 0
    %2606 = vmatprep.subr.bf16.mxu0 0
    %2607 = vmatpush2.bf16.msra.mxu0 0
    %2608 = vmatprep.subr.bf16.mxu0 0
    %2609 = vmatpush2.bf16.msra.mxu0 0
    %2610 = vmatprep.subr.bf16.mxu0 0
    %2611 = vmatpush2.bf16.msra.mxu0 0
    %2612 = vmatprep.subr.bf16.mxu0 0
    %2613 = vmatpush2.bf16.msra.mxu0 0
    %2614 = vmatprep.subr.bf16.mxu0 0
    %2615 = vmatpush2.bf16.msra.mxu0 0
    %2616 = vmatprep.mubr.bf16.mxu0 0
    %2617 = vmatmul.mubr.bf16.gmra.mxu0 %v2582
    %v2618 = vpop.f32.mrf.mxu0
    %v2619 = vadd.f32 0.0, %v2618
    %v2620 = vpop.f32.mrf.mxu0
    %v2621 = vpop.f32.mrf.mxu0
    %v2622 = vadd.f32 0.0, %v2621
    %v2623 = vpop.f32.mrf.mxu0
    %2624 = vdwg.mxu0
    %2626 = vrot.lane.b32.xlu0 %v2566, 64
    %v2627 = vpop.permute.xlu0 %2626
    %v2630 = vunpack.c.l.b16 %v2567
    %v2631 = vunpack.c.l.b16 %v2568
    %v2632 = vpack.c.b16 %v2631, %v2630
    %v2635 = vsel %vm1691, %v2627, 0
    %2637 = vmatprep.subr.bf16.mxu0 0
    %2638 = vmatpush1.bf16.msra.mxu0 0
    %2639 = vmatprep.subr.bf16.mxu0 0
    %2640 = vmatpush1.bf16.msra.mxu0 0
    %2641 = vmatprep.subr.bf16.mxu0 0
    %2642 = vmatpush1.bf16.msra.mxu0 0
    %2643 = vmatprep.subr.bf16.mxu0 0
    %2644 = vmatpush1.bf16.msra.mxu0 0
    %2645 = vmatprep.subr.bf16.mxu0 0
    %2646 = vmatpush1.bf16.msra.mxu0 0
    %2647 = vmatprep.subr.bf16.mxu0 0
    %2648 = vmatpush1.bf16.msra.mxu0 0
    %2649 = vmatprep.subr.bf16.mxu0 0
    %2650 = vmatpush1.bf16.msra.mxu0 0
    %2651 = vmatprep.subr.bf16.mxu0 0
    %2652 = vmatpush1.bf16.msra.mxu0 %v2632
    %2653 = vmatprep.subr.bf16.mxu0 0
    %2654 = vmatpush2.bf16.msra.mxu0 0
    %2655 = vmatprep.subr.bf16.mxu0 0
    %2656 = vmatpush2.bf16.msra.mxu0 0
    %2657 = vmatprep.subr.bf16.mxu0 0
    %2658 = vmatpush2.bf16.msra.mxu0 0
    %2659 = vmatprep.subr.bf16.mxu0 0
    %2660 = vmatpush2.bf16.msra.mxu0 0
    %2661 = vmatprep.subr.bf16.mxu0 0
    %2662 = vmatpush2.bf16.msra.mxu0 0
    %2663 = vmatprep.subr.bf16.mxu0 0
    %2664 = vmatpush2.bf16.msra.mxu0 0
    %2665 = vmatprep.subr.bf16.mxu0 0
    %2666 = vmatpush2.bf16.msra.mxu0 0
    %2667 = vmatprep.subr.bf16.mxu0 0
    %2668 = vmatpush2.bf16.msra.mxu0 0
    %2669 = vmatprep.mubr.bf16.mxu0 0
    %2670 = vmatmul.mubr.bf16.gmra.mxu0 %v2635
    %v2671 = vpop.f32.mrf.mxu0
    %v2672 = vadd.f32 %v2619, %v2671
    %v2673 = vpop.f32.mrf.mxu0
    %v2674 = vpop.f32.mrf.mxu0
    %v2675 = vadd.f32 %v2622, %v2674
    %v2676 = vpop.f32.mrf.mxu0
    %2677 = vdwg.mxu0
    %v2678 = vld [vmem:[%s14] sm:$0x1]
    %v2680 = vlaneseq
    %v2681 = vshrl.u32 %v2680, 7
    %v2682 = vsub.s32 0, %v2681
    %v2683 = vrot.slane %v2678, %v2682
    %v2685 = vadd.f32 %v2672, %v2683
    %v2686 = vadd.f32 %v2675, %v2683
    %v2689 = vcombine.high %v2685, %v2685
    %v2691 = vunpack.c.l.s4 1983009808
    %v2692 = vunpack.c.0.s8 %v2691
    %v2693 = vlaneseq
    %v2694 = vshrl.u32 %v2693, 7
    %v2695 = vsub.s32 %v2692, %v2694
    %v2696 = vrot.slane %v2685, %v2695
    %v2698 = vunpack.c.l.s4 1983009808
    %v2699 = vunpack.c.0.s8 %v2698
    %v2700 = vlaneseq
    %v2701 = vshrl.u32 %v2700, 7
    %v2702 = vsub.s32 %v2699, %v2701
    %v2703 = vrot.slane %v2689, %v2702
    %v2704 = vcombine.high %v2696, %v2696
    %v2705 = vcombine.high %v2703, %v2703
    %v2706 = vcombine.high %v2686, %v2686
    %v2708 = vunpack.c.l.s4 1983009808
    %v2709 = vunpack.c.0.s8 %v2708
    %v2710 = vlaneseq
    %v2711 = vshrl.u32 %v2710, 7
    %v2712 = vsub.s32 %v2709, %v2711
    %v2713 = vrot.slane %v2686, %v2712
    %v2715 = vunpack.c.l.s4 1983009808
    %v2716 = vunpack.c.0.s8 %v2715
    %v2717 = vlaneseq
    %v2718 = vshrl.u32 %v2717, 7
    %v2719 = vsub.s32 %v2716, %v2718
    %v2720 = vrot.slane %v2706, %v2719
    %v2721 = vcombine.high %v2713, %v2713
    %v2722 = vcombine.high %v2720, %v2720
    %vm2731 = vcmask 91136
    %v2732 = vsel %vm2731, %v2696, -inf
    %2733 = vmax.xlane.f32.xlu0 %v2732
    %v2734 = vpop.xlane.xlu0 %2733
    %v2735 = vsel %vm2731, %v2704, -inf
    %2736 = vmax.xlane.f32.xlu0 %v2735
    %v2737 = vpop.xlane.xlu0 %2736
    %v2738 = vsel %vm2731, %v2703, -inf
    %2739 = vmax.xlane.f32.xlu0 %v2738
    %v2740 = vpop.xlane.xlu0 %2739
    %v2741 = vsel %vm2731, %v2705, -inf
    %2742 = vmax.xlane.f32.xlu0 %v2741
    %v2743 = vpop.xlane.xlu0 %2742
    %v2744 = vsel %vm2731, %v2713, -inf
    %2745 = vmax.xlane.f32.xlu0 %v2744
    %v2746 = vpop.xlane.xlu0 %2745
    %v2747 = vsel %vm2731, %v2721, -inf
    %2748 = vmax.xlane.f32.xlu0 %v2747
    %v2749 = vpop.xlane.xlu0 %2748
    %v2750 = vsel %vm2731, %v2720, -inf
    %2751 = vmax.xlane.f32.xlu0 %v2750
    %v2752 = vpop.xlane.xlu0 %2751
    %v2753 = vsel %vm2731, %v2722, -inf
    %2754 = vmax.xlane.f32.xlu0 %v2753
    %v2755 = vpop.xlane.xlu0 %2754
    %vm2756 = vcmp.ge.f32.partialorder %v2696, %v2734
    %vm2757 = vcmp.ge.f32.partialorder %v2704, %v2737
    %vm2758 = vcmp.ge.f32.partialorder %v2703, %v2740
    %vm2759 = vcmp.ge.f32.partialorder %v2705, %v2743
    %vm2760 = vcmp.ge.f32.partialorder %v2713, %v2746
    %vm2761 = vcmp.ge.f32.partialorder %v2721, %v2749
    %vm2762 = vcmp.ge.f32.partialorder %v2720, %v2752
    %vm2763 = vcmp.ge.f32.partialorder %v2722, %v2755
    %v2764 = vsel %vm2756, %v65, 12
    %v2765 = vsel %vm2757, %v65, 12
    %v2766 = vsel %vm2758, %v65, 12
    %v2767 = vsel %vm2759, %v65, 12
    %v2768 = vsel %vm2760, %v65, 12
    %v2769 = vsel %vm2761, %v65, 12
    %v2770 = vsel %vm2762, %v65, 12
    %v2771 = vsel %vm2763, %v65, 12
    %v2772 = vsel %vm2731, %v2764, 2147483647
    %v2773 = vand.u32 %v2772, 65535
    %v2774 = vshra.s32 %v2772, 16
    %v2775 = vcvt.s32.f32 %v2773
    %v2776 = vcvt.s32.f32 %v2774
    %2777 = vmin.xlane.f32.xlu0 %v2776
    %v2778 = vpop.xlane.xlu0 %2777
    %vm2779 = vcmp.eq.f32.partialorder %v2776, %v2778
    %v2780 = vsel %vm2779, %v2775, inf
    %2781 = vmin.xlane.f32.xlu0 %v2780
    %v2782 = vpop.xlane.xlu0 %2781
    %v2783 = vcvt.f32.s32 %v2782
    %v2784 = vcvt.f32.s32 %v2778
    %v2785 = vshll.u32 %v2784, 16
    %v2786 = vadd.s32 %v2785, %v2783
    %v2787 = vsel %vm2731, %v2765, 2147483647
    %v2788 = vand.u32 %v2787, 65535
    %v2789 = vshra.s32 %v2787, 16
    %v2790 = vcvt.s32.f32 %v2788
    %v2791 = vcvt.s32.f32 %v2789
    %2792 = vmin.xlane.f32.xlu0 %v2791
    %v2793 = vpop.xlane.xlu0 %2792
    %vm2794 = vcmp.eq.f32.partialorder %v2791, %v2793
    %v2795 = vsel %vm2794, %v2790, inf
    %2796 = vmin.xlane.f32.xlu0 %v2795
    %v2797 = vpop.xlane.xlu0 %2796
    %v2798 = vcvt.f32.s32 %v2797
    %v2799 = vcvt.f32.s32 %v2793
    %v2800 = vshll.u32 %v2799, 16
    %v2801 = vadd.s32 %v2800, %v2798
    %v2802 = vsel %vm2731, %v2766, 2147483647
    %v2803 = vand.u32 %v2802, 65535
    %v2804 = vshra.s32 %v2802, 16
    %v2805 = vcvt.s32.f32 %v2803
    %v2806 = vcvt.s32.f32 %v2804
    %2807 = vmin.xlane.f32.xlu0 %v2806
    %v2808 = vpop.xlane.xlu0 %2807
    %vm2809 = vcmp.eq.f32.partialorder %v2806, %v2808
    %v2810 = vsel %vm2809, %v2805, inf
    %2811 = vmin.xlane.f32.xlu0 %v2810
    %v2812 = vpop.xlane.xlu0 %2811
    %v2813 = vcvt.f32.s32 %v2812
    %v2814 = vcvt.f32.s32 %v2808
    %v2815 = vshll.u32 %v2814, 16
    %v2816 = vadd.s32 %v2815, %v2813
    %v2817 = vsel %vm2731, %v2767, 2147483647
    %v2818 = vand.u32 %v2817, 65535
    %v2819 = vshra.s32 %v2817, 16
    %v2820 = vcvt.s32.f32 %v2818
    %v2821 = vcvt.s32.f32 %v2819
    %2822 = vmin.xlane.f32.xlu0 %v2821
    %v2823 = vpop.xlane.xlu0 %2822
    %vm2824 = vcmp.eq.f32.partialorder %v2821, %v2823
    %v2825 = vsel %vm2824, %v2820, inf
    %2826 = vmin.xlane.f32.xlu0 %v2825
    %v2827 = vpop.xlane.xlu0 %2826
    %v2828 = vcvt.f32.s32 %v2827
    %v2829 = vcvt.f32.s32 %v2823
    %v2830 = vshll.u32 %v2829, 16
    %v2831 = vadd.s32 %v2830, %v2828
    %v2832 = vsel %vm2731, %v2768, 2147483647
    %v2833 = vand.u32 %v2832, 65535
    %v2834 = vshra.s32 %v2832, 16
    %v2835 = vcvt.s32.f32 %v2833
    %v2836 = vcvt.s32.f32 %v2834
    %2837 = vmin.xlane.f32.xlu0 %v2836
    %v2838 = vpop.xlane.xlu0 %2837
    %vm2839 = vcmp.eq.f32.partialorder %v2836, %v2838
    %v2840 = vsel %vm2839, %v2835, inf
    %2841 = vmin.xlane.f32.xlu0 %v2840
    %v2842 = vpop.xlane.xlu0 %2841
    %v2843 = vcvt.f32.s32 %v2842
    %v2844 = vcvt.f32.s32 %v2838
    %v2845 = vshll.u32 %v2844, 16
    %v2846 = vadd.s32 %v2845, %v2843
    %v2847 = vsel %vm2731, %v2769, 2147483647
    %v2848 = vand.u32 %v2847, 65535
    %v2849 = vshra.s32 %v2847, 16
    %v2850 = vcvt.s32.f32 %v2848
    %v2851 = vcvt.s32.f32 %v2849
    %2852 = vmin.xlane.f32.xlu0 %v2851
    %v2853 = vpop.xlane.xlu0 %2852
    %vm2854 = vcmp.eq.f32.partialorder %v2851, %v2853
    %v2855 = vsel %vm2854, %v2850, inf
    %2856 = vmin.xlane.f32.xlu0 %v2855
    %v2857 = vpop.xlane.xlu0 %2856
    %v2858 = vcvt.f32.s32 %v2857
    %v2859 = vcvt.f32.s32 %v2853
    %v2860 = vshll.u32 %v2859, 16
    %v2861 = vadd.s32 %v2860, %v2858
    %v2862 = vsel %vm2731, %v2770, 2147483647
    %v2863 = vand.u32 %v2862, 65535
    %v2864 = vshra.s32 %v2862, 16
    %v2865 = vcvt.s32.f32 %v2863
    %v2866 = vcvt.s32.f32 %v2864
    %2867 = vmin.xlane.f32.xlu0 %v2866
    %v2868 = vpop.xlane.xlu0 %2867
    %vm2869 = vcmp.eq.f32.partialorder %v2866, %v2868
    %v2870 = vsel %vm2869, %v2865, inf
    %2871 = vmin.xlane.f32.xlu0 %v2870
    %v2872 = vpop.xlane.xlu0 %2871
    %v2873 = vcvt.f32.s32 %v2872
    %v2874 = vcvt.f32.s32 %v2868
    %v2875 = vshll.u32 %v2874, 16
    %v2876 = vadd.s32 %v2875, %v2873
    %v2877 = vsel %vm2731, %v2771, 2147483647
    %v2878 = vand.u32 %v2877, 65535
    %v2879 = vshra.s32 %v2877, 16
    %v2880 = vcvt.s32.f32 %v2878
    %v2881 = vcvt.s32.f32 %v2879
    %2882 = vmin.xlane.f32.xlu0 %v2881
    %v2883 = vpop.xlane.xlu0 %2882
    %vm2884 = vcmp.eq.f32.partialorder %v2881, %v2883
    %v2885 = vsel %vm2884, %v2880, inf
    %2886 = vmin.xlane.f32.xlu0 %v2885
    %v2887 = vpop.xlane.xlu0 %2886
    %v2888 = vcvt.f32.s32 %v2887
    %v2889 = vcvt.f32.s32 %v2883
    %v2890 = vshll.u32 %v2889, 16
    %v2891 = vadd.s32 %v2890, %v2888
    %v2892 = vlaneseq
    %v2893 = vshrl.u32 %v2892, 7
    %v2894 = vsub.s32 %v65, %v2893
    %v2895 = vrot.slane %v2786, %v2894
    %v2896 = vlaneseq
    %v2897 = vshrl.u32 %v2896, 7
    %v2898 = vsub.s32 %v65, %v2897
    %v2899 = vrot.slane %v2801, %v2898
    %v2900 = vlaneseq
    %v2901 = vshrl.u32 %v2900, 7
    %v2902 = vsub.s32 %v65, %v2901
    %v2903 = vrot.slane %v2816, %v2902
    %v2904 = vlaneseq
    %v2905 = vshrl.u32 %v2904, 7
    %v2906 = vsub.s32 %v65, %v2905
    %v2907 = vrot.slane %v2831, %v2906
    %v2908 = vlaneseq
    %v2909 = vshrl.u32 %v2908, 7
    %v2910 = vsub.s32 %v65, %v2909
    %v2911 = vrot.slane %v2846, %v2910
    %v2912 = vlaneseq
    %v2913 = vshrl.u32 %v2912, 7
    %v2914 = vsub.s32 %v65, %v2913
    %v2915 = vrot.slane %v2861, %v2914
    %v2916 = vlaneseq
    %v2917 = vshrl.u32 %v2916, 7
    %v2918 = vsub.s32 %v65, %v2917
    %v2919 = vrot.slane %v2876, %v2918
    %v2920 = vlaneseq
    %v2921 = vshrl.u32 %v2920, 7
    %v2922 = vsub.s32 %v65, %v2921
    %v2923 = vrot.slane %v2891, %v2922
    %v2924 = vsel %vm1668, %v2899, %v2895
    %v2925 = vsel %vm1670, %v2903, %v2924
    %v2926 = vsel %vm1672, %v2907, %v2925
    %v2927 = vsel %vm1674, %v2911, %v2926
    %v2928 = vsel %vm1676, %v2915, %v2927
    %v2929 = vsel %vm1678, %v2919, %v2928
    %v2930 = vsel %vm1680, %v2923, %v2929
    %2931 = vxpose.xlu0.b32.start [1/16] %v2930, 128
    %2932 = vxpose.xlu0.b32.cont [2/16] 0, 128
    %2933 = vxpose.xlu0.b32.cont [3/16] 0, 128
    %2934 = vxpose.xlu0.b32.cont [4/16] 0, 128
    %2935 = vxpose.xlu0.b32.cont [5/16] 0, 128
    %2936 = vxpose.xlu0.b32.cont [6/16] 0, 128
    %2937 = vxpose.xlu0.b32.cont [7/16] 0, 128
    %2938 = vxpose.xlu0.b32.cont [8/16] 0, 128
    %2939 = vxpose.xlu0.b32.cont [9/16] 0, 128
    %2940 = vxpose.xlu0.b32.cont [10/16] 0, 128
    %2941 = vxpose.xlu0.b32.cont [11/16] 0, 128
    %2942 = vxpose.xlu0.b32.cont [12/16] 0, 128
    %2943 = vxpose.xlu0.b32.cont [13/16] 0, 128
    %2944 = vxpose.xlu0.b32.cont [14/16] 0, 128
    %2945 = vxpose.xlu0.b32.cont [15/16] 0, 128
    %2946 = vxpose.xlu0.b32.end [16/16] 0, 128
    %v2947 = vpop.trf.xlu0
    %v2948 = vpop.trf.xlu0
    %v2949 = vpop.trf.xlu0
    %v2950 = vpop.trf.xlu0
    %v2951 = vpop.trf.xlu0
    %v2952 = vpop.trf.xlu0
    %v2953 = vpop.trf.xlu0
    %v2954 = vpop.trf.xlu0
    %v2955 = vpop.trf.xlu0
    %v2956 = vpop.trf.xlu0
    %v2957 = vpop.trf.xlu0
    %v2958 = vpop.trf.xlu0
    %v2959 = vpop.trf.xlu0
    %v2960 = vpop.trf.xlu0
    %v2961 = vpop.trf.xlu0
    %v2962 = vpop.trf.xlu0
    %v2963 = vld [vmem:[%s3] sm:$0x3]
    %v2964 = vmul.u32 %v2947, %v2963
    %v2965 = vsel %vm658, %v2964, 0
    %2966 = vst [vmem:[#allocation2] sm:$0x3] %v2965
    // Predicated region
    $region62: #{tpu_custom_call.1} parent=1 // pred_check
      _
    $region63: #{tpu_custom_call.1} parent=1 // pred_check_branch
      %2968 = sbr.rel (0) target = $region65
    $region64: #{tpu_custom_call.1} parent=1 // pred_region
      %s2970 = ssub.s32 32, 32
      %2971 = vsyncadd [#allocation3], %s2970
      %s2973 = sshll.u32 [#allocation2], 4
      %s2974 = int_to_ptr.vmem [resolvable:$true] %s2973
      %2976 = dma.vmem_to_hbm [thread:$0]  %s2974, 32, %s15, [#allocation3]
    $region65: #{tpu_custom_call.1} parent=1 // pred_fallthru
      _
    // Predicated region
    $region66: #{tpu_custom_call.1} parent=1 // pred_check
      _
    $region67: #{tpu_custom_call.1} parent=1 // pred_check_branch
      %2978 = sbr.rel (0) target = $region69
    $region68: #{tpu_custom_call.1} parent=1 // pred_region
      %2979 = dma.done [#allocation3], 32
    $region69: #{tpu_custom_call.1} parent=1 // pred_fallthru
      _
    %2980 = vsyncpa [#allocation3], 1

</llo_original>
